<compile_context>
chip_gen: v5e
topology: v5e:2x2
jax: 0.10.0
libtpu: 0.0.40
codegen_flags: <defaults>
</compile_context>

<pallas_src>
from functools import partial

import jax
import jax.numpy as jnp
import numpy as np
from jax.experimental import pallas as pl
from jax.experimental.pallas import tpu as pltpu


def _spatial_conv_kernel(x_ref, wc_ref, clsw_ref, clsb_ref,
                         cls_out_ref, tok_out_ref, xpad_ref, *, h, w, k):
    """Processes BT batch items per grid step.

    x_ref:       (BT, 1+h*w, din)   activations (cls row 0 + tokens), input dtype
    wc_ref:      (k*k, din, dout)   folded depthwise*pointwise weights (tap-major)
    clsw_ref:    (din, dout)        cls projection weights (W.T, or identity)
    clsb_ref:    (1, dout)          cls projection bias (f32; zeros for identity)
    cls_out_ref: (BT, 1, dout)      cls output block
    tok_out_ref: (BT, h*w, dout)    token output block
    xpad_ref:    (BT, hp, wp, din)  VMEM scratch, zero-padded feature map
    """
    bt = x_ref.shape[0]
    din = x_ref.shape[-1]
    dout = tok_out_ref.shape[-1]
    p = k // 2

    # ---- cls token projection: (BT, din) @ (din, dout) + bias on the MXU. ----
    cls_tok = x_ref[:, :1, :].reshape(bt, din)
    cls_out = jnp.dot(cls_tok, clsw_ref[...],
                      preferred_element_type=jnp.float32) + clsb_ref[...]
    cls_out_ref[...] = cls_out.reshape(bt, 1, dout).astype(cls_out_ref.dtype)

    # ---- zero-padded feature map built in VMEM (no wrapper-side pad pass). ----
    xpad_ref[...] = jnp.zeros(xpad_ref.shape, xpad_ref.dtype)
    xpad_ref[:, p:p + h, p:p + w, :] = x_ref[:, 1:, :].reshape(bt, h, w, din)

    # ---- depthwise (folded into weights) + pointwise conv: k*k MXU matmuls
    #      over shifted windows, accumulated in f32. ----
    acc = jnp.zeros((bt * h * w, dout), jnp.float32)
    for dy in range(k):
        for dx in range(k):
            tap = xpad_ref[:, dy:dy + h, dx:dx + w, :].reshape(bt * h * w, din)
            acc = acc + jnp.dot(tap, wc_ref[dy * k + dx],
                                preferred_element_type=jnp.float32)
    tok_out_ref[...] = acc.reshape(bt, h * w, dout).astype(tok_out_ref.dtype)


def _pick_bt(b, max_bt=4):
    """Largest divisor of b that is <= max_bt while keeping enough grid steps
    (>= 4 when b allows, so v7x's two TensorCores both stay pipelined)."""
    min_grid = 4 if b >= 4 else (2 if b >= 2 else 1)
    bt = 1
    for cand in range(2, min(max_bt, b) + 1):
        if b % cand == 0 and b // cand >= min_grid:
            bt = cand
    return bt


def spatial_conv(x, dw_weight, pw_weight, cls_weight=None, cls_bias=None,
                 *, h, w, max_bt=4):
    """JAX/Pallas equivalent of SpatialConv.forward.

    x:          (b, 1 + h*w, dim_in)           tokens, cls token first (any float dtype)
    dw_weight:  (dim_in, 1, k, k)              torch depthwise conv weight
    pw_weight:  (dim_out, dim_in, 1, 1)        torch pointwise conv weight
    cls_weight: (dim_out, dim_in) or None      torch Linear weight (None -> Identity)
    cls_bias:   (dim_out,)        or None      torch Linear bias
    returns (b, 1 + h*w, dim_out), dtype of x.
    """
    b, seq, din = x.shape
    assert seq == 1 + h * w, f"seq {seq} != 1 + h*w ({1 + h * w})"
    dout = pw_weight.shape[0]
    assert pw_weight.shape[1] == din
    k = dw_weight.shape[-1]
    assert dw_weight.shape[0] == din and dw_weight.shape[1] == 1
    p = k // 2
    hp, wp = h + 2 * p, w + 2 * p
    bt = _pick_bt(b, max_bt)
    grid = (b // bt,)

    # Fold depthwise and pointwise weights once (tiny): Wc[t, c, o] = wdw[t, c] * wpw[c, o],
    # so both convs run as k*k MXU matmuls with din only as the contraction dim.
    wdw = jnp.transpose(dw_weight[:, 0, :, :], (1, 2, 0)).reshape(k * k, din)
    wpw = jnp.transpose(pw_weight[:, :, 0, 0], (1, 0))
    wc = (wdw.astype(jnp.float32)[:, :, None] *
          wpw.astype(jnp.float32)[None, :, :]).astype(x.dtype)        # (k*k, din, dout)

    if cls_weight is None:                                             # Identity path
        assert din == dout, "Identity cls_proj requires dim_in == dim_out"
        clsw = jnp.eye(din, dtype=x.dtype)
        clsb = jnp.zeros((1, dout), jnp.float32)
    else:
        clsw = jnp.transpose(cls_weight, (1, 0)).astype(x.dtype)       # (din, dout)
        clsb = cls_bias.reshape(1, dout).astype(jnp.float32)

    cls_out, tok_out = pl.pallas_call(
        partial(_spatial_conv_kernel, h=h, w=w, k=k),
        out_shape=(jax.ShapeDtypeStruct((b, 1, dout), x.dtype),
                   jax.ShapeDtypeStruct((b, h * w, dout), x.dtype)),
        grid=grid,
        in_specs=[
            pl.BlockSpec((bt, seq, din), lambda i: (i, 0, 0)),
            pl.BlockSpec((k * k, din, dout), lambda i: (0, 0, 0)),
            pl.BlockSpec((din, dout), lambda i: (0, 0)),
            pl.BlockSpec((1, dout), lambda i: (0, 0)),
        ],
        out_specs=(
            pl.BlockSpec((bt, 1, dout), lambda i: (i, 0, 0)),
            pl.BlockSpec((bt, h * w, dout), lambda i: (i, 0, 0)),
        ),
        scratch_shapes=[pltpu.VMEM((bt, hp, wp, din), x.dtype)],
        compiler_params=pltpu.CompilerParams(
            dimension_semantics=("parallel",),
            vmem_limit_bytes=64 * 1024 * 1024),
    )(x, wc, clsw, clsb)

    # Keep the big in-kernel stores 8-sublane aligned; single concat here.
    return jnp.concatenate([cls_out, tok_out], axis=1)


def _reference(x, dw_weight, pw_weight, cls_weight, cls_bias, h, w):
    """Pure-JAX (f32) transcription of the PyTorch forward, for verification."""
    x = x.astype(jnp.float32)
    b, seq, din = x.shape
    k = dw_weight.shape[-1]
    p = k // 2
    cls_tok, toks = x[:, :1, :], x[:, 1:, :]
    fmap = toks.reshape(b, h, w, din)
    fpad = jnp.pad(fmap, ((0, 0), (p, p), (p, p), (0, 0)))
    acc = jnp.zeros((b, h, w, din), jnp.float32)
    for dy in range(k):
        for dx in range(k):
            wtap = dw_weight[:, 0, dy, dx].astype(jnp.float32)
            acc = acc + fpad[:, dy:dy + h, dx:dx + w, :] * wtap[None, None, None, :]
    pw = jnp.transpose(pw_weight[:, :, 0, 0], (1, 0)).astype(jnp.float32)
    conv_out = jnp.einsum('bhwc,co->bhwo', acc, pw).reshape(b, h * w, -1)
    if cls_weight is None:
        cls_out = cls_tok
    else:
        cls_out = cls_tok @ cls_weight.T.astype(jnp.float32) + cls_bias.astype(jnp.float32)
    return jnp.concatenate([cls_out, conv_out], axis=1)


if __name__ == "__main__":
    key = jax.random.PRNGKey(0)
    k1, k2, k3, k4, k5 = jax.random.split(key, 5)

    h, w, ksz = 16, 16, 3
    seq = 1 + h * w

    # --- Config 1: f32 activations, dim_in != dim_out (Linear cls projection),
    #     batch=8 so BT=2 images per grid step (grid=4). ---
    batch, din, dout = 8, 64, 128
    x = jax.random.normal(k1, (batch, seq, din), dtype=jnp.float32)
    dw_weight = jax.random.normal(k2, (din, 1, ksz, ksz), dtype=jnp.float32) * 0.2
    pw_weight = jax.random.normal(k3, (dout, din, 1, 1), dtype=jnp.float32) * 0.1
    cls_weight = jax.random.normal(k4, (dout, din), dtype=jnp.float32) * 0.1
    cls_bias = jax.random.normal(k5, (dout,), dtype=jnp.float32) * 0.1

    fwd = jax.jit(partial(spatial_conv, h=h, w=w))
    out = jax.block_until_ready(fwd(x, dw_weight, pw_weight, cls_weight, cls_bias))
    ref = _reference(x, dw_weight, pw_weight, cls_weight, cls_bias, h, w)
    assert out.shape == (batch, seq, dout) and out.dtype == x.dtype
    np.testing.assert_allclose(np.asarray(out, np.float32), np.asarray(ref),
                               atol=1e-2, rtol=1e-2)

    # --- Config 2: bf16 activations kept bf16 through DMA/MXU, dim_in == dim_out
    #     (Identity cls path), batch=2 (BT=1, grid=2). ---
    batch2, din2, dout2 = 2, 128, 128
    x2 = jax.random.normal(k1, (batch2, seq, din2), dtype=jnp.float32).astype(jnp.bfloat16)
    dw2 = jax.random.normal(k2, (din2, 1, ksz, ksz), dtype=jnp.float32) * 0.2
    pw2 = jax.random.normal(k3, (dout2, din2, 1, 1), dtype=jnp.float32) * 0.1

    fwd2 = jax.jit(partial(spatial_conv, h=h, w=w))
    out2 = jax.block_until_ready(fwd2(x2, dw2, pw2, None, None))
    ref2 = _reference(x2, dw2, pw2, None, None, h, w)
    assert out2.shape == (batch2, seq, dout2) and out2.dtype == jnp.bfloat16
    np.testing.assert_allclose(np.asarray(out2, np.float32), np.asarray(ref2),
                               atol=0.15, rtol=0.15)

    print("KERNEL_OK")
</pallas_src>

<mosaic_0001>
module attributes {stable_mosaic.version = 11 : i64} {
  func.func @_spatial_conv_kernel(%arg0: i32, %arg1: memref<2x257x64xf32, #tpu.memory_space<vmem>>, %arg2: memref<9x64x128xf32, #tpu.memory_space<vmem>>, %arg3: memref<64x128xf32, #tpu.memory_space<vmem>>, %arg4: memref<1x128xf32, #tpu.memory_space<vmem>>, %arg5: memref<2x1x128xf32, #tpu.memory_space<vmem>>, %arg6: memref<2x256x128xf32, #tpu.memory_space<vmem>>, %arg7: memref<2x18x18x64xf32, #tpu.memory_space<vmem>>) attributes {dimension_semantics = [#tpu.dimension_semantics<parallel>], iteration_bounds = array<i64: 4>, scalar_prefetch = 0 : i64, scratch_operands = 1 : i64, tpu.core_type = #tpu.core_type<tc>, window_params = [{transform_indices = @transform_0, window_bounds = array<i64: 2, 257, 64>}, {pipeline_mode = #tpu.pipeline_mode<synchronous>, transform_indices = @transform_1, window_bounds = array<i64: 9, 64, 128>}, {pipeline_mode = #tpu.pipeline_mode<synchronous>, transform_indices = @transform_2, window_bounds = array<i64: 64, 128>}, {pipeline_mode = #tpu.pipeline_mode<synchronous>, transform_indices = @transform_3, window_bounds = array<i64: 1, 128>}, {transform_indices = @transform_4, window_bounds = array<i64: 2, 1, 128>}, {transform_indices = @transform_5, window_bounds = array<i64: 2, 256, 128>}]} {
    %c0 = arith.constant 0 : index
    %c0_0 = arith.constant 0 : index
    %c0_1 = arith.constant 0 : index
    %0 = vector.load %arg1[%c0, %c0_0, %c0_1] : memref<2x257x64xf32, #tpu.memory_space<vmem>>, vector<2x1x64xf32>
    %1 = vector.shape_cast %0 : vector<2x1x64xf32> to vector<2x64xf32>
    %c0_2 = arith.constant 0 : index
    %c0_3 = arith.constant 0 : index
    %2 = vector.load %arg3[%c0_2, %c0_3] : memref<64x128xf32, #tpu.memory_space<vmem>>, vector<64x128xf32>
    %cst = arith.constant dense<0.000000e+00> : vector<2x128xf32>
    %3 = tpu.matmul %1, %2, %cst {dimension_numbers = #tpu.dot_dimension_numbers<[1], [0], [0], [1], [0, 0, 1, 1], [], []>} : vector<2x64xf32>, vector<64x128xf32>, vector<2x128xf32> -> vector<2x128xf32>
    %c0_4 = arith.constant 0 : index
    %c0_5 = arith.constant 0 : index
    %4 = vector.load %arg4[%c0_4, %c0_5] : memref<1x128xf32, #tpu.memory_space<vmem>>, vector<1x128xf32>
    %5 = vector.broadcast %4 : vector<1x128xf32> to vector<2x128xf32>
    %6 = arith.addf %3, %5 : vector<2x128xf32>
    %7 = vector.shape_cast %6 : vector<2x128xf32> to vector<2x1x128xf32>
    %c0_6 = arith.constant 0 : index
    %c0_7 = arith.constant 0 : index
    %c0_8 = arith.constant 0 : index
    %8 = vector.load %arg5[%c0_6, %c0_7, %c0_8] : memref<2x1x128xf32, #tpu.memory_space<vmem>>, vector<2x1x128xf32>
    tpu.vector_store %arg5[%c0_6, %c0_7, %c0_8], %7 {strides = array<i32>} : memref<2x1x128xf32, #tpu.memory_space<vmem>>, vector<2x1x128xf32>,
    %cst_9 = arith.constant 0.000000e+00 : f32
    %9 = vector.broadcast %cst_9 : f32 to vector<2x18x18x64xf32>
    %c0_10 = arith.constant 0 : index
    %c0_11 = arith.constant 0 : index
    %c0_12 = arith.constant 0 : index
    %c0_13 = arith.constant 0 : index
    %10 = vector.load %arg7[%c0_10, %c0_11, %c0_12, %c0_13] : memref<2x18x18x64xf32, #tpu.memory_space<vmem>>, vector<2x18x18x64xf32>
    tpu.vector_store %arg7[%c0_10, %c0_11, %c0_12, %c0_13], %9 {strides = array<i32>} : memref<2x18x18x64xf32, #tpu.memory_space<vmem>>, vector<2x18x18x64xf32>,
    %c0_14 = arith.constant 0 : index
    %c1 = arith.constant 1 : index
    %c0_15 = arith.constant 0 : index
    %11 = vector.load %arg1[%c0_14, %c1, %c0_15] : memref<2x257x64xf32, #tpu.memory_space<vmem>>, vector<2x256x64xf32>
    %12 = vector.shape_cast %11 : vector<2x256x64xf32> to vector<2x16x16x64xf32>
    %c0_16 = arith.constant 0 : index
    %c1_17 = arith.constant 1 : index
    %c1_18 = arith.constant 1 : index
    %c0_19 = arith.constant 0 : index
    %13 = vector.load %arg7[%c0_16, %c1_17, %c1_18, %c0_19] : memref<2x18x18x64xf32, #tpu.memory_space<vmem>>, vector<2x16x16x64xf32>
    tpu.vector_store %arg7[%c0_16, %c1_17, %c1_18, %c0_19], %12 {strides = array<i32>} : memref<2x18x18x64xf32, #tpu.memory_space<vmem>>, vector<2x16x16x64xf32>,
    %cst_20 = arith.constant 0.000000e+00 : f32
    %14 = vector.broadcast %cst_20 : f32 to vector<512x128xf32>
    %c0_21 = arith.constant 0 : index
    %c0_22 = arith.constant 0 : index
    %c0_23 = arith.constant 0 : index
    %c0_24 = arith.constant 0 : index
    %15 = vector.load %arg7[%c0_21, %c0_22, %c0_23, %c0_24] : memref<2x18x18x64xf32, #tpu.memory_space<vmem>>, vector<2x16x16x64xf32>
    %16 = vector.shape_cast %15 : vector<2x16x16x64xf32> to vector<512x64xf32>
    %c0_25 = arith.constant 0 : index
    %c0_26 = arith.constant 0 : index
    %c0_27 = arith.constant 0 : index
    %17 = vector.load %arg2[%c0_25, %c0_26, %c0_27] : memref<9x64x128xf32, #tpu.memory_space<vmem>>, vector<1x64x128xf32>
    %18 = vector.shape_cast %17 : vector<1x64x128xf32> to vector<64x128xf32>
    %cst_28 = arith.constant dense<0.000000e+00> : vector<512x128xf32>
    %19 = tpu.matmul %16, %18, %cst_28 {dimension_numbers = #tpu.dot_dimension_numbers<[1], [0], [0], [1], [0, 0, 1, 1], [], []>} : vector<512x64xf32>, vector<64x128xf32>, vector<512x128xf32> -> vector<512x128xf32>
    %20 = arith.addf %14, %19 : vector<512x128xf32>
    %c0_29 = arith.constant 0 : index
    %c0_30 = arith.constant 0 : index
    %c1_31 = arith.constant 1 : index
    %c0_32 = arith.constant 0 : index
    %21 = vector.load %arg7[%c0_29, %c0_30, %c1_31, %c0_32] : memref<2x18x18x64xf32, #tpu.memory_space<vmem>>, vector<2x16x16x64xf32>
    %22 = vector.shape_cast %21 : vector<2x16x16x64xf32> to vector<512x64xf32>
    %c1_33 = arith.constant 1 : index
    %c0_34 = arith.constant 0 : index
    %c0_35 = arith.constant 0 : index
    %23 = vector.load %arg2[%c1_33, %c0_34, %c0_35] : memref<9x64x128xf32, #tpu.memory_space<vmem>>, vector<1x64x128xf32>
    %24 = vector.shape_cast %23 : vector<1x64x128xf32> to vector<64x128xf32>
    %cst_36 = arith.constant dense<0.000000e+00> : vector<512x128xf32>
    %25 = tpu.matmul %22, %24, %cst_36 {dimension_numbers = #tpu.dot_dimension_numbers<[1], [0], [0], [1], [0, 0, 1, 1], [], []>} : vector<512x64xf32>, vector<64x128xf32>, vector<512x128xf32> -> vector<512x128xf32>
    %26 = arith.addf %20, %25 : vector<512x128xf32>
    %c0_37 = arith.constant 0 : index
    %c0_38 = arith.constant 0 : index
    %c2 = arith.constant 2 : index
    %c0_39 = arith.constant 0 : index
    %27 = vector.load %arg7[%c0_37, %c0_38, %c2, %c0_39] : memref<2x18x18x64xf32, #tpu.memory_space<vmem>>, vector<2x16x16x64xf32>
    %28 = vector.shape_cast %27 : vector<2x16x16x64xf32> to vector<512x64xf32>
    %c2_40 = arith.constant 2 : index
    %c0_41 = arith.constant 0 : index
    %c0_42 = arith.constant 0 : index
    %29 = vector.load %arg2[%c2_40, %c0_41, %c0_42] : memref<9x64x128xf32, #tpu.memory_space<vmem>>, vector<1x64x128xf32>
    %30 = vector.shape_cast %29 : vector<1x64x128xf32> to vector<64x128xf32>
    %cst_43 = arith.constant dense<0.000000e+00> : vector<512x128xf32>
    %31 = tpu.matmul %28, %30, %cst_43 {dimension_numbers = #tpu.dot_dimension_numbers<[1], [0], [0], [1], [0, 0, 1, 1], [], []>} : vector<512x64xf32>, vector<64x128xf32>, vector<512x128xf32> -> vector<512x128xf32>
    %32 = arith.addf %26, %31 : vector<512x128xf32>
    %c0_44 = arith.constant 0 : index
    %c1_45 = arith.constant 1 : index
    %c0_46 = arith.constant 0 : index
    %c0_47 = arith.constant 0 : index
    %33 = vector.load %arg7[%c0_44, %c1_45, %c0_46, %c0_47] : memref<2x18x18x64xf32, #tpu.memory_space<vmem>>, vector<2x16x16x64xf32>
    %34 = vector.shape_cast %33 : vector<2x16x16x64xf32> to vector<512x64xf32>
    %c3 = arith.constant 3 : index
    %c0_48 = arith.constant 0 : index
    %c0_49 = arith.constant 0 : index
    %35 = vector.load %arg2[%c3, %c0_48, %c0_49] : memref<9x64x128xf32, #tpu.memory_space<vmem>>, vector<1x64x128xf32>
    %36 = vector.shape_cast %35 : vector<1x64x128xf32> to vector<64x128xf32>
    %cst_50 = arith.constant dense<0.000000e+00> : vector<512x128xf32>
    %37 = tpu.matmul %34, %36, %cst_50 {dimension_numbers = #tpu.dot_dimension_numbers<[1], [0], [0], [1], [0, 0, 1, 1], [], []>} : vector<512x64xf32>, vector<64x128xf32>, vector<512x128xf32> -> vector<512x128xf32>
    %38 = arith.addf %32, %37 : vector<512x128xf32>
    %c0_51 = arith.constant 0 : index
    %c1_52 = arith.constant 1 : index
    %c1_53 = arith.constant 1 : index
    %c0_54 = arith.constant 0 : index
    %39 = vector.load %arg7[%c0_51, %c1_52, %c1_53, %c0_54] : memref<2x18x18x64xf32, #tpu.memory_space<vmem>>, vector<2x16x16x64xf32>
    %40 = vector.shape_cast %39 : vector<2x16x16x64xf32> to vector<512x64xf32>
    %c4 = arith.constant 4 : index
    %c0_55 = arith.constant 0 : index
    %c0_56 = arith.constant 0 : index
    %41 = vector.load %arg2[%c4, %c0_55, %c0_56] : memref<9x64x128xf32, #tpu.memory_space<vmem>>, vector<1x64x128xf32>
    %42 = vector.shape_cast %41 : vector<1x64x128xf32> to vector<64x128xf32>
    %cst_57 = arith.constant dense<0.000000e+00> : vector<512x128xf32>
    %43 = tpu.matmul %40, %42, %cst_57 {dimension_numbers = #tpu.dot_dimension_numbers<[1], [0], [0], [1], [0, 0, 1, 1], [], []>} : vector<512x64xf32>, vector<64x128xf32>, vector<512x128xf32> -> vector<512x128xf32>
    %44 = arith.addf %38, %43 : vector<512x128xf32>
    %c0_58 = arith.constant 0 : index
    %c1_59 = arith.constant 1 : index
    %c2_60 = arith.constant 2 : index
    %c0_61 = arith.constant 0 : index
    %45 = vector.load %arg7[%c0_58, %c1_59, %c2_60, %c0_61] : memref<2x18x18x64xf32, #tpu.memory_space<vmem>>, vector<2x16x16x64xf32>
    %46 = vector.shape_cast %45 : vector<2x16x16x64xf32> to vector<512x64xf32>
    %c5 = arith.constant 5 : index
    %c0_62 = arith.constant 0 : index
    %c0_63 = arith.constant 0 : index
    %47 = vector.load %arg2[%c5, %c0_62, %c0_63] : memref<9x64x128xf32, #tpu.memory_space<vmem>>, vector<1x64x128xf32>
    %48 = vector.shape_cast %47 : vector<1x64x128xf32> to vector<64x128xf32>
    %cst_64 = arith.constant dense<0.000000e+00> : vector<512x128xf32>
    %49 = tpu.matmul %46, %48, %cst_64 {dimension_numbers = #tpu.dot_dimension_numbers<[1], [0], [0], [1], [0, 0, 1, 1], [], []>} : vector<512x64xf32>, vector<64x128xf32>, vector<512x128xf32> -> vector<512x128xf32>
    %50 = arith.addf %44, %49 : vector<512x128xf32>
    %c0_65 = arith.constant 0 : index
    %c2_66 = arith.constant 2 : index
    %c0_67 = arith.constant 0 : index
    %c0_68 = arith.constant 0 : index
    %51 = vector.load %arg7[%c0_65, %c2_66, %c0_67, %c0_68] : memref<2x18x18x64xf32, #tpu.memory_space<vmem>>, vector<2x16x16x64xf32>
    %52 = vector.shape_cast %51 : vector<2x16x16x64xf32> to vector<512x64xf32>
    %c6 = arith.constant 6 : index
    %c0_69 = arith.constant 0 : index
    %c0_70 = arith.constant 0 : index
    %53 = vector.load %arg2[%c6, %c0_69, %c0_70] : memref<9x64x128xf32, #tpu.memory_space<vmem>>, vector<1x64x128xf32>
    %54 = vector.shape_cast %53 : vector<1x64x128xf32> to vector<64x128xf32>
    %cst_71 = arith.constant dense<0.000000e+00> : vector<512x128xf32>
    %55 = tpu.matmul %52, %54, %cst_71 {dimension_numbers = #tpu.dot_dimension_numbers<[1], [0], [0], [1], [0, 0, 1, 1], [], []>} : vector<512x64xf32>, vector<64x128xf32>, vector<512x128xf32> -> vector<512x128xf32>
    %56 = arith.addf %50, %55 : vector<512x128xf32>
    %c0_72 = arith.constant 0 : index
    %c2_73 = arith.constant 2 : index
    %c1_74 = arith.constant 1 : index
    %c0_75 = arith.constant 0 : index
    %57 = vector.load %arg7[%c0_72, %c2_73, %c1_74, %c0_75] : memref<2x18x18x64xf32, #tpu.memory_space<vmem>>, vector<2x16x16x64xf32>
    %58 = vector.shape_cast %57 : vector<2x16x16x64xf32> to vector<512x64xf32>
    %c7 = arith.constant 7 : index
    %c0_76 = arith.constant 0 : index
    %c0_77 = arith.constant 0 : index
    %59 = vector.load %arg2[%c7, %c0_76, %c0_77] : memref<9x64x128xf32, #tpu.memory_space<vmem>>, vector<1x64x128xf32>
    %60 = vector.shape_cast %59 : vector<1x64x128xf32> to vector<64x128xf32>
    %cst_78 = arith.constant dense<0.000000e+00> : vector<512x128xf32>
    %61 = tpu.matmul %58, %60, %cst_78 {dimension_numbers = #tpu.dot_dimension_numbers<[1], [0], [0], [1], [0, 0, 1, 1], [], []>} : vector<512x64xf32>, vector<64x128xf32>, vector<512x128xf32> -> vector<512x128xf32>
    %62 = arith.addf %56, %61 : vector<512x128xf32>
    %c0_79 = arith.constant 0 : index
    %c2_80 = arith.constant 2 : index
    %c2_81 = arith.constant 2 : index
    %c0_82 = arith.constant 0 : index
    %63 = vector.load %arg7[%c0_79, %c2_80, %c2_81, %c0_82] : memref<2x18x18x64xf32, #tpu.memory_space<vmem>>, vector<2x16x16x64xf32>
    %64 = vector.shape_cast %63 : vector<2x16x16x64xf32> to vector<512x64xf32>
    %c8 = arith.constant 8 : index
    %c0_83 = arith.constant 0 : index
    %c0_84 = arith.constant 0 : index
    %65 = vector.load %arg2[%c8, %c0_83, %c0_84] : memref<9x64x128xf32, #tpu.memory_space<vmem>>, vector<1x64x128xf32>
    %66 = vector.shape_cast %65 : vector<1x64x128xf32> to vector<64x128xf32>
    %cst_85 = arith.constant dense<0.000000e+00> : vector<512x128xf32>
    %67 = tpu.matmul %64, %66, %cst_85 {dimension_numbers = #tpu.dot_dimension_numbers<[1], [0], [0], [1], [0, 0, 1, 1], [], []>} : vector<512x64xf32>, vector<64x128xf32>, vector<512x128xf32> -> vector<512x128xf32>
    %68 = arith.addf %62, %67 : vector<512x128xf32>
    %69 = vector.shape_cast %68 : vector<512x128xf32> to vector<2x256x128xf32>
    %c0_86 = arith.constant 0 : index
    %c0_87 = arith.constant 0 : index
    %c0_88 = arith.constant 0 : index
    %70 = vector.load %arg6[%c0_86, %c0_87, %c0_88] : memref<2x256x128xf32, #tpu.memory_space<vmem>>, vector<2x256x128xf32>
    tpu.vector_store %arg6[%c0_86, %c0_87, %c0_88], %69 {strides = array<i32>} : memref<2x256x128xf32, #tpu.memory_space<vmem>>, vector<2x256x128xf32>,
    return
  }
  func.func @transform_0(%arg0: i32) -> (i32, i32, i32) {
    %c0_i32 = arith.constant 0 : i32
    %c0_i32_0 = arith.constant 0 : i32
    %c0_i32_1 = arith.constant 0 : i32
    return %arg0, %c0_i32, %c0_i32_0 : i32, i32, i32
  }
  func.func @transform_1(%arg0: i32) -> (i32, i32, i32) {
    %c0_i32 = arith.constant 0 : i32
    %c0_i32_0 = arith.constant 0 : i32
    %c0_i32_1 = arith.constant 0 : i32
    %c0_i32_2 = arith.constant 0 : i32
    return %c0_i32, %c0_i32_0, %c0_i32_1 : i32, i32, i32
  }
  func.func @transform_2(%arg0: i32) -> (i32, i32) {
    %c0_i32 = arith.constant 0 : i32
    %c0_i32_0 = arith.constant 0 : i32
    %c0_i32_1 = arith.constant 0 : i32
    return %c0_i32, %c0_i32_0 : i32, i32
  }
  func.func @transform_3(%arg0: i32) -> (i32, i32) {
    %c0_i32 = arith.constant 0 : i32
    %c0_i32_0 = arith.constant 0 : i32
    %c0_i32_1 = arith.constant 0 : i32
    return %c0_i32, %c0_i32_0 : i32, i32
  }
  func.func @transform_4(%arg0: i32) -> (i32, i32, i32) {
    %c0_i32 = arith.constant 0 : i32
    %c0_i32_0 = arith.constant 0 : i32
    %c0_i32_1 = arith.constant 0 : i32
    return %arg0, %c0_i32, %c0_i32_0 : i32, i32, i32
  }
  func.func @transform_5(%arg0: i32) -> (i32, i32, i32) {
    %c0_i32 = arith.constant 0 : i32
    %c0_i32_0 = arith.constant 0 : i32
    %c0_i32_1 = arith.constant 0 : i32
    return %arg0, %c0_i32, %c0_i32_0 : i32, i32, i32
  }
}

</mosaic_0001>

<llo_original>
// kernel: mul.8
$region0: #{mul.8}
  %s0 = inlined_call_operand.vmem [shape: f32[3,3,64], index: 0, kind: input, shape index: {}]
  %s1 = inlined_call_operand.vmem [shape: f32[9,64], index: 1, kind: output, shape index: {}]
  $region1: #{mul.8} parent=0
    #allocation0 [shape = 'u8[12288]{0}', space=vmem, size = 0x3000, scoped, tag = 'scoped mem for input reshape']
    %s3 = ssub.s32 16, 1
    %s4 = scalar_lea.vmem %s0, 8
    %v5 = vld [vmem:[%s4] sm:%s3]
    %s6 = scalar_lea.vmem [#allocation0], 16
    %7 = vst [vmem:[%s6] sm:%s3] %v5
    %s8 = scalar_lea.vmem %s0, 4
    %v9 = vld [vmem:[%s8] sm:%s3]
    %s10 = scalar_lea.vmem [#allocation0], 8
    %11 = vst [vmem:[%s10] sm:%s3] %v9
    %v12 = vld [vmem:[%s0] sm:%s3]
    %13 = vst [vmem:[#allocation0] sm:%s3] %v12
    %v14 = vld [vmem:[#allocation0] sm:$0x7]
    %vm15 = vcmask 523264
    %16 = vst.msk [vmem:[%s1] sm:$0x7] %vm15, %v14
    %s17 = scalar_lea.vmem [#allocation0], 8
    %v18 = vld [vmem:[%s17] sm:$0x7]
    %vm19 = vcmask 523264
    %s20 = scalar_lea.vmem %s1, 3
    %21 = vst.msk [vmem:[%s20] sm:$0x7] %vm19, %v18
    %s22 = scalar_lea.vmem [#allocation0], 16
    %v23 = vld [vmem:[%s22] sm:$0x7]
    %vm24 = vcmask 523264
    %s25 = scalar_lea.vmem %s1, 6
    %26 = vst.msk [vmem:[%s25] sm:$0x7] %vm24, %v23

// kernel: spatial_conv.1
$region0: #{spatial_conv.1}
  #allocation0 [shape = 'u32[]', space=smem, size = 0x4, offset = 0x4, fixed_abs, tag = 'smem constant byte address 0x4 - core index']
  #allocation1 [shape = 'u32[72,128]{1,0:T(1,128)}', space=vmem, size = 0x9000, scoped, tag = 'internal scratch']
  #allocation2 [shape = 'f32[2,18,18,64]{3,2,1,0:T(8,128)}', space=vmem, size = 0x6c000, scoped, tag = 'scratch operand']
  %s0 = inlined_call_operand.vmem [shape: f32[8,257,64], index: 0, kind: input, shape index: {}]
  %s1 = inlined_call_operand.vmem [shape: f32[9,64,128], index: 1, kind: input, shape index: {}]
  %s2 = inlined_call_operand.vmem [shape: f32[64,128], index: 2, kind: input, shape index: {}]
  %s3 = inlined_call_operand.vmem [shape: f32[1,128], index: 3, kind: input, shape index: {}]
  %s4 = inlined_call_operand.vmem [shape: f32[8,1,128], index: 4, kind: output, shape index: {0}]
  %s5 = inlined_call_operand.vmem [shape: f32[8,256,128], index: 5, kind: output, shape index: {1}]
  %6 = xla_tuple %s4, %s5
  %s7 = sld [smem:[#allocation0]]
  $region57: #{spatial_conv.1} parent=0
    _
  %s9 = ssub.s32 1, %s7
  %s10 = scalar_select 0, %s9, %s7
  loop: start=0, step=1, limit=6
  $region2: #{spatial_conv.1} parent=0 // loop_pre_header
    _
  $region3: #{spatial_conv.1} parent=0 // loop_header
    %s12 = sphi 0, %s16
    %p13 = scmp.ge.s32.totalorder %s12, 6
    %s22 = sphi 0, %s24
    %s25 = sphi 0, %s22
    %s26 = sphi 0, %s25
    %s42 = sphi 0, %s26
    %s46 = sphi 0, %s46
    %s48 = sphi 0, %s46
    %s49 = sphi 0, %s48
    %s63 = sphi 0, %s49
    %s67 = sphi 0, %s67
    %s69 = sphi 0, %s67
    %s70 = sphi 0, %s69
    %s84 = sphi 0, %s70
    %s88 = sphi 0, %s88
    %s90 = sphi 0, %s88
    %s91 = sphi 0, %s90
    %s105 = sphi 0, %s91
    %s111 = sphi 0, %s113
    %s114 = sphi 0, %s111
    %s115 = sphi 0, %s114
    %s131 = sphi 0, %s115
    %s137 = sphi 0, %s139
    %s140 = sphi 0, %s137
    %s141 = sphi 0, %s140
    %s157 = sphi 0, %s141
  $region4: #{spatial_conv.1} parent=0 // loop_header_branch
    %15 = sbr.rel (%p13) target = $region8
  $region5: #{spatial_conv.1} parent=0 // loop_body
    %s17 = ssub.s32 %s12, 1
    %s18 = ssub.s32 %s12, 2
    %s19 = sadd.s32 %s12, 1
    %s20 = ssub.s32 %s12, %s19
    %p21 = scmp.eq.s32.totalorder %s20, 0
    %s23 = sadd.s32 %s22, 1
    %s24 = scalar_select %p21, %s22, %s23
    %p27 = pneg %p21
    %p28 = scmp.eq.s32.totalorder %s12, 3
    %p29 = por %p27, %p28
    %p30 = scmp.ne.s32.totalorder %s22, %s25
    %p31 = scmp.eq.s32.totalorder %s12, 0
    %p32 = por %p30, %p31
    %p33 = scmp.ne.s32.totalorder %s22, %s25
    %p34 = scmp.eq.s32.totalorder %s17, 3
    %p35 = por %p33, %p34
    %p36 = scmp.ne.s32.totalorder %s25, %s26
    %p37 = scmp.eq.s32.totalorder %s17, 0
    %p38 = por %p36, %p37
    %p39 = scmp.ne.s32.totalorder %s25, %s26
    %p40 = scmp.eq.s32.totalorder %s18, 3
    %p41 = por %p39, %p40
    %p43 = scmp.ne.s32.totalorder %s26, %s42
    %p44 = scmp.eq.s32.totalorder %s18, 0
    %p45 = por %p43, %p44
    %s47 = sadd.s32 %s46, 1
    %p50 = scmp.eq.s32.totalorder %s12, 3
    %p51 = scmp.ne.s32.totalorder %s46, %s48
    %p52 = scmp.eq.s32.totalorder %s12, 0
    %p53 = por %p51, %p52
    %p54 = scmp.ne.s32.totalorder %s46, %s48
    %p55 = scmp.eq.s32.totalorder %s17, 3
    %p56 = por %p54, %p55
    %p57 = scmp.ne.s32.totalorder %s48, %s49
    %p58 = scmp.eq.s32.totalorder %s17, 0
    %p59 = por %p57, %p58
    %p60 = scmp.ne.s32.totalorder %s48, %s49
    %p61 = scmp.eq.s32.totalorder %s18, 3
    %p62 = por %p60, %p61
    %p64 = scmp.ne.s32.totalorder %s49, %s63
    %p65 = scmp.eq.s32.totalorder %s18, 0
    %p66 = por %p64, %p65
    %s68 = sadd.s32 %s67, 1
    %p71 = scmp.eq.s32.totalorder %s12, 3
    %p72 = scmp.ne.s32.totalorder %s67, %s69
    %p73 = scmp.eq.s32.totalorder %s12, 0
    %p74 = por %p72, %p73
    %p75 = scmp.ne.s32.totalorder %s67, %s69
    %p76 = scmp.eq.s32.totalorder %s17, 3
    %p77 = por %p75, %p76
    %p78 = scmp.ne.s32.totalorder %s69, %s70
    %p79 = scmp.eq.s32.totalorder %s17, 0
    %p80 = por %p78, %p79
    %p81 = scmp.ne.s32.totalorder %s69, %s70
    %p82 = scmp.eq.s32.totalorder %s18, 3
    %p83 = por %p81, %p82
    %p85 = scmp.ne.s32.totalorder %s70, %s84
    %p86 = scmp.eq.s32.totalorder %s18, 0
    %p87 = por %p85, %p86
    %s89 = sadd.s32 %s88, 1
    %p92 = scmp.eq.s32.totalorder %s12, 3
    %p93 = scmp.ne.s32.totalorder %s88, %s90
    %p94 = scmp.eq.s32.totalorder %s12, 0
    %p95 = por %p93, %p94
    %p96 = scmp.ne.s32.totalorder %s88, %s90
    %p97 = scmp.eq.s32.totalorder %s17, 3
    %p98 = por %p96, %p97
    %p99 = scmp.ne.s32.totalorder %s90, %s91
    %p100 = scmp.eq.s32.totalorder %s17, 0
    %p101 = por %p99, %p100
    %p102 = scmp.ne.s32.totalorder %s90, %s91
    %p103 = scmp.eq.s32.totalorder %s18, 3
    %p104 = por %p102, %p103
    %p106 = scmp.ne.s32.totalorder %s91, %s105
    %p107 = scmp.eq.s32.totalorder %s18, 0
    %p108 = por %p106, %p107
    %s109 = ssub.s32 %s12, %s19
    %p110 = scmp.eq.s32.totalorder %s109, 0
    %s112 = sadd.s32 %s111, 1
    %s113 = scalar_select %p110, %s111, %s112
    %p116 = pneg %p110
    %p117 = scmp.eq.s32.totalorder %s12, 3
    %p118 = por %p116, %p117
    %p119 = scmp.ne.s32.totalorder %s111, %s114
    %p120 = scmp.eq.s32.totalorder %s12, 0
    %p121 = por %p119, %p120
    %p122 = scmp.ne.s32.totalorder %s111, %s114
    %p123 = scmp.eq.s32.totalorder %s17, 3
    %p124 = por %p122, %p123
    %p125 = scmp.ne.s32.totalorder %s114, %s115
    %p126 = scmp.eq.s32.totalorder %s17, 0
    %p127 = por %p125, %p126
    %p128 = scmp.ne.s32.totalorder %s114, %s115
    %p129 = scmp.eq.s32.totalorder %s18, 3
    %p130 = por %p128, %p129
    %p132 = scmp.ne.s32.totalorder %s115, %s131
    %p133 = scmp.eq.s32.totalorder %s18, 0
    %p134 = por %p132, %p133
    %s135 = ssub.s32 %s12, %s19
    %p136 = scmp.eq.s32.totalorder %s135, 0
    %s138 = sadd.s32 %s137, 1
    %s139 = scalar_select %p136, %s137, %s138
    %p142 = pneg %p136
    %p143 = scmp.eq.s32.totalorder %s12, 3
    %p144 = por %p142, %p143
    %p145 = scmp.ne.s32.totalorder %s137, %s140
    %p146 = scmp.eq.s32.totalorder %s12, 0
    %p147 = por %p145, %p146
    %p148 = scmp.ne.s32.totalorder %s137, %s140
    %p149 = scmp.eq.s32.totalorder %s17, 3
    %p150 = por %p148, %p149
    %p151 = scmp.ne.s32.totalorder %s140, %s141
    %p152 = scmp.eq.s32.totalorder %s17, 0
    %p153 = por %p151, %p152
    %p154 = scmp.ne.s32.totalorder %s140, %s141
    %p155 = scmp.eq.s32.totalorder %s18, 3
    %p156 = por %p154, %p155
    %p158 = scmp.ne.s32.totalorder %s141, %s157
    %p159 = scmp.eq.s32.totalorder %s18, 0
    %p160 = por %p158, %p159
    %p161 = scmp.le.s32.totalorder 1, %s12
    %p162 = scmp.lt.s32.totalorder %s12, 5
    %p163 = pnand %p161, %p162
    %p164 = pneg %p163
    // Predicated region
    $region9: #{spatial_conv.1} parent=5 // pred_check
      _
    $region10: #{spatial_conv.1} parent=5 // pred_check_branch
      %166 = sbr.rel (%p163) target = $region12
    $region11: #{spatial_conv.1} parent=5 // pred_region
      %s167 = ssub.s32 %s12, 1
      // Predicated region
      $region13: #{spatial_conv.1} parent=11 // pred_check
        %p168 = pneg %p59
      $region14: #{spatial_conv.1} parent=11 // pred_check_branch
        %170 = sbr.rel (%p168) target = $region16
      $region15: #{spatial_conv.1} parent=11 // pred_region
        _
      $region16: #{spatial_conv.1} parent=11 // pred_fallthru
        _
      // Predicated region
      $region17: #{spatial_conv.1} parent=11 // pred_check
        %p171 = pneg %p80
      $region18: #{spatial_conv.1} parent=11 // pred_check_branch
        %173 = sbr.rel (%p171) target = $region20
      $region19: #{spatial_conv.1} parent=11 // pred_region
        _
      $region20: #{spatial_conv.1} parent=11 // pred_fallthru
        _
      // Predicated region
      $region21: #{spatial_conv.1} parent=11 // pred_check
        %p174 = pneg %p101
      $region22: #{spatial_conv.1} parent=11 // pred_check_branch
        %176 = sbr.rel (%p174) target = $region24
      $region23: #{spatial_conv.1} parent=11 // pred_region
        _
      $region24: #{spatial_conv.1} parent=11 // pred_fallthru
        _
    $region12: #{spatial_conv.1} parent=5 // pred_fallthru
      _
    %p177 = scmp.lt.s32.totalorder %s12, 4
    // Predicated region
    $region25: #{spatial_conv.1} parent=5 // pred_check
      %p178 = pneg %p177
    $region26: #{spatial_conv.1} parent=5 // pred_check_branch
      %180 = sbr.rel (%p178) target = $region28
    $region27: #{spatial_conv.1} parent=5 // pred_region
      // Predicated region
      $region29: #{spatial_conv.1} parent=27 // pred_check
        %p181 = pneg %p32
      $region30: #{spatial_conv.1} parent=27 // pred_check_branch
        %183 = sbr.rel (%p181) target = $region32
      $region31: #{spatial_conv.1} parent=27 // pred_region
        %s184 = smul.u32 2, %s12
        %p185 = scmp.lt.s32.totalorder %s184, 7
        %s186 = scalar_select %p185, %s184, 7
        %s187 = smul.addr %s186, 33
        %s188 = smul.addr %s187, 8
        %s189 = scalar_lea.vmem %s0, %s188
        %s190 = smul.u32 2, %s12
      $region32: #{spatial_conv.1} parent=27 // pred_fallthru
        _
    $region28: #{spatial_conv.1} parent=5 // pred_fallthru
      _
    %p191 = scmp.le.s32.totalorder 1, %s12
    %p192 = scmp.lt.s32.totalorder %s12, 5
    %p193 = pnand %p191, %p192
    %p194 = pneg %p193
    // Predicated region
    $region33: #{spatial_conv.1} parent=5 // pred_check
      _
    $region34: #{spatial_conv.1} parent=5 // pred_check_branch
      %196 = sbr.rel (%p193) target = $region36
    $region35: #{spatial_conv.1} parent=5 // pred_region
      %s197 = ssub.s32 %s12, 1
      %s198 = smul.u32 2, %s17
      %p199 = scmp.lt.s32.totalorder %s198, 7
      %s200 = scalar_select %p199, %s198, 7
      %s201 = smul.addr %s200, 33
      %s202 = smul.addr %s201, 8
      %s203 = scalar_lea.vmem %s0, %s202
      %p204 = pneg %p38
      %p205 = pneg %p35
      %p206 = pneg %p59
      %p207 = pneg %p56
      %p208 = pneg %p80
      %p209 = pneg %p77
      %p210 = pneg %p101
      %p211 = pneg %p98
      %p212 = pneg %p127
      %p213 = pneg %p124
      %s214 = smul.u32 2, %s17
      %p215 = scmp.lt.s32.totalorder %s214, 7
      %s216 = scalar_select %p215, %s214, 7
      %s217 = scalar_lea.vmem %s4, %s216
      %p218 = pneg %p153
      %p219 = pneg %p150
      %s220 = smul.u32 2, %s17
      %p221 = scmp.lt.s32.totalorder %s220, 7
      %s222 = scalar_select %p221, %s220, 7
      %s223 = smul.addr %s222, 32
      %s224 = smul.addr %s223, 8
      %s225 = scalar_lea.vmem %s5, %s224
      %s226 = smul.u32 2, %s17
      %p227 = scmp.lt.s32.totalorder %s226, 7
      %s228 = scalar_select %p227, %s226, 7
      %s229 = smul.addr %s228, 33
      %s230 = smul.addr %s229, 8
      %s231 = scalar_lea.vmem %s0, %s230
      %s232 = smul.u32 2, %s17
      %s233 = smul.u32 2, %s17
      %p234 = scmp.lt.s32.totalorder %s233, 7
      %s235 = scalar_select %p234, %s233, 7
      %s236 = scalar_lea.vmem %s4, %s235
      %s237 = smul.u32 2, %s17
      %s238 = smul.u32 2, %s17
      %p239 = scmp.lt.s32.totalorder %s238, 7
      %s240 = scalar_select %p239, %s238, 7
      %s241 = smul.addr %s240, 32
      %s242 = smul.addr %s241, 8
      %s243 = scalar_lea.vmem %s5, %s242
      %s244 = smul.u32 2, %s17
      %v245 = vld [vmem:[%s231] sm:$0x1]
      %v246 = vld [vmem:[%s231 + $0x108] sm:$0x1]
      %v247 = vld [vmem:[%s2] sm:$0xff]
      %v248 = vld [vmem:[%s2 + $0x8] sm:$0xff]
      %v249 = vld [vmem:[%s2 + $0x10] sm:$0xff]
      %v250 = vld [vmem:[%s2 + $0x18] sm:$0xff]
      %v251 = vld [vmem:[%s2 + $0x20] sm:$0xff]
      %v252 = vld [vmem:[%s2 + $0x28] sm:$0xff]
      %v253 = vld [vmem:[%s2 + $0x30] sm:$0xff]
      %v254 = vld [vmem:[%s2 + $0x38] sm:$0xff]
      %v255 = vld [vmem:[%s3] sm:$0x1]
      %v257 = vperm.slane %v255, 0
      %v261 = vrot.slane %v246, 7
      %vm262 = vcmask 1041409
      %v263 = vsel %vm262, %v261, %v245
      %vm264 = vcmask 523264
      %v265 = vsel %vm264, %v263, 0
      %267 = vmatpush.msra.mxu0 0.0
      %268 = vmatpush.msra.mxu0 0.0
      %269 = vmatpush.msra.mxu0 0.0
      %270 = vmatpush.msra.mxu0 0.0
      %271 = vmatpush.msra.mxu0 0.0
      %272 = vmatpush.msra.mxu0 0.0
      %273 = vmatpush.msra.mxu0 0.0
      %274 = vmatpush.msra.mxu0 0.0
      %275 = vmatpush.msra.mxu0 %v254
      %276 = vmatpush.msra.mxu0 %v253
      %277 = vmatpush.msra.mxu0 %v252
      %278 = vmatpush.msra.mxu0 %v251
      %279 = vmatpush.msra.mxu0 %v250
      %280 = vmatpush.msra.mxu0 %v249
      %281 = vmatpush.msra.mxu0 %v248
      %282 = vmatpush.msra.mxu0 %v247
      %283 = vmatmul.f32.gmra.mxu0 %v265
      %v284 = vpop.f32.mrf.mxu0
      %v285 = vadd.f32 %v257, %v284
      %286 = vdwg.mxu0
      %v288 = vrot.slane %v285, 1
      %290 = vst [vmem:[%s236] sm:$0x1] %v285
      %291 = vst [vmem:[%s236 + $0x1] sm:$0x1] %v288
      %292 = vst.msk [vmem:[#allocation2] sm:$0xff] %vm264, 0.0
      %293 = vst.msk [vmem:[#allocation2 + $0x8] sm:$0xff] %vm264, 0.0
      %vm294 = vcmask 517120
      %295 = vst.msk [vmem:[#allocation2 + $0x10] sm:$0x3] %vm294, 0.0
      %296 = vst.msk [vmem:[#allocation2 + $0x18] sm:$0xff] %vm264, 0.0
      %297 = vst.msk [vmem:[#allocation2 + $0x20] sm:$0xff] %vm264, 0.0
      %298 = vst.msk [vmem:[#allocation2 + $0x28] sm:$0x3] %vm294, 0.0
      %299 = vst.msk [vmem:[#allocation2 + $0x30] sm:$0xff] %vm264, 0.0
      %300 = vst.msk [vmem:[#allocation2 + $0x38] sm:$0xff] %vm264, 0.0
      %301 = vst.msk [vmem:[#allocation2 + $0x40] sm:$0x3] %vm294, 0.0
      %302 = vst.msk [vmem:[#allocation2 + $0x48] sm:$0xff] %vm264, 0.0
      %303 = vst.msk [vmem:[#allocation2 + $0x50] sm:$0xff] %vm264, 0.0
      %304 = vst.msk [vmem:[#allocation2 + $0x58] sm:$0x3] %vm294, 0.0
      %305 = vst.msk [vmem:[#allocation2 + $0x60] sm:$0xff] %vm264, 0.0
      %306 = vst.msk [vmem:[#allocation2 + $0x68] sm:$0xff] %vm264, 0.0
      %307 = vst.msk [vmem:[#allocation2 + $0x70] sm:$0x3] %vm294, 0.0
      %308 = vst.msk [vmem:[#allocation2 + $0x78] sm:$0xff] %vm264, 0.0
      %309 = vst.msk [vmem:[#allocation2 + $0x80] sm:$0xff] %vm264, 0.0
      %310 = vst.msk [vmem:[#allocation2 + $0x88] sm:$0x3] %vm294, 0.0
      %311 = vst.msk [vmem:[#allocation2 + $0x90] sm:$0xff] %vm264, 0.0
      %312 = vst.msk [vmem:[#allocation2 + $0x98] sm:$0xff] %vm264, 0.0
      %313 = vst.msk [vmem:[#allocation2 + $0xa0] sm:$0x3] %vm294, 0.0
      %314 = vst.msk [vmem:[#allocation2 + $0xa8] sm:$0xff] %vm264, 0.0
      %315 = vst.msk [vmem:[#allocation2 + $0xb0] sm:$0xff] %vm264, 0.0
      %316 = vst.msk [vmem:[#allocation2 + $0xb8] sm:$0x3] %vm294, 0.0
      %317 = vst.msk [vmem:[#allocation2 + $0xc0] sm:$0xff] %vm264, 0.0
      %318 = vst.msk [vmem:[#allocation2 + $0xc8] sm:$0xff] %vm264, 0.0
      %319 = vst.msk [vmem:[#allocation2 + $0xd0] sm:$0x3] %vm294, 0.0
      %320 = vst.msk [vmem:[#allocation2 + $0xd8] sm:$0xff] %vm264, 0.0
      %321 = vst.msk [vmem:[#allocation2 + $0xe0] sm:$0xff] %vm264, 0.0
      %322 = vst.msk [vmem:[#allocation2 + $0xe8] sm:$0x3] %vm294, 0.0
      %323 = vst.msk [vmem:[#allocation2 + $0xf0] sm:$0xff] %vm264, 0.0
      %324 = vst.msk [vmem:[#allocation2 + $0xf8] sm:$0xff] %vm264, 0.0
      %325 = vst.msk [vmem:[#allocation2 + $0x100] sm:$0x3] %vm294, 0.0
      %326 = vst.msk [vmem:[#allocation2 + $0x108] sm:$0xff] %vm264, 0.0
      %327 = vst.msk [vmem:[#allocation2 + $0x110] sm:$0xff] %vm264, 0.0
      %328 = vst.msk [vmem:[#allocation2 + $0x118] sm:$0x3] %vm294, 0.0
      %329 = vst.msk [vmem:[#allocation2 + $0x120] sm:$0xff] %vm264, 0.0
      %330 = vst.msk [vmem:[#allocation2 + $0x128] sm:$0xff] %vm264, 0.0
      %331 = vst.msk [vmem:[#allocation2 + $0x130] sm:$0x3] %vm294, 0.0
      %332 = vst.msk [vmem:[#allocation2 + $0x138] sm:$0xff] %vm264, 0.0
      %333 = vst.msk [vmem:[#allocation2 + $0x140] sm:$0xff] %vm264, 0.0
      %334 = vst.msk [vmem:[#allocation2 + $0x148] sm:$0x3] %vm294, 0.0
      %335 = vst.msk [vmem:[#allocation2 + $0x150] sm:$0xff] %vm264, 0.0
      %336 = vst.msk [vmem:[#allocation2 + $0x158] sm:$0xff] %vm264, 0.0
      %337 = vst.msk [vmem:[#allocation2 + $0x160] sm:$0x3] %vm294, 0.0
      %338 = vst.msk [vmem:[#allocation2 + $0x168] sm:$0xff] %vm264, 0.0
      %339 = vst.msk [vmem:[#allocation2 + $0x170] sm:$0xff] %vm264, 0.0
      %340 = vst.msk [vmem:[#allocation2 + $0x178] sm:$0x3] %vm294, 0.0
      %341 = vst.msk [vmem:[#allocation2 + $0x180] sm:$0xff] %vm264, 0.0
      %342 = vst.msk [vmem:[#allocation2 + $0x188] sm:$0xff] %vm264, 0.0
      %343 = vst.msk [vmem:[#allocation2 + $0x190] sm:$0x3] %vm294, 0.0
      %344 = vst.msk [vmem:[#allocation2 + $0x198] sm:$0xff] %vm264, 0.0
      %345 = vst.msk [vmem:[#allocation2 + $0x1a0] sm:$0xff] %vm264, 0.0
      %346 = vst.msk [vmem:[#allocation2 + $0x1a8] sm:$0x3] %vm294, 0.0
      %347 = vst.msk [vmem:[#allocation2 + $0x1b0] sm:$0xff] %vm264, 0.0
      %348 = vst.msk [vmem:[#allocation2 + $0x1b8] sm:$0xff] %vm264, 0.0
      %349 = vst.msk [vmem:[#allocation2 + $0x1c0] sm:$0x3] %vm294, 0.0
      %350 = vst.msk [vmem:[#allocation2 + $0x1c8] sm:$0xff] %vm264, 0.0
      %351 = vst.msk [vmem:[#allocation2 + $0x1d0] sm:$0xff] %vm264, 0.0
      %352 = vst.msk [vmem:[#allocation2 + $0x1d8] sm:$0x3] %vm294, 0.0
      %353 = vst.msk [vmem:[#allocation2 + $0x1e0] sm:$0xff] %vm264, 0.0
      %354 = vst.msk [vmem:[#allocation2 + $0x1e8] sm:$0xff] %vm264, 0.0
      %355 = vst.msk [vmem:[#allocation2 + $0x1f0] sm:$0x3] %vm294, 0.0
      %356 = vst.msk [vmem:[#allocation2 + $0x1f8] sm:$0xff] %vm264, 0.0
      %357 = vst.msk [vmem:[#allocation2 + $0x200] sm:$0xff] %vm264, 0.0
      %358 = vst.msk [vmem:[#allocation2 + $0x208] sm:$0x3] %vm294, 0.0
      %359 = vst.msk [vmem:[#allocation2 + $0x210] sm:$0xff] %vm264, 0.0
      %360 = vst.msk [vmem:[#allocation2 + $0x218] sm:$0xff] %vm264, 0.0
      %361 = vst.msk [vmem:[#allocation2 + $0x220] sm:$0x3] %vm294, 0.0
      %362 = vst.msk [vmem:[#allocation2 + $0x228] sm:$0xff] %vm264, 0.0
      %363 = vst.msk [vmem:[#allocation2 + $0x230] sm:$0xff] %vm264, 0.0
      %364 = vst.msk [vmem:[#allocation2 + $0x238] sm:$0x3] %vm294, 0.0
      %365 = vst.msk [vmem:[#allocation2 + $0x240] sm:$0xff] %vm264, 0.0
      %366 = vst.msk [vmem:[#allocation2 + $0x248] sm:$0xff] %vm264, 0.0
      %367 = vst.msk [vmem:[#allocation2 + $0x250] sm:$0x3] %vm294, 0.0
      %368 = vst.msk [vmem:[#allocation2 + $0x258] sm:$0xff] %vm264, 0.0
      %369 = vst.msk [vmem:[#allocation2 + $0x260] sm:$0xff] %vm264, 0.0
      %370 = vst.msk [vmem:[#allocation2 + $0x268] sm:$0x3] %vm294, 0.0
      %371 = vst.msk [vmem:[#allocation2 + $0x270] sm:$0xff] %vm264, 0.0
      %372 = vst.msk [vmem:[#allocation2 + $0x278] sm:$0xff] %vm264, 0.0
      %373 = vst.msk [vmem:[#allocation2 + $0x280] sm:$0x3] %vm294, 0.0
      %374 = vst.msk [vmem:[#allocation2 + $0x288] sm:$0xff] %vm264, 0.0
      %375 = vst.msk [vmem:[#allocation2 + $0x290] sm:$0xff] %vm264, 0.0
      %376 = vst.msk [vmem:[#allocation2 + $0x298] sm:$0x3] %vm294, 0.0
      %377 = vst.msk [vmem:[#allocation2 + $0x2a0] sm:$0xff] %vm264, 0.0
      %378 = vst.msk [vmem:[#allocation2 + $0x2a8] sm:$0xff] %vm264, 0.0
      %379 = vst.msk [vmem:[#allocation2 + $0x2b0] sm:$0x3] %vm294, 0.0
      %380 = vst.msk [vmem:[#allocation2 + $0x2b8] sm:$0xff] %vm264, 0.0
      %381 = vst.msk [vmem:[#allocation2 + $0x2c0] sm:$0xff] %vm264, 0.0
      %382 = vst.msk [vmem:[#allocation2 + $0x2c8] sm:$0x3] %vm294, 0.0
      %383 = vst.msk [vmem:[#allocation2 + $0x2d0] sm:$0xff] %vm264, 0.0
      %384 = vst.msk [vmem:[#allocation2 + $0x2d8] sm:$0xff] %vm264, 0.0
      %385 = vst.msk [vmem:[#allocation2 + $0x2e0] sm:$0x3] %vm294, 0.0
      %386 = vst.msk [vmem:[#allocation2 + $0x2e8] sm:$0xff] %vm264, 0.0
      %387 = vst.msk [vmem:[#allocation2 + $0x2f0] sm:$0xff] %vm264, 0.0
      %388 = vst.msk [vmem:[#allocation2 + $0x2f8] sm:$0x3] %vm294, 0.0
      %389 = vst.msk [vmem:[#allocation2 + $0x300] sm:$0xff] %vm264, 0.0
      %390 = vst.msk [vmem:[#allocation2 + $0x308] sm:$0xff] %vm264, 0.0
      %391 = vst.msk [vmem:[#allocation2 + $0x310] sm:$0x3] %vm294, 0.0
      %392 = vst.msk [vmem:[#allocation2 + $0x318] sm:$0xff] %vm264, 0.0
      %393 = vst.msk [vmem:[#allocation2 + $0x320] sm:$0xff] %vm264, 0.0
      %394 = vst.msk [vmem:[#allocation2 + $0x328] sm:$0x3] %vm294, 0.0
      %395 = vst.msk [vmem:[#allocation2 + $0x330] sm:$0xff] %vm264, 0.0
      %396 = vst.msk [vmem:[#allocation2 + $0x338] sm:$0xff] %vm264, 0.0
      %397 = vst.msk [vmem:[#allocation2 + $0x340] sm:$0x3] %vm294, 0.0
      %398 = vst.msk [vmem:[#allocation2 + $0x348] sm:$0xff] %vm264, 0.0
      %399 = vst.msk [vmem:[#allocation2 + $0x350] sm:$0xff] %vm264, 0.0
      %400 = vst.msk [vmem:[#allocation2 + $0x358] sm:$0x3] %vm294, 0.0
      %v401 = vld [vmem:[%s231 + $0x1] sm:$0xff]
      %v402 = vld [vmem:[%s231 + $0x9] sm:$0xff]
      %v403 = vld [vmem:[%s231 + $0x11] sm:$0xff]
      %v404 = vld [vmem:[%s231 + $0x19] sm:$0xff]
      %v405 = vld [vmem:[%s231 + $0x21] sm:$0xff]
      %v406 = vld [vmem:[%s231 + $0x29] sm:$0xff]
      %v407 = vld [vmem:[%s231 + $0x31] sm:$0xff]
      %v408 = vld [vmem:[%s231 + $0x39] sm:$0xff]
      %v409 = vld [vmem:[%s231 + $0x41] sm:$0xff]
      %v410 = vld [vmem:[%s231 + $0x49] sm:$0xff]
      %v411 = vld [vmem:[%s231 + $0x51] sm:$0xff]
      %v412 = vld [vmem:[%s231 + $0x59] sm:$0xff]
      %v413 = vld [vmem:[%s231 + $0x61] sm:$0xff]
      %v414 = vld [vmem:[%s231 + $0x69] sm:$0xff]
      %v415 = vld [vmem:[%s231 + $0x71] sm:$0xff]
      %v416 = vld [vmem:[%s231 + $0x79] sm:$0xff]
      %v417 = vld [vmem:[%s231 + $0x81] sm:$0xff]
      %v418 = vld [vmem:[%s231 + $0x89] sm:$0xff]
      %v419 = vld [vmem:[%s231 + $0x91] sm:$0xff]
      %v420 = vld [vmem:[%s231 + $0x99] sm:$0xff]
      %v421 = vld [vmem:[%s231 + $0xa1] sm:$0xff]
      %v422 = vld [vmem:[%s231 + $0xa9] sm:$0xff]
      %v423 = vld [vmem:[%s231 + $0xb1] sm:$0xff]
      %v424 = vld [vmem:[%s231 + $0xb9] sm:$0xff]
      %v425 = vld [vmem:[%s231 + $0xc1] sm:$0xff]
      %v426 = vld [vmem:[%s231 + $0xc9] sm:$0xff]
      %v427 = vld [vmem:[%s231 + $0xd1] sm:$0xff]
      %v428 = vld [vmem:[%s231 + $0xd9] sm:$0xff]
      %v429 = vld [vmem:[%s231 + $0xe1] sm:$0xff]
      %v430 = vld [vmem:[%s231 + $0xe9] sm:$0xff]
      %v431 = vld [vmem:[%s231 + $0xf1] sm:$0xff]
      %v432 = vld [vmem:[%s231 + $0xf9] sm:$0xff]
      %v433 = vld [vmem:[%s231 + $0x109] sm:$0xff]
      %v434 = vld [vmem:[%s231 + $0x111] sm:$0xff]
      %v435 = vld [vmem:[%s231 + $0x119] sm:$0xff]
      %v436 = vld [vmem:[%s231 + $0x121] sm:$0xff]
      %v437 = vld [vmem:[%s231 + $0x129] sm:$0xff]
      %v438 = vld [vmem:[%s231 + $0x131] sm:$0xff]
      %v439 = vld [vmem:[%s231 + $0x139] sm:$0xff]
      %v440 = vld [vmem:[%s231 + $0x141] sm:$0xff]
      %v441 = vld [vmem:[%s231 + $0x149] sm:$0xff]
      %v442 = vld [vmem:[%s231 + $0x151] sm:$0xff]
      %v443 = vld [vmem:[%s231 + $0x159] sm:$0xff]
      %v444 = vld [vmem:[%s231 + $0x161] sm:$0xff]
      %v445 = vld [vmem:[%s231 + $0x169] sm:$0xff]
      %v446 = vld [vmem:[%s231 + $0x171] sm:$0xff]
      %v447 = vld [vmem:[%s231 + $0x179] sm:$0xff]
      %v448 = vld [vmem:[%s231 + $0x181] sm:$0xff]
      %v449 = vld [vmem:[%s231 + $0x189] sm:$0xff]
      %v450 = vld [vmem:[%s231 + $0x191] sm:$0xff]
      %v451 = vld [vmem:[%s231 + $0x199] sm:$0xff]
      %v452 = vld [vmem:[%s231 + $0x1a1] sm:$0xff]
      %v453 = vld [vmem:[%s231 + $0x1a9] sm:$0xff]
      %v454 = vld [vmem:[%s231 + $0x1b1] sm:$0xff]
      %v455 = vld [vmem:[%s231 + $0x1b9] sm:$0xff]
      %v456 = vld [vmem:[%s231 + $0x1c1] sm:$0xff]
      %v457 = vld [vmem:[%s231 + $0x1c9] sm:$0xff]
      %v458 = vld [vmem:[%s231 + $0x1d1] sm:$0xff]
      %v459 = vld [vmem:[%s231 + $0x1d9] sm:$0xff]
      %v460 = vld [vmem:[%s231 + $0x1e1] sm:$0xff]
      %v461 = vld [vmem:[%s231 + $0x1e9] sm:$0xff]
      %v462 = vld [vmem:[%s231 + $0x1f1] sm:$0xff]
      %v463 = vld [vmem:[%s231 + $0x1f9] sm:$0xff]
      %v464 = vld [vmem:[%s231 + $0x201] sm:$0xff]
      %s465 = scalar_lea.vmem [#allocation2], 24
      %466 = vst.msk [vmem:[%s465 + $0x1] sm:$0xff] %vm264, %v401
      %467 = vst.msk [vmem:[%s465 + $0x9] sm:$0xff] %vm264, %v402
      %468 = vst.msk [vmem:[%s465 + $0x19] sm:$0xff] %vm264, %v403
      %469 = vst.msk [vmem:[%s465 + $0x21] sm:$0xff] %vm264, %v404
      %470 = vst.msk [vmem:[%s465 + $0x31] sm:$0xff] %vm264, %v405
      %471 = vst.msk [vmem:[%s465 + $0x39] sm:$0xff] %vm264, %v406
      %472 = vst.msk [vmem:[%s465 + $0x49] sm:$0xff] %vm264, %v407
      %473 = vst.msk [vmem:[%s465 + $0x51] sm:$0xff] %vm264, %v408
      %474 = vst.msk [vmem:[%s465 + $0x61] sm:$0xff] %vm264, %v409
      %475 = vst.msk [vmem:[%s465 + $0x69] sm:$0xff] %vm264, %v410
      %476 = vst.msk [vmem:[%s465 + $0x79] sm:$0xff] %vm264, %v411
      %477 = vst.msk [vmem:[%s465 + $0x81] sm:$0xff] %vm264, %v412
      %478 = vst.msk [vmem:[%s465 + $0x91] sm:$0xff] %vm264, %v413
      %479 = vst.msk [vmem:[%s465 + $0x99] sm:$0xff] %vm264, %v414
      %480 = vst.msk [vmem:[%s465 + $0xa9] sm:$0xff] %vm264, %v415
      %481 = vst.msk [vmem:[%s465 + $0xb1] sm:$0xff] %vm264, %v416
      %482 = vst.msk [vmem:[%s465 + $0xc1] sm:$0xff] %vm264, %v417
      %483 = vst.msk [vmem:[%s465 + $0xc9] sm:$0xff] %vm264, %v418
      %484 = vst.msk [vmem:[%s465 + $0xd9] sm:$0xff] %vm264, %v419
      %485 = vst.msk [vmem:[%s465 + $0xe1] sm:$0xff] %vm264, %v420
      %486 = vst.msk [vmem:[%s465 + $0xf1] sm:$0xff] %vm264, %v421
      %487 = vst.msk [vmem:[%s465 + $0xf9] sm:$0xff] %vm264, %v422
      %488 = vst.msk [vmem:[%s465 + $0x109] sm:$0xff] %vm264, %v423
      %489 = vst.msk [vmem:[%s465 + $0x111] sm:$0xff] %vm264, %v424
      %490 = vst.msk [vmem:[%s465 + $0x121] sm:$0xff] %vm264, %v425
      %491 = vst.msk [vmem:[%s465 + $0x129] sm:$0xff] %vm264, %v426
      %492 = vst.msk [vmem:[%s465 + $0x139] sm:$0xff] %vm264, %v427
      %493 = vst.msk [vmem:[%s465 + $0x141] sm:$0xff] %vm264, %v428
      %494 = vst.msk [vmem:[%s465 + $0x151] sm:$0xff] %vm264, %v429
      %495 = vst.msk [vmem:[%s465 + $0x159] sm:$0xff] %vm264, %v430
      %496 = vst.msk [vmem:[%s465 + $0x169] sm:$0xff] %vm264, %v431
      %497 = vst.msk [vmem:[%s465 + $0x171] sm:$0xff] %vm264, %v432
      %498 = vst.msk [vmem:[%s465 + $0x1b1] sm:$0xff] %vm264, %v433
      %499 = vst.msk [vmem:[%s465 + $0x1b9] sm:$0xff] %vm264, %v434
      %500 = vst.msk [vmem:[%s465 + $0x1c9] sm:$0xff] %vm264, %v435
      %501 = vst.msk [vmem:[%s465 + $0x1d1] sm:$0xff] %vm264, %v436
      %502 = vst.msk [vmem:[%s465 + $0x1e1] sm:$0xff] %vm264, %v437
      %503 = vst.msk [vmem:[%s465 + $0x1e9] sm:$0xff] %vm264, %v438
      %504 = vst.msk [vmem:[%s465 + $0x1f9] sm:$0xff] %vm264, %v439
      %505 = vst.msk [vmem:[%s465 + $0x201] sm:$0xff] %vm264, %v440
      %506 = vst.msk [vmem:[%s465 + $0x211] sm:$0xff] %vm264, %v441
      %507 = vst.msk [vmem:[%s465 + $0x219] sm:$0xff] %vm264, %v442
      %508 = vst.msk [vmem:[%s465 + $0x229] sm:$0xff] %vm264, %v443
      %509 = vst.msk [vmem:[%s465 + $0x231] sm:$0xff] %vm264, %v444
      %510 = vst.msk [vmem:[%s465 + $0x241] sm:$0xff] %vm264, %v445
      %511 = vst.msk [vmem:[%s465 + $0x249] sm:$0xff] %vm264, %v446
      %512 = vst.msk [vmem:[%s465 + $0x259] sm:$0xff] %vm264, %v447
      %513 = vst.msk [vmem:[%s465 + $0x261] sm:$0xff] %vm264, %v448
      %514 = vst.msk [vmem:[%s465 + $0x271] sm:$0xff] %vm264, %v449
      %515 = vst.msk [vmem:[%s465 + $0x279] sm:$0xff] %vm264, %v450
      %516 = vst.msk [vmem:[%s465 + $0x289] sm:$0xff] %vm264, %v451
      %517 = vst.msk [vmem:[%s465 + $0x291] sm:$0xff] %vm264, %v452
      %518 = vst.msk [vmem:[%s465 + $0x2a1] sm:$0xff] %vm264, %v453
      %519 = vst.msk [vmem:[%s465 + $0x2a9] sm:$0xff] %vm264, %v454
      %520 = vst.msk [vmem:[%s465 + $0x2b9] sm:$0xff] %vm264, %v455
      %521 = vst.msk [vmem:[%s465 + $0x2c1] sm:$0xff] %vm264, %v456
      %522 = vst.msk [vmem:[%s465 + $0x2d1] sm:$0xff] %vm264, %v457
      %523 = vst.msk [vmem:[%s465 + $0x2d9] sm:$0xff] %vm264, %v458
      %524 = vst.msk [vmem:[%s465 + $0x2e9] sm:$0xff] %vm264, %v459
      %525 = vst.msk [vmem:[%s465 + $0x2f1] sm:$0xff] %vm264, %v460
      %526 = vst.msk [vmem:[%s465 + $0x301] sm:$0xff] %vm264, %v461
      %527 = vst.msk [vmem:[%s465 + $0x309] sm:$0xff] %vm264, %v462
      %528 = vst.msk [vmem:[%s465 + $0x319] sm:$0xff] %vm264, %v463
      %529 = vst.msk [vmem:[%s465 + $0x321] sm:$0xff] %vm264, %v464
      %v530 = vld [vmem:[#allocation2] sm:$0xff]
      %v531 = vld [vmem:[#allocation2 + $0x8] sm:$0xff]
      %v532 = vld [vmem:[#allocation2 + $0x18] sm:$0xff]
      %v533 = vld [vmem:[#allocation2 + $0x20] sm:$0xff]
      %v534 = vld [vmem:[#allocation2 + $0x30] sm:$0xff]
      %v535 = vld [vmem:[#allocation2 + $0x38] sm:$0xff]
      %v536 = vld [vmem:[#allocation2 + $0x48] sm:$0xff]
      %v537 = vld [vmem:[#allocation2 + $0x50] sm:$0xff]
      %v538 = vld [vmem:[#allocation2 + $0x60] sm:$0xff]
      %v539 = vld [vmem:[#allocation2 + $0x68] sm:$0xff]
      %v540 = vld [vmem:[#allocation2 + $0x78] sm:$0xff]
      %v541 = vld [vmem:[#allocation2 + $0x80] sm:$0xff]
      %v542 = vld [vmem:[#allocation2 + $0x90] sm:$0xff]
      %v543 = vld [vmem:[#allocation2 + $0x98] sm:$0xff]
      %v544 = vld [vmem:[#allocation2 + $0xa8] sm:$0xff]
      %v545 = vld [vmem:[#allocation2 + $0xb0] sm:$0xff]
      %v546 = vld [vmem:[#allocation2 + $0xc0] sm:$0xff]
      %v547 = vld [vmem:[#allocation2 + $0xc8] sm:$0xff]
      %v548 = vld [vmem:[#allocation2 + $0xd8] sm:$0xff]
      %v549 = vld [vmem:[#allocation2 + $0xe0] sm:$0xff]
      %v550 = vld [vmem:[#allocation2 + $0xf0] sm:$0xff]
      %v551 = vld [vmem:[#allocation2 + $0xf8] sm:$0xff]
      %v552 = vld [vmem:[#allocation2 + $0x108] sm:$0xff]
      %v553 = vld [vmem:[#allocation2 + $0x110] sm:$0xff]
      %v554 = vld [vmem:[#allocation2 + $0x120] sm:$0xff]
      %v555 = vld [vmem:[#allocation2 + $0x128] sm:$0xff]
      %v556 = vld [vmem:[#allocation2 + $0x138] sm:$0xff]
      %v557 = vld [vmem:[#allocation2 + $0x140] sm:$0xff]
      %v558 = vld [vmem:[#allocation2 + $0x150] sm:$0xff]
      %v559 = vld [vmem:[#allocation2 + $0x158] sm:$0xff]
      %v560 = vld [vmem:[#allocation2 + $0x168] sm:$0xff]
      %v561 = vld [vmem:[#allocation2 + $0x170] sm:$0xff]
      %v562 = vld [vmem:[#allocation2 + $0x1b0] sm:$0xff]
      %v563 = vld [vmem:[#allocation2 + $0x1b8] sm:$0xff]
      %v564 = vld [vmem:[#allocation2 + $0x1c8] sm:$0xff]
      %v565 = vld [vmem:[#allocation2 + $0x1d0] sm:$0xff]
      %v566 = vld [vmem:[#allocation2 + $0x1e0] sm:$0xff]
      %v567 = vld [vmem:[#allocation2 + $0x1e8] sm:$0xff]
      %v568 = vld [vmem:[#allocation2 + $0x1f8] sm:$0xff]
      %v569 = vld [vmem:[#allocation2 + $0x200] sm:$0xff]
      %v570 = vld [vmem:[#allocation2 + $0x210] sm:$0xff]
      %v571 = vld [vmem:[#allocation2 + $0x218] sm:$0xff]
      %v572 = vld [vmem:[#allocation2 + $0x228] sm:$0xff]
      %v573 = vld [vmem:[#allocation2 + $0x230] sm:$0xff]
      %v574 = vld [vmem:[#allocation2 + $0x240] sm:$0xff]
      %v575 = vld [vmem:[#allocation2 + $0x248] sm:$0xff]
      %v576 = vld [vmem:[#allocation2 + $0x258] sm:$0xff]
      %v577 = vld [vmem:[#allocation2 + $0x260] sm:$0xff]
      %v578 = vld [vmem:[#allocation2 + $0x270] sm:$0xff]
      %v579 = vld [vmem:[#allocation2 + $0x278] sm:$0xff]
      %v580 = vld [vmem:[#allocation2 + $0x288] sm:$0xff]
      %v581 = vld [vmem:[#allocation2 + $0x290] sm:$0xff]
      %v582 = vld [vmem:[#allocation2 + $0x2a0] sm:$0xff]
      %v583 = vld [vmem:[#allocation2 + $0x2a8] sm:$0xff]
      %v584 = vld [vmem:[#allocation2 + $0x2b8] sm:$0xff]
      %v585 = vld [vmem:[#allocation2 + $0x2c0] sm:$0xff]
      %v586 = vld [vmem:[#allocation2 + $0x2d0] sm:$0xff]
      %v587 = vld [vmem:[#allocation2 + $0x2d8] sm:$0xff]
      %v588 = vld [vmem:[#allocation2 + $0x2e8] sm:$0xff]
      %v589 = vld [vmem:[#allocation2 + $0x2f0] sm:$0xff]
      %v590 = vld [vmem:[#allocation2 + $0x300] sm:$0xff]
      %v591 = vld [vmem:[#allocation2 + $0x308] sm:$0xff]
      %v592 = vld [vmem:[#allocation2 + $0x318] sm:$0xff]
      %v593 = vld [vmem:[#allocation2 + $0x320] sm:$0xff]
      %v594 = vld [vmem:[%s1] sm:$0xff]
      %v595 = vld [vmem:[%s1 + $0x8] sm:$0xff]
      %v596 = vld [vmem:[%s1 + $0x10] sm:$0xff]
      %v597 = vld [vmem:[%s1 + $0x18] sm:$0xff]
      %v598 = vld [vmem:[%s1 + $0x20] sm:$0xff]
      %v599 = vld [vmem:[%s1 + $0x28] sm:$0xff]
      %v600 = vld [vmem:[%s1 + $0x30] sm:$0xff]
      %v601 = vld [vmem:[%s1 + $0x38] sm:$0xff]
      %v602 = vld [vmem:[#allocation2 + $0x1] sm:$0xff]
      %v603 = vld [vmem:[#allocation2 + $0x9] sm:$0xff]
      %v604 = vld [vmem:[#allocation2 + $0x19] sm:$0xff]
      %v605 = vld [vmem:[#allocation2 + $0x21] sm:$0xff]
      %v606 = vld [vmem:[#allocation2 + $0x31] sm:$0xff]
      %v607 = vld [vmem:[#allocation2 + $0x39] sm:$0xff]
      %v608 = vld [vmem:[#allocation2 + $0x49] sm:$0xff]
      %v609 = vld [vmem:[#allocation2 + $0x51] sm:$0xff]
      %v610 = vld [vmem:[#allocation2 + $0x61] sm:$0xff]
      %v611 = vld [vmem:[#allocation2 + $0x69] sm:$0xff]
      %v612 = vld [vmem:[#allocation2 + $0x79] sm:$0xff]
      %v613 = vld [vmem:[#allocation2 + $0x81] sm:$0xff]
      %v614 = vld [vmem:[#allocation2 + $0x91] sm:$0xff]
      %v615 = vld [vmem:[#allocation2 + $0x99] sm:$0xff]
      %v616 = vld [vmem:[#allocation2 + $0xa9] sm:$0xff]
      %v617 = vld [vmem:[#allocation2 + $0xb1] sm:$0xff]
      %v618 = vld [vmem:[#allocation2 + $0xc1] sm:$0xff]
      %v619 = vld [vmem:[#allocation2 + $0xc9] sm:$0xff]
      %v620 = vld [vmem:[#allocation2 + $0xd9] sm:$0xff]
      %v621 = vld [vmem:[#allocation2 + $0xe1] sm:$0xff]
      %v622 = vld [vmem:[#allocation2 + $0xf1] sm:$0xff]
      %v623 = vld [vmem:[#allocation2 + $0xf9] sm:$0xff]
      %v624 = vld [vmem:[#allocation2 + $0x109] sm:$0xff]
      %v625 = vld [vmem:[#allocation2 + $0x111] sm:$0xff]
      %v626 = vld [vmem:[#allocation2 + $0x121] sm:$0xff]
      %v627 = vld [vmem:[#allocation2 + $0x129] sm:$0xff]
      %v628 = vld [vmem:[#allocation2 + $0x139] sm:$0xff]
      %v629 = vld [vmem:[#allocation2 + $0x141] sm:$0xff]
      %v630 = vld [vmem:[#allocation2 + $0x151] sm:$0xff]
      %v631 = vld [vmem:[#allocation2 + $0x159] sm:$0xff]
      %v632 = vld [vmem:[#allocation2 + $0x169] sm:$0xff]
      %v633 = vld [vmem:[#allocation2 + $0x171] sm:$0xff]
      %v634 = vld [vmem:[#allocation2 + $0x1b1] sm:$0xff]
      %v635 = vld [vmem:[#allocation2 + $0x1b9] sm:$0xff]
      %v636 = vld [vmem:[#allocation2 + $0x1c9] sm:$0xff]
      %v637 = vld [vmem:[#allocation2 + $0x1d1] sm:$0xff]
      %v638 = vld [vmem:[#allocation2 + $0x1e1] sm:$0xff]
      %v639 = vld [vmem:[#allocation2 + $0x1e9] sm:$0xff]
      %v640 = vld [vmem:[#allocation2 + $0x1f9] sm:$0xff]
      %v641 = vld [vmem:[#allocation2 + $0x201] sm:$0xff]
      %v642 = vld [vmem:[#allocation2 + $0x211] sm:$0xff]
      %v643 = vld [vmem:[#allocation2 + $0x219] sm:$0xff]
      %v644 = vld [vmem:[#allocation2 + $0x229] sm:$0xff]
      %v645 = vld [vmem:[#allocation2 + $0x231] sm:$0xff]
      %v646 = vld [vmem:[#allocation2 + $0x241] sm:$0xff]
      %v647 = vld [vmem:[#allocation2 + $0x249] sm:$0xff]
      %v648 = vld [vmem:[#allocation2 + $0x259] sm:$0xff]
      %v649 = vld [vmem:[#allocation2 + $0x261] sm:$0xff]
      %v650 = vld [vmem:[#allocation2 + $0x271] sm:$0xff]
      %v651 = vld [vmem:[#allocation2 + $0x279] sm:$0xff]
      %v652 = vld [vmem:[#allocation2 + $0x289] sm:$0xff]
      %v653 = vld [vmem:[#allocation2 + $0x291] sm:$0xff]
      %v654 = vld [vmem:[#allocation2 + $0x2a1] sm:$0xff]
      %v655 = vld [vmem:[#allocation2 + $0x2a9] sm:$0xff]
      %v656 = vld [vmem:[#allocation2 + $0x2b9] sm:$0xff]
      %v657 = vld [vmem:[#allocation2 + $0x2c1] sm:$0xff]
      %v658 = vld [vmem:[#allocation2 + $0x2d1] sm:$0xff]
      %v659 = vld [vmem:[#allocation2 + $0x2d9] sm:$0xff]
      %v660 = vld [vmem:[#allocation2 + $0x2e9] sm:$0xff]
      %v661 = vld [vmem:[#allocation2 + $0x2f1] sm:$0xff]
      %v662 = vld [vmem:[#allocation2 + $0x301] sm:$0xff]
      %v663 = vld [vmem:[#allocation2 + $0x309] sm:$0xff]
      %v664 = vld [vmem:[#allocation2 + $0x319] sm:$0xff]
      %v665 = vld [vmem:[#allocation2 + $0x321] sm:$0xff]
      %s666 = scalar_lea.vmem %s1, 64
      %v667 = vld [vmem:[%s666] sm:$0xff]
      %v668 = vld [vmem:[%s666 + $0x8] sm:$0xff]
      %v669 = vld [vmem:[%s666 + $0x10] sm:$0xff]
      %v670 = vld [vmem:[%s666 + $0x18] sm:$0xff]
      %v671 = vld [vmem:[%s666 + $0x20] sm:$0xff]
      %v672 = vld [vmem:[%s666 + $0x28] sm:$0xff]
      %v673 = vld [vmem:[%s666 + $0x30] sm:$0xff]
      %v674 = vld [vmem:[%s666 + $0x38] sm:$0xff]
      %v676 = vsel %vm264, %v602, 0
      %v679 = vsel %vm264, %v603, 0
      %v682 = vsel %vm264, %v604, 0
      %v685 = vsel %vm264, %v605, 0
      %v688 = vsel %vm264, %v606, 0
      %v691 = vsel %vm264, %v607, 0
      %v694 = vsel %vm264, %v608, 0
      %v697 = vsel %vm264, %v609, 0
      %v700 = vsel %vm264, %v610, 0
      %v703 = vsel %vm264, %v611, 0
      %v706 = vsel %vm264, %v612, 0
      %v709 = vsel %vm264, %v613, 0
      %v712 = vsel %vm264, %v614, 0
      %v715 = vsel %vm264, %v615, 0
      %v718 = vsel %vm264, %v616, 0
      %v721 = vsel %vm264, %v617, 0
      %v724 = vsel %vm264, %v618, 0
      %v727 = vsel %vm264, %v619, 0
      %v730 = vsel %vm264, %v620, 0
      %v733 = vsel %vm264, %v621, 0
      %v736 = vsel %vm264, %v622, 0
      %v739 = vsel %vm264, %v623, 0
      %v742 = vsel %vm264, %v624, 0
      %v745 = vsel %vm264, %v625, 0
      %v748 = vsel %vm264, %v626, 0
      %v751 = vsel %vm264, %v627, 0
      %v754 = vsel %vm264, %v628, 0
      %v757 = vsel %vm264, %v629, 0
      %v760 = vsel %vm264, %v630, 0
      %v763 = vsel %vm264, %v631, 0
      %v766 = vsel %vm264, %v632, 0
      %v769 = vsel %vm264, %v633, 0
      %v772 = vsel %vm264, %v634, 0
      %v775 = vsel %vm264, %v635, 0
      %v778 = vsel %vm264, %v636, 0
      %v781 = vsel %vm264, %v637, 0
      %v784 = vsel %vm264, %v638, 0
      %v787 = vsel %vm264, %v639, 0
      %v790 = vsel %vm264, %v640, 0
      %v793 = vsel %vm264, %v641, 0
      %v796 = vsel %vm264, %v642, 0
      %v799 = vsel %vm264, %v643, 0
      %v802 = vsel %vm264, %v644, 0
      %v805 = vsel %vm264, %v645, 0
      %v808 = vsel %vm264, %v646, 0
      %v811 = vsel %vm264, %v647, 0
      %v814 = vsel %vm264, %v648, 0
      %v817 = vsel %vm264, %v649, 0
      %v820 = vsel %vm264, %v650, 0
      %v823 = vsel %vm264, %v651, 0
      %v826 = vsel %vm264, %v652, 0
      %v829 = vsel %vm264, %v653, 0
      %v832 = vsel %vm264, %v654, 0
      %v835 = vsel %vm264, %v655, 0
      %v838 = vsel %vm264, %v656, 0
      %v841 = vsel %vm264, %v657, 0
      %v844 = vsel %vm264, %v658, 0
      %v847 = vsel %vm264, %v659, 0
      %v850 = vsel %vm264, %v660, 0
      %v853 = vsel %vm264, %v661, 0
      %v856 = vsel %vm264, %v662, 0
      %v859 = vsel %vm264, %v663, 0
      %v862 = vsel %vm264, %v664, 0
      %v865 = vsel %vm264, %v665, 0
      %867 = vmatpush.msra.mxu0 0.0
      %868 = vmatpush.msra.mxu0 0.0
      %869 = vmatpush.msra.mxu0 0.0
      %870 = vmatpush.msra.mxu0 0.0
      %871 = vmatpush.msra.mxu0 0.0
      %872 = vmatpush.msra.mxu0 0.0
      %873 = vmatpush.msra.mxu0 0.0
      %874 = vmatpush.msra.mxu0 0.0
      %875 = vmatpush.msra.mxu0 %v674
      %876 = vmatpush.msra.mxu0 %v673
      %877 = vmatpush.msra.mxu0 %v672
      %878 = vmatpush.msra.mxu0 %v671
      %879 = vmatpush.msra.mxu0 %v670
      %880 = vmatpush.msra.mxu0 %v669
      %881 = vmatpush.msra.mxu0 %v668
      %882 = vmatpush.msra.mxu0 %v667
      %883 = vmatmul.f32.gmra.mxu0 %v676
      %v884 = vpop.f32.mrf.mxu0
      %v885 = vadd.f32 0.0, %v884
      %886 = vmatmul.f32.gmra.mxu0 %v679
      %v887 = vpop.f32.mrf.mxu0
      %v888 = vadd.f32 0.0, %v887
      %889 = vmatmul.f32.gmra.mxu0 %v682
      %v890 = vpop.f32.mrf.mxu0
      %v891 = vadd.f32 0.0, %v890
      %892 = vmatmul.f32.gmra.mxu0 %v685
      %v893 = vpop.f32.mrf.mxu0
      %v894 = vadd.f32 0.0, %v893
      %895 = vmatmul.f32.gmra.mxu0 %v688
      %v896 = vpop.f32.mrf.mxu0
      %v897 = vadd.f32 0.0, %v896
      %898 = vmatmul.f32.gmra.mxu0 %v691
      %v899 = vpop.f32.mrf.mxu0
      %v900 = vadd.f32 0.0, %v899
      %901 = vmatmul.f32.gmra.mxu0 %v694
      %v902 = vpop.f32.mrf.mxu0
      %v903 = vadd.f32 0.0, %v902
      %904 = vmatmul.f32.gmra.mxu0 %v697
      %v905 = vpop.f32.mrf.mxu0
      %v906 = vadd.f32 0.0, %v905
      %907 = vmatmul.f32.gmra.mxu0 %v700
      %v908 = vpop.f32.mrf.mxu0
      %v909 = vadd.f32 0.0, %v908
      %910 = vmatmul.f32.gmra.mxu0 %v703
      %v911 = vpop.f32.mrf.mxu0
      %v912 = vadd.f32 0.0, %v911
      %913 = vmatmul.f32.gmra.mxu0 %v706
      %v914 = vpop.f32.mrf.mxu0
      %v915 = vadd.f32 0.0, %v914
      %916 = vmatmul.f32.gmra.mxu0 %v709
      %v917 = vpop.f32.mrf.mxu0
      %v918 = vadd.f32 0.0, %v917
      %919 = vmatmul.f32.gmra.mxu0 %v712
      %v920 = vpop.f32.mrf.mxu0
      %v921 = vadd.f32 0.0, %v920
      %922 = vmatmul.f32.gmra.mxu0 %v715
      %v923 = vpop.f32.mrf.mxu0
      %v924 = vadd.f32 0.0, %v923
      %925 = vmatmul.f32.gmra.mxu0 %v718
      %v926 = vpop.f32.mrf.mxu0
      %v927 = vadd.f32 0.0, %v926
      %928 = vmatmul.f32.gmra.mxu0 %v721
      %v929 = vpop.f32.mrf.mxu0
      %v930 = vadd.f32 0.0, %v929
      %931 = vmatmul.f32.gmra.mxu0 %v724
      %v932 = vpop.f32.mrf.mxu0
      %v933 = vadd.f32 0.0, %v932
      %934 = vmatmul.f32.gmra.mxu0 %v727
      %v935 = vpop.f32.mrf.mxu0
      %v936 = vadd.f32 0.0, %v935
      %937 = vmatmul.f32.gmra.mxu0 %v730
      %v938 = vpop.f32.mrf.mxu0
      %v939 = vadd.f32 0.0, %v938
      %940 = vmatmul.f32.gmra.mxu0 %v733
      %v941 = vpop.f32.mrf.mxu0
      %v942 = vadd.f32 0.0, %v941
      %943 = vmatmul.f32.gmra.mxu0 %v736
      %v944 = vpop.f32.mrf.mxu0
      %v945 = vadd.f32 0.0, %v944
      %946 = vmatmul.f32.gmra.mxu0 %v739
      %v947 = vpop.f32.mrf.mxu0
      %v948 = vadd.f32 0.0, %v947
      %949 = vmatmul.f32.gmra.mxu0 %v742
      %v950 = vpop.f32.mrf.mxu0
      %v951 = vadd.f32 0.0, %v950
      %952 = vmatmul.f32.gmra.mxu0 %v745
      %v953 = vpop.f32.mrf.mxu0
      %v954 = vadd.f32 0.0, %v953
      %955 = vmatmul.f32.gmra.mxu0 %v748
      %v956 = vpop.f32.mrf.mxu0
      %v957 = vadd.f32 0.0, %v956
      %958 = vmatmul.f32.gmra.mxu0 %v751
      %v959 = vpop.f32.mrf.mxu0
      %v960 = vadd.f32 0.0, %v959
      %961 = vmatmul.f32.gmra.mxu0 %v754
      %v962 = vpop.f32.mrf.mxu0
      %v963 = vadd.f32 0.0, %v962
      %964 = vmatmul.f32.gmra.mxu0 %v757
      %v965 = vpop.f32.mrf.mxu0
      %v966 = vadd.f32 0.0, %v965
      %967 = vmatmul.f32.gmra.mxu0 %v760
      %v968 = vpop.f32.mrf.mxu0
      %v969 = vadd.f32 0.0, %v968
      %970 = vmatmul.f32.gmra.mxu0 %v763
      %v971 = vpop.f32.mrf.mxu0
      %v972 = vadd.f32 0.0, %v971
      %973 = vmatmul.f32.gmra.mxu0 %v766
      %v974 = vpop.f32.mrf.mxu0
      %v975 = vadd.f32 0.0, %v974
      %976 = vmatmul.f32.gmra.mxu0 %v769
      %v977 = vpop.f32.mrf.mxu0
      %v978 = vadd.f32 0.0, %v977
      %979 = vmatmul.f32.gmra.mxu0 %v772
      %v980 = vpop.f32.mrf.mxu0
      %v981 = vadd.f32 0.0, %v980
      %982 = vmatmul.f32.gmra.mxu0 %v775
      %v983 = vpop.f32.mrf.mxu0
      %v984 = vadd.f32 0.0, %v983
      %985 = vmatmul.f32.gmra.mxu0 %v778
      %v986 = vpop.f32.mrf.mxu0
      %v987 = vadd.f32 0.0, %v986
      %988 = vmatmul.f32.gmra.mxu0 %v781
      %v989 = vpop.f32.mrf.mxu0
      %v990 = vadd.f32 0.0, %v989
      %991 = vmatmul.f32.gmra.mxu0 %v784
      %v992 = vpop.f32.mrf.mxu0
      %v993 = vadd.f32 0.0, %v992
      %994 = vmatmul.f32.gmra.mxu0 %v787
      %v995 = vpop.f32.mrf.mxu0
      %v996 = vadd.f32 0.0, %v995
      %997 = vmatmul.f32.gmra.mxu0 %v790
      %v998 = vpop.f32.mrf.mxu0
      %v999 = vadd.f32 0.0, %v998
      %1000 = vmatmul.f32.gmra.mxu0 %v793
      %v1001 = vpop.f32.mrf.mxu0
      %v1002 = vadd.f32 0.0, %v1001
      %1003 = vmatmul.f32.gmra.mxu0 %v796
      %v1004 = vpop.f32.mrf.mxu0
      %v1005 = vadd.f32 0.0, %v1004
      %1006 = vmatmul.f32.gmra.mxu0 %v799
      %v1007 = vpop.f32.mrf.mxu0
      %v1008 = vadd.f32 0.0, %v1007
      %1009 = vmatmul.f32.gmra.mxu0 %v802
      %v1010 = vpop.f32.mrf.mxu0
      %v1011 = vadd.f32 0.0, %v1010
      %1012 = vmatmul.f32.gmra.mxu0 %v805
      %v1013 = vpop.f32.mrf.mxu0
      %v1014 = vadd.f32 0.0, %v1013
      %1015 = vmatmul.f32.gmra.mxu0 %v808
      %v1016 = vpop.f32.mrf.mxu0
      %v1017 = vadd.f32 0.0, %v1016
      %1018 = vmatmul.f32.gmra.mxu0 %v811
      %v1019 = vpop.f32.mrf.mxu0
      %v1020 = vadd.f32 0.0, %v1019
      %1021 = vmatmul.f32.gmra.mxu0 %v814
      %v1022 = vpop.f32.mrf.mxu0
      %v1023 = vadd.f32 0.0, %v1022
      %1024 = vmatmul.f32.gmra.mxu0 %v817
      %v1025 = vpop.f32.mrf.mxu0
      %v1026 = vadd.f32 0.0, %v1025
      %1027 = vmatmul.f32.gmra.mxu0 %v820
      %v1028 = vpop.f32.mrf.mxu0
      %v1029 = vadd.f32 0.0, %v1028
      %1030 = vmatmul.f32.gmra.mxu0 %v823
      %v1031 = vpop.f32.mrf.mxu0
      %v1032 = vadd.f32 0.0, %v1031
      %1033 = vmatmul.f32.gmra.mxu0 %v826
      %v1034 = vpop.f32.mrf.mxu0
      %v1035 = vadd.f32 0.0, %v1034
      %1036 = vmatmul.f32.gmra.mxu0 %v829
      %v1037 = vpop.f32.mrf.mxu0
      %v1038 = vadd.f32 0.0, %v1037
      %1039 = vmatmul.f32.gmra.mxu0 %v832
      %v1040 = vpop.f32.mrf.mxu0
      %v1041 = vadd.f32 0.0, %v1040
      %1042 = vmatmul.f32.gmra.mxu0 %v835
      %v1043 = vpop.f32.mrf.mxu0
      %v1044 = vadd.f32 0.0, %v1043
      %1045 = vmatmul.f32.gmra.mxu0 %v838
      %v1046 = vpop.f32.mrf.mxu0
      %v1047 = vadd.f32 0.0, %v1046
      %1048 = vmatmul.f32.gmra.mxu0 %v841
      %v1049 = vpop.f32.mrf.mxu0
      %v1050 = vadd.f32 0.0, %v1049
      %1051 = vmatmul.f32.gmra.mxu0 %v844
      %v1052 = vpop.f32.mrf.mxu0
      %v1053 = vadd.f32 0.0, %v1052
      %1054 = vmatmul.f32.gmra.mxu0 %v847
      %v1055 = vpop.f32.mrf.mxu0
      %v1056 = vadd.f32 0.0, %v1055
      %1057 = vmatmul.f32.gmra.mxu0 %v850
      %v1058 = vpop.f32.mrf.mxu0
      %v1059 = vadd.f32 0.0, %v1058
      %1060 = vmatmul.f32.gmra.mxu0 %v853
      %v1061 = vpop.f32.mrf.mxu0
      %v1062 = vadd.f32 0.0, %v1061
      %1063 = vmatmul.f32.gmra.mxu0 %v856
      %v1064 = vpop.f32.mrf.mxu0
      %v1065 = vadd.f32 0.0, %v1064
      %1066 = vmatmul.f32.gmra.mxu0 %v859
      %v1067 = vpop.f32.mrf.mxu0
      %v1068 = vadd.f32 0.0, %v1067
      %1069 = vmatmul.f32.gmra.mxu0 %v862
      %v1070 = vpop.f32.mrf.mxu0
      %v1071 = vadd.f32 0.0, %v1070
      %1072 = vmatmul.f32.gmra.mxu0 %v865
      %v1073 = vpop.f32.mrf.mxu0
      %v1074 = vadd.f32 0.0, %v1073
      %1075 = vdwg.mxu0
      %v1077 = vsel %vm264, %v530, 0
      %v1080 = vsel %vm264, %v531, 0
      %v1083 = vsel %vm264, %v532, 0
      %v1086 = vsel %vm264, %v533, 0
      %v1089 = vsel %vm264, %v534, 0
      %v1092 = vsel %vm264, %v535, 0
      %v1095 = vsel %vm264, %v536, 0
      %v1098 = vsel %vm264, %v537, 0
      %v1101 = vsel %vm264, %v538, 0
      %v1104 = vsel %vm264, %v539, 0
      %v1107 = vsel %vm264, %v540, 0
      %v1110 = vsel %vm264, %v541, 0
      %v1113 = vsel %vm264, %v542, 0
      %v1116 = vsel %vm264, %v543, 0
      %v1119 = vsel %vm264, %v544, 0
      %v1122 = vsel %vm264, %v545, 0
      %v1125 = vsel %vm264, %v546, 0
      %v1128 = vsel %vm264, %v547, 0
      %v1131 = vsel %vm264, %v548, 0
      %v1134 = vsel %vm264, %v549, 0
      %v1137 = vsel %vm264, %v550, 0
      %v1140 = vsel %vm264, %v551, 0
      %v1143 = vsel %vm264, %v552, 0
      %v1146 = vsel %vm264, %v553, 0
      %v1149 = vsel %vm264, %v554, 0
      %v1152 = vsel %vm264, %v555, 0
      %v1155 = vsel %vm264, %v556, 0
      %v1158 = vsel %vm264, %v557, 0
      %v1161 = vsel %vm264, %v558, 0
      %v1164 = vsel %vm264, %v559, 0
      %v1167 = vsel %vm264, %v560, 0
      %v1170 = vsel %vm264, %v561, 0
      %v1173 = vsel %vm264, %v562, 0
      %v1176 = vsel %vm264, %v563, 0
      %v1179 = vsel %vm264, %v564, 0
      %v1182 = vsel %vm264, %v565, 0
      %v1185 = vsel %vm264, %v566, 0
      %v1188 = vsel %vm264, %v567, 0
      %v1191 = vsel %vm264, %v568, 0
      %v1194 = vsel %vm264, %v569, 0
      %v1197 = vsel %vm264, %v570, 0
      %v1200 = vsel %vm264, %v571, 0
      %v1203 = vsel %vm264, %v572, 0
      %v1206 = vsel %vm264, %v573, 0
      %v1209 = vsel %vm264, %v574, 0
      %v1212 = vsel %vm264, %v575, 0
      %v1215 = vsel %vm264, %v576, 0
      %v1218 = vsel %vm264, %v577, 0
      %v1221 = vsel %vm264, %v578, 0
      %v1224 = vsel %vm264, %v579, 0
      %v1227 = vsel %vm264, %v580, 0
      %v1230 = vsel %vm264, %v581, 0
      %v1233 = vsel %vm264, %v582, 0
      %v1236 = vsel %vm264, %v583, 0
      %v1239 = vsel %vm264, %v584, 0
      %v1242 = vsel %vm264, %v585, 0
      %v1245 = vsel %vm264, %v586, 0
      %v1248 = vsel %vm264, %v587, 0
      %v1251 = vsel %vm264, %v588, 0
      %v1254 = vsel %vm264, %v589, 0
      %v1257 = vsel %vm264, %v590, 0
      %v1260 = vsel %vm264, %v591, 0
      %v1263 = vsel %vm264, %v592, 0
      %v1266 = vsel %vm264, %v593, 0
      %1268 = vmatpush.msra.mxu0 0.0
      %1269 = vmatpush.msra.mxu0 0.0
      %1270 = vmatpush.msra.mxu0 0.0
      %1271 = vmatpush.msra.mxu0 0.0
      %1272 = vmatpush.msra.mxu0 0.0
      %1273 = vmatpush.msra.mxu0 0.0
      %1274 = vmatpush.msra.mxu0 0.0
      %1275 = vmatpush.msra.mxu0 0.0
      %1276 = vmatpush.msra.mxu0 %v601
      %1277 = vmatpush.msra.mxu0 %v600
      %1278 = vmatpush.msra.mxu0 %v599
      %1279 = vmatpush.msra.mxu0 %v598
      %1280 = vmatpush.msra.mxu0 %v597
      %1281 = vmatpush.msra.mxu0 %v596
      %1282 = vmatpush.msra.mxu0 %v595
      %1283 = vmatpush.msra.mxu0 %v594
      %1284 = vmatmul.f32.gmra.mxu0 %v1077
      %v1285 = vpop.f32.mrf.mxu0
      %v1286 = vadd.f32 %v885, %v1285
      %1287 = vmatmul.f32.gmra.mxu0 %v1080
      %v1288 = vpop.f32.mrf.mxu0
      %v1289 = vadd.f32 %v888, %v1288
      %1290 = vmatmul.f32.gmra.mxu0 %v1083
      %v1291 = vpop.f32.mrf.mxu0
      %v1292 = vadd.f32 %v891, %v1291
      %1293 = vmatmul.f32.gmra.mxu0 %v1086
      %v1294 = vpop.f32.mrf.mxu0
      %v1295 = vadd.f32 %v894, %v1294
      %1296 = vmatmul.f32.gmra.mxu0 %v1089
      %v1297 = vpop.f32.mrf.mxu0
      %v1298 = vadd.f32 %v897, %v1297
      %1299 = vmatmul.f32.gmra.mxu0 %v1092
      %v1300 = vpop.f32.mrf.mxu0
      %v1301 = vadd.f32 %v900, %v1300
      %1302 = vmatmul.f32.gmra.mxu0 %v1095
      %v1303 = vpop.f32.mrf.mxu0
      %v1304 = vadd.f32 %v903, %v1303
      %1305 = vmatmul.f32.gmra.mxu0 %v1098
      %v1306 = vpop.f32.mrf.mxu0
      %v1307 = vadd.f32 %v906, %v1306
      %1308 = vmatmul.f32.gmra.mxu0 %v1101
      %v1309 = vpop.f32.mrf.mxu0
      %v1310 = vadd.f32 %v909, %v1309
      %1311 = vmatmul.f32.gmra.mxu0 %v1104
      %v1312 = vpop.f32.mrf.mxu0
      %v1313 = vadd.f32 %v912, %v1312
      %1314 = vmatmul.f32.gmra.mxu0 %v1107
      %v1315 = vpop.f32.mrf.mxu0
      %v1316 = vadd.f32 %v915, %v1315
      %1317 = vmatmul.f32.gmra.mxu0 %v1110
      %v1318 = vpop.f32.mrf.mxu0
      %v1319 = vadd.f32 %v918, %v1318
      %1320 = vmatmul.f32.gmra.mxu0 %v1113
      %v1321 = vpop.f32.mrf.mxu0
      %v1322 = vadd.f32 %v921, %v1321
      %1323 = vmatmul.f32.gmra.mxu0 %v1116
      %v1324 = vpop.f32.mrf.mxu0
      %v1325 = vadd.f32 %v924, %v1324
      %1326 = vmatmul.f32.gmra.mxu0 %v1119
      %v1327 = vpop.f32.mrf.mxu0
      %v1328 = vadd.f32 %v927, %v1327
      %1329 = vmatmul.f32.gmra.mxu0 %v1122
      %v1330 = vpop.f32.mrf.mxu0
      %v1331 = vadd.f32 %v930, %v1330
      %1332 = vmatmul.f32.gmra.mxu0 %v1125
      %v1333 = vpop.f32.mrf.mxu0
      %v1334 = vadd.f32 %v933, %v1333
      %1335 = vmatmul.f32.gmra.mxu0 %v1128
      %v1336 = vpop.f32.mrf.mxu0
      %v1337 = vadd.f32 %v936, %v1336
      %1338 = vmatmul.f32.gmra.mxu0 %v1131
      %v1339 = vpop.f32.mrf.mxu0
      %v1340 = vadd.f32 %v939, %v1339
      %1341 = vmatmul.f32.gmra.mxu0 %v1134
      %v1342 = vpop.f32.mrf.mxu0
      %v1343 = vadd.f32 %v942, %v1342
      %1344 = vmatmul.f32.gmra.mxu0 %v1137
      %v1345 = vpop.f32.mrf.mxu0
      %v1346 = vadd.f32 %v945, %v1345
      %1347 = vmatmul.f32.gmra.mxu0 %v1140
      %v1348 = vpop.f32.mrf.mxu0
      %v1349 = vadd.f32 %v948, %v1348
      %1350 = vmatmul.f32.gmra.mxu0 %v1143
      %v1351 = vpop.f32.mrf.mxu0
      %v1352 = vadd.f32 %v951, %v1351
      %1353 = vmatmul.f32.gmra.mxu0 %v1146
      %v1354 = vpop.f32.mrf.mxu0
      %v1355 = vadd.f32 %v954, %v1354
      %1356 = vmatmul.f32.gmra.mxu0 %v1149
      %v1357 = vpop.f32.mrf.mxu0
      %v1358 = vadd.f32 %v957, %v1357
      %1359 = vmatmul.f32.gmra.mxu0 %v1152
      %v1360 = vpop.f32.mrf.mxu0
      %v1361 = vadd.f32 %v960, %v1360
      %1362 = vmatmul.f32.gmra.mxu0 %v1155
      %v1363 = vpop.f32.mrf.mxu0
      %v1364 = vadd.f32 %v963, %v1363
      %1365 = vmatmul.f32.gmra.mxu0 %v1158
      %v1366 = vpop.f32.mrf.mxu0
      %v1367 = vadd.f32 %v966, %v1366
      %1368 = vmatmul.f32.gmra.mxu0 %v1161
      %v1369 = vpop.f32.mrf.mxu0
      %v1370 = vadd.f32 %v969, %v1369
      %1371 = vmatmul.f32.gmra.mxu0 %v1164
      %v1372 = vpop.f32.mrf.mxu0
      %v1373 = vadd.f32 %v972, %v1372
      %1374 = vmatmul.f32.gmra.mxu0 %v1167
      %v1375 = vpop.f32.mrf.mxu0
      %v1376 = vadd.f32 %v975, %v1375
      %1377 = vmatmul.f32.gmra.mxu0 %v1170
      %v1378 = vpop.f32.mrf.mxu0
      %v1379 = vadd.f32 %v978, %v1378
      %1380 = vmatmul.f32.gmra.mxu0 %v1173
      %v1381 = vpop.f32.mrf.mxu0
      %v1382 = vadd.f32 %v981, %v1381
      %1383 = vmatmul.f32.gmra.mxu0 %v1176
      %v1384 = vpop.f32.mrf.mxu0
      %v1385 = vadd.f32 %v984, %v1384
      %1386 = vmatmul.f32.gmra.mxu0 %v1179
      %v1387 = vpop.f32.mrf.mxu0
      %v1388 = vadd.f32 %v987, %v1387
      %1389 = vmatmul.f32.gmra.mxu0 %v1182
      %v1390 = vpop.f32.mrf.mxu0
      %v1391 = vadd.f32 %v990, %v1390
      %1392 = vmatmul.f32.gmra.mxu0 %v1185
      %v1393 = vpop.f32.mrf.mxu0
      %v1394 = vadd.f32 %v993, %v1393
      %1395 = vmatmul.f32.gmra.mxu0 %v1188
      %v1396 = vpop.f32.mrf.mxu0
      %v1397 = vadd.f32 %v996, %v1396
      %1398 = vmatmul.f32.gmra.mxu0 %v1191
      %v1399 = vpop.f32.mrf.mxu0
      %v1400 = vadd.f32 %v999, %v1399
      %1401 = vmatmul.f32.gmra.mxu0 %v1194
      %v1402 = vpop.f32.mrf.mxu0
      %v1403 = vadd.f32 %v1002, %v1402
      %1404 = vmatmul.f32.gmra.mxu0 %v1197
      %v1405 = vpop.f32.mrf.mxu0
      %v1406 = vadd.f32 %v1005, %v1405
      %1407 = vmatmul.f32.gmra.mxu0 %v1200
      %v1408 = vpop.f32.mrf.mxu0
      %v1409 = vadd.f32 %v1008, %v1408
      %1410 = vmatmul.f32.gmra.mxu0 %v1203
      %v1411 = vpop.f32.mrf.mxu0
      %v1412 = vadd.f32 %v1011, %v1411
      %1413 = vmatmul.f32.gmra.mxu0 %v1206
      %v1414 = vpop.f32.mrf.mxu0
      %v1415 = vadd.f32 %v1014, %v1414
      %1416 = vmatmul.f32.gmra.mxu0 %v1209
      %v1417 = vpop.f32.mrf.mxu0
      %v1418 = vadd.f32 %v1017, %v1417
      %1419 = vmatmul.f32.gmra.mxu0 %v1212
      %v1420 = vpop.f32.mrf.mxu0
      %v1421 = vadd.f32 %v1020, %v1420
      %1422 = vmatmul.f32.gmra.mxu0 %v1215
      %v1423 = vpop.f32.mrf.mxu0
      %v1424 = vadd.f32 %v1023, %v1423
      %1425 = vmatmul.f32.gmra.mxu0 %v1218
      %v1426 = vpop.f32.mrf.mxu0
      %v1427 = vadd.f32 %v1026, %v1426
      %1428 = vmatmul.f32.gmra.mxu0 %v1221
      %v1429 = vpop.f32.mrf.mxu0
      %v1430 = vadd.f32 %v1029, %v1429
      %1431 = vmatmul.f32.gmra.mxu0 %v1224
      %v1432 = vpop.f32.mrf.mxu0
      %v1433 = vadd.f32 %v1032, %v1432
      %1434 = vmatmul.f32.gmra.mxu0 %v1227
      %v1435 = vpop.f32.mrf.mxu0
      %v1436 = vadd.f32 %v1035, %v1435
      %1437 = vmatmul.f32.gmra.mxu0 %v1230
      %v1438 = vpop.f32.mrf.mxu0
      %v1439 = vadd.f32 %v1038, %v1438
      %1440 = vmatmul.f32.gmra.mxu0 %v1233
      %v1441 = vpop.f32.mrf.mxu0
      %v1442 = vadd.f32 %v1041, %v1441
      %1443 = vmatmul.f32.gmra.mxu0 %v1236
      %v1444 = vpop.f32.mrf.mxu0
      %v1445 = vadd.f32 %v1044, %v1444
      %1446 = vmatmul.f32.gmra.mxu0 %v1239
      %v1447 = vpop.f32.mrf.mxu0
      %v1448 = vadd.f32 %v1047, %v1447
      %1449 = vmatmul.f32.gmra.mxu0 %v1242
      %v1450 = vpop.f32.mrf.mxu0
      %v1451 = vadd.f32 %v1050, %v1450
      %1452 = vmatmul.f32.gmra.mxu0 %v1245
      %v1453 = vpop.f32.mrf.mxu0
      %v1454 = vadd.f32 %v1053, %v1453
      %1455 = vmatmul.f32.gmra.mxu0 %v1248
      %v1456 = vpop.f32.mrf.mxu0
      %v1457 = vadd.f32 %v1056, %v1456
      %1458 = vmatmul.f32.gmra.mxu0 %v1251
      %v1459 = vpop.f32.mrf.mxu0
      %v1460 = vadd.f32 %v1059, %v1459
      %1461 = vmatmul.f32.gmra.mxu0 %v1254
      %v1462 = vpop.f32.mrf.mxu0
      %v1463 = vadd.f32 %v1062, %v1462
      %1464 = vmatmul.f32.gmra.mxu0 %v1257
      %v1465 = vpop.f32.mrf.mxu0
      %v1466 = vadd.f32 %v1065, %v1465
      %1467 = vmatmul.f32.gmra.mxu0 %v1260
      %v1468 = vpop.f32.mrf.mxu0
      %v1469 = vadd.f32 %v1068, %v1468
      %1470 = vmatmul.f32.gmra.mxu0 %v1263
      %v1471 = vpop.f32.mrf.mxu0
      %v1472 = vadd.f32 %v1071, %v1471
      %1473 = vmatmul.f32.gmra.mxu0 %v1266
      %v1474 = vpop.f32.mrf.mxu0
      %v1475 = vadd.f32 %v1074, %v1474
      %1476 = vdwg.mxu0
      %v1477 = vld [vmem:[#allocation2 + $0x2] sm:$0xff]
      %v1478 = vld [vmem:[#allocation2 + $0xa] sm:$0xff]
      %v1479 = vld [vmem:[#allocation2 + $0x1a] sm:$0xff]
      %v1480 = vld [vmem:[#allocation2 + $0x22] sm:$0xff]
      %v1481 = vld [vmem:[#allocation2 + $0x32] sm:$0xff]
      %v1482 = vld [vmem:[#allocation2 + $0x3a] sm:$0xff]
      %v1483 = vld [vmem:[#allocation2 + $0x4a] sm:$0xff]
      %v1484 = vld [vmem:[#allocation2 + $0x52] sm:$0xff]
      %v1485 = vld [vmem:[#allocation2 + $0x62] sm:$0xff]
      %v1486 = vld [vmem:[#allocation2 + $0x6a] sm:$0xff]
      %v1487 = vld [vmem:[#allocation2 + $0x7a] sm:$0xff]
      %v1488 = vld [vmem:[#allocation2 + $0x82] sm:$0xff]
      %v1489 = vld [vmem:[#allocation2 + $0x92] sm:$0xff]
      %v1490 = vld [vmem:[#allocation2 + $0x9a] sm:$0xff]
      %v1491 = vld [vmem:[#allocation2 + $0xaa] sm:$0xff]
      %v1492 = vld [vmem:[#allocation2 + $0xb2] sm:$0xff]
      %v1493 = vld [vmem:[#allocation2 + $0xc2] sm:$0xff]
      %v1494 = vld [vmem:[#allocation2 + $0xca] sm:$0xff]
      %v1495 = vld [vmem:[#allocation2 + $0xda] sm:$0xff]
      %v1496 = vld [vmem:[#allocation2 + $0xe2] sm:$0xff]
      %v1497 = vld [vmem:[#allocation2 + $0xf2] sm:$0xff]
      %v1498 = vld [vmem:[#allocation2 + $0xfa] sm:$0xff]
      %v1499 = vld [vmem:[#allocation2 + $0x10a] sm:$0xff]
      %v1500 = vld [vmem:[#allocation2 + $0x112] sm:$0xff]
      %v1501 = vld [vmem:[#allocation2 + $0x122] sm:$0xff]
      %v1502 = vld [vmem:[#allocation2 + $0x12a] sm:$0xff]
      %v1503 = vld [vmem:[#allocation2 + $0x13a] sm:$0xff]
      %v1504 = vld [vmem:[#allocation2 + $0x142] sm:$0xff]
      %v1505 = vld [vmem:[#allocation2 + $0x152] sm:$0xff]
      %v1506 = vld [vmem:[#allocation2 + $0x15a] sm:$0xff]
      %v1507 = vld [vmem:[#allocation2 + $0x16a] sm:$0xff]
      %v1508 = vld [vmem:[#allocation2 + $0x172] sm:$0xff]
      %v1509 = vld [vmem:[#allocation2 + $0x1b2] sm:$0xff]
      %v1510 = vld [vmem:[#allocation2 + $0x1ba] sm:$0xff]
      %v1511 = vld [vmem:[#allocation2 + $0x1ca] sm:$0xff]
      %v1512 = vld [vmem:[#allocation2 + $0x1d2] sm:$0xff]
      %v1513 = vld [vmem:[#allocation2 + $0x1e2] sm:$0xff]
      %v1514 = vld [vmem:[#allocation2 + $0x1ea] sm:$0xff]
      %v1515 = vld [vmem:[#allocation2 + $0x1fa] sm:$0xff]
      %v1516 = vld [vmem:[#allocation2 + $0x202] sm:$0xff]
      %v1517 = vld [vmem:[#allocation2 + $0x212] sm:$0xff]
      %v1518 = vld [vmem:[#allocation2 + $0x21a] sm:$0xff]
      %v1519 = vld [vmem:[#allocation2 + $0x22a] sm:$0xff]
      %v1520 = vld [vmem:[#allocation2 + $0x232] sm:$0xff]
      %v1521 = vld [vmem:[#allocation2 + $0x242] sm:$0xff]
      %v1522 = vld [vmem:[#allocation2 + $0x24a] sm:$0xff]
      %v1523 = vld [vmem:[#allocation2 + $0x25a] sm:$0xff]
      %v1524 = vld [vmem:[#allocation2 + $0x262] sm:$0xff]
      %v1525 = vld [vmem:[#allocation2 + $0x272] sm:$0xff]
      %v1526 = vld [vmem:[#allocation2 + $0x27a] sm:$0xff]
      %v1527 = vld [vmem:[#allocation2 + $0x28a] sm:$0xff]
      %v1528 = vld [vmem:[#allocation2 + $0x292] sm:$0xff]
      %v1529 = vld [vmem:[#allocation2 + $0x2a2] sm:$0xff]
      %v1530 = vld [vmem:[#allocation2 + $0x2aa] sm:$0xff]
      %v1531 = vld [vmem:[#allocation2 + $0x2ba] sm:$0xff]
      %v1532 = vld [vmem:[#allocation2 + $0x2c2] sm:$0xff]
      %v1533 = vld [vmem:[#allocation2 + $0x2d2] sm:$0xff]
      %v1534 = vld [vmem:[#allocation2 + $0x2da] sm:$0xff]
      %v1535 = vld [vmem:[#allocation2 + $0x2ea] sm:$0xff]
      %v1536 = vld [vmem:[#allocation2 + $0x2f2] sm:$0xff]
      %v1537 = vld [vmem:[#allocation2 + $0x302] sm:$0xff]
      %v1538 = vld [vmem:[#allocation2 + $0x30a] sm:$0xff]
      %v1539 = vld [vmem:[#allocation2 + $0x31a] sm:$0xff]
      %v1540 = vld [vmem:[#allocation2 + $0x322] sm:$0xff]
      %s1541 = scalar_lea.vmem %s1, 128
      %v1542 = vld [vmem:[%s1541] sm:$0xff]
      %v1543 = vld [vmem:[%s1541 + $0x8] sm:$0xff]
      %v1544 = vld [vmem:[%s1541 + $0x10] sm:$0xff]
      %v1545 = vld [vmem:[%s1541 + $0x18] sm:$0xff]
      %v1546 = vld [vmem:[%s1541 + $0x20] sm:$0xff]
      %v1547 = vld [vmem:[%s1541 + $0x28] sm:$0xff]
      %v1548 = vld [vmem:[%s1541 + $0x30] sm:$0xff]
      %v1549 = vld [vmem:[%s1541 + $0x38] sm:$0xff]
      %v1551 = vsel %vm264, %v1477, 0
      %v1554 = vsel %vm264, %v1478, 0
      %v1557 = vsel %vm264, %v1479, 0
      %v1560 = vsel %vm264, %v1480, 0
      %v1563 = vsel %vm264, %v1481, 0
      %v1566 = vsel %vm264, %v1482, 0
      %v1569 = vsel %vm264, %v1483, 0
      %v1572 = vsel %vm264, %v1484, 0
      %v1575 = vsel %vm264, %v1485, 0
      %v1578 = vsel %vm264, %v1486, 0
      %v1581 = vsel %vm264, %v1487, 0
      %v1584 = vsel %vm264, %v1488, 0
      %v1587 = vsel %vm264, %v1489, 0
      %v1590 = vsel %vm264, %v1490, 0
      %v1593 = vsel %vm264, %v1491, 0
      %v1596 = vsel %vm264, %v1492, 0
      %v1599 = vsel %vm264, %v1493, 0
      %v1602 = vsel %vm264, %v1494, 0
      %v1605 = vsel %vm264, %v1495, 0
      %v1608 = vsel %vm264, %v1496, 0
      %v1611 = vsel %vm264, %v1497, 0
      %v1614 = vsel %vm264, %v1498, 0
      %v1617 = vsel %vm264, %v1499, 0
      %v1620 = vsel %vm264, %v1500, 0
      %v1623 = vsel %vm264, %v1501, 0
      %v1626 = vsel %vm264, %v1502, 0
      %v1629 = vsel %vm264, %v1503, 0
      %v1632 = vsel %vm264, %v1504, 0
      %v1635 = vsel %vm264, %v1505, 0
      %v1638 = vsel %vm264, %v1506, 0
      %v1641 = vsel %vm264, %v1507, 0
      %v1644 = vsel %vm264, %v1508, 0
      %v1647 = vsel %vm264, %v1509, 0
      %v1650 = vsel %vm264, %v1510, 0
      %v1653 = vsel %vm264, %v1511, 0
      %v1656 = vsel %vm264, %v1512, 0
      %v1659 = vsel %vm264, %v1513, 0
      %v1662 = vsel %vm264, %v1514, 0
      %v1665 = vsel %vm264, %v1515, 0
      %v1668 = vsel %vm264, %v1516, 0
      %v1671 = vsel %vm264, %v1517, 0
      %v1674 = vsel %vm264, %v1518, 0
      %v1677 = vsel %vm264, %v1519, 0
      %v1680 = vsel %vm264, %v1520, 0
      %v1683 = vsel %vm264, %v1521, 0
      %v1686 = vsel %vm264, %v1522, 0
      %v1689 = vsel %vm264, %v1523, 0
      %v1692 = vsel %vm264, %v1524, 0
      %v1695 = vsel %vm264, %v1525, 0
      %v1698 = vsel %vm264, %v1526, 0
      %v1701 = vsel %vm264, %v1527, 0
      %v1704 = vsel %vm264, %v1528, 0
      %v1707 = vsel %vm264, %v1529, 0
      %v1710 = vsel %vm264, %v1530, 0
      %v1713 = vsel %vm264, %v1531, 0
      %v1716 = vsel %vm264, %v1532, 0
      %v1719 = vsel %vm264, %v1533, 0
      %v1722 = vsel %vm264, %v1534, 0
      %v1725 = vsel %vm264, %v1535, 0
      %v1728 = vsel %vm264, %v1536, 0
      %v1731 = vsel %vm264, %v1537, 0
      %v1734 = vsel %vm264, %v1538, 0
      %v1737 = vsel %vm264, %v1539, 0
      %v1740 = vsel %vm264, %v1540, 0
      %1742 = vmatpush.msra.mxu0 0.0
      %1743 = vmatpush.msra.mxu0 0.0
      %1744 = vmatpush.msra.mxu0 0.0
      %1745 = vmatpush.msra.mxu0 0.0
      %1746 = vmatpush.msra.mxu0 0.0
      %1747 = vmatpush.msra.mxu0 0.0
      %1748 = vmatpush.msra.mxu0 0.0
      %1749 = vmatpush.msra.mxu0 0.0
      %1750 = vmatpush.msra.mxu0 %v1549
      %1751 = vmatpush.msra.mxu0 %v1548
      %1752 = vmatpush.msra.mxu0 %v1547
      %1753 = vmatpush.msra.mxu0 %v1546
      %1754 = vmatpush.msra.mxu0 %v1545
      %1755 = vmatpush.msra.mxu0 %v1544
      %1756 = vmatpush.msra.mxu0 %v1543
      %1757 = vmatpush.msra.mxu0 %v1542
      %1758 = vmatmul.f32.gmra.mxu0 %v1551
      %v1759 = vpop.f32.mrf.mxu0
      %v1760 = vadd.f32 0.0, %v1759
      %1761 = vmatmul.f32.gmra.mxu0 %v1554
      %v1762 = vpop.f32.mrf.mxu0
      %v1763 = vadd.f32 0.0, %v1762
      %1764 = vmatmul.f32.gmra.mxu0 %v1557
      %v1765 = vpop.f32.mrf.mxu0
      %v1766 = vadd.f32 0.0, %v1765
      %1767 = vmatmul.f32.gmra.mxu0 %v1560
      %v1768 = vpop.f32.mrf.mxu0
      %v1769 = vadd.f32 0.0, %v1768
      %1770 = vmatmul.f32.gmra.mxu0 %v1563
      %v1771 = vpop.f32.mrf.mxu0
      %v1772 = vadd.f32 0.0, %v1771
      %1773 = vmatmul.f32.gmra.mxu0 %v1566
      %v1774 = vpop.f32.mrf.mxu0
      %v1775 = vadd.f32 0.0, %v1774
      %1776 = vmatmul.f32.gmra.mxu0 %v1569
      %v1777 = vpop.f32.mrf.mxu0
      %v1778 = vadd.f32 0.0, %v1777
      %1779 = vmatmul.f32.gmra.mxu0 %v1572
      %v1780 = vpop.f32.mrf.mxu0
      %v1781 = vadd.f32 0.0, %v1780
      %1782 = vmatmul.f32.gmra.mxu0 %v1575
      %v1783 = vpop.f32.mrf.mxu0
      %v1784 = vadd.f32 0.0, %v1783
      %1785 = vmatmul.f32.gmra.mxu0 %v1578
      %v1786 = vpop.f32.mrf.mxu0
      %v1787 = vadd.f32 0.0, %v1786
      %1788 = vmatmul.f32.gmra.mxu0 %v1581
      %v1789 = vpop.f32.mrf.mxu0
      %v1790 = vadd.f32 0.0, %v1789
      %1791 = vmatmul.f32.gmra.mxu0 %v1584
      %v1792 = vpop.f32.mrf.mxu0
      %v1793 = vadd.f32 0.0, %v1792
      %1794 = vmatmul.f32.gmra.mxu0 %v1587
      %v1795 = vpop.f32.mrf.mxu0
      %v1796 = vadd.f32 0.0, %v1795
      %1797 = vmatmul.f32.gmra.mxu0 %v1590
      %v1798 = vpop.f32.mrf.mxu0
      %v1799 = vadd.f32 0.0, %v1798
      %1800 = vmatmul.f32.gmra.mxu0 %v1593
      %v1801 = vpop.f32.mrf.mxu0
      %v1802 = vadd.f32 0.0, %v1801
      %1803 = vmatmul.f32.gmra.mxu0 %v1596
      %v1804 = vpop.f32.mrf.mxu0
      %v1805 = vadd.f32 0.0, %v1804
      %1806 = vmatmul.f32.gmra.mxu0 %v1599
      %v1807 = vpop.f32.mrf.mxu0
      %v1808 = vadd.f32 0.0, %v1807
      %1809 = vmatmul.f32.gmra.mxu0 %v1602
      %v1810 = vpop.f32.mrf.mxu0
      %v1811 = vadd.f32 0.0, %v1810
      %1812 = vmatmul.f32.gmra.mxu0 %v1605
      %v1813 = vpop.f32.mrf.mxu0
      %v1814 = vadd.f32 0.0, %v1813
      %1815 = vmatmul.f32.gmra.mxu0 %v1608
      %v1816 = vpop.f32.mrf.mxu0
      %v1817 = vadd.f32 0.0, %v1816
      %1818 = vmatmul.f32.gmra.mxu0 %v1611
      %v1819 = vpop.f32.mrf.mxu0
      %v1820 = vadd.f32 0.0, %v1819
      %1821 = vmatmul.f32.gmra.mxu0 %v1614
      %v1822 = vpop.f32.mrf.mxu0
      %v1823 = vadd.f32 0.0, %v1822
      %1824 = vmatmul.f32.gmra.mxu0 %v1617
      %v1825 = vpop.f32.mrf.mxu0
      %v1826 = vadd.f32 0.0, %v1825
      %1827 = vmatmul.f32.gmra.mxu0 %v1620
      %v1828 = vpop.f32.mrf.mxu0
      %v1829 = vadd.f32 0.0, %v1828
      %1830 = vmatmul.f32.gmra.mxu0 %v1623
      %v1831 = vpop.f32.mrf.mxu0
      %v1832 = vadd.f32 0.0, %v1831
      %1833 = vmatmul.f32.gmra.mxu0 %v1626
      %v1834 = vpop.f32.mrf.mxu0
      %v1835 = vadd.f32 0.0, %v1834
      %1836 = vmatmul.f32.gmra.mxu0 %v1629
      %v1837 = vpop.f32.mrf.mxu0
      %v1838 = vadd.f32 0.0, %v1837
      %1839 = vmatmul.f32.gmra.mxu0 %v1632
      %v1840 = vpop.f32.mrf.mxu0
      %v1841 = vadd.f32 0.0, %v1840
      %1842 = vmatmul.f32.gmra.mxu0 %v1635
      %v1843 = vpop.f32.mrf.mxu0
      %v1844 = vadd.f32 0.0, %v1843
      %1845 = vmatmul.f32.gmra.mxu0 %v1638
      %v1846 = vpop.f32.mrf.mxu0
      %v1847 = vadd.f32 0.0, %v1846
      %1848 = vmatmul.f32.gmra.mxu0 %v1641
      %v1849 = vpop.f32.mrf.mxu0
      %v1850 = vadd.f32 0.0, %v1849
      %1851 = vmatmul.f32.gmra.mxu0 %v1644
      %v1852 = vpop.f32.mrf.mxu0
      %v1853 = vadd.f32 0.0, %v1852
      %1854 = vmatmul.f32.gmra.mxu0 %v1647
      %v1855 = vpop.f32.mrf.mxu0
      %v1856 = vadd.f32 0.0, %v1855
      %1857 = vmatmul.f32.gmra.mxu0 %v1650
      %v1858 = vpop.f32.mrf.mxu0
      %v1859 = vadd.f32 0.0, %v1858
      %1860 = vmatmul.f32.gmra.mxu0 %v1653
      %v1861 = vpop.f32.mrf.mxu0
      %v1862 = vadd.f32 0.0, %v1861
      %1863 = vmatmul.f32.gmra.mxu0 %v1656
      %v1864 = vpop.f32.mrf.mxu0
      %v1865 = vadd.f32 0.0, %v1864
      %1866 = vmatmul.f32.gmra.mxu0 %v1659
      %v1867 = vpop.f32.mrf.mxu0
      %v1868 = vadd.f32 0.0, %v1867
      %1869 = vmatmul.f32.gmra.mxu0 %v1662
      %v1870 = vpop.f32.mrf.mxu0
      %v1871 = vadd.f32 0.0, %v1870
      %1872 = vmatmul.f32.gmra.mxu0 %v1665
      %v1873 = vpop.f32.mrf.mxu0
      %v1874 = vadd.f32 0.0, %v1873
      %1875 = vmatmul.f32.gmra.mxu0 %v1668
      %v1876 = vpop.f32.mrf.mxu0
      %v1877 = vadd.f32 0.0, %v1876
      %1878 = vmatmul.f32.gmra.mxu0 %v1671
      %v1879 = vpop.f32.mrf.mxu0
      %v1880 = vadd.f32 0.0, %v1879
      %1881 = vmatmul.f32.gmra.mxu0 %v1674
      %v1882 = vpop.f32.mrf.mxu0
      %v1883 = vadd.f32 0.0, %v1882
      %1884 = vmatmul.f32.gmra.mxu0 %v1677
      %v1885 = vpop.f32.mrf.mxu0
      %v1886 = vadd.f32 0.0, %v1885
      %1887 = vmatmul.f32.gmra.mxu0 %v1680
      %v1888 = vpop.f32.mrf.mxu0
      %v1889 = vadd.f32 0.0, %v1888
      %1890 = vmatmul.f32.gmra.mxu0 %v1683
      %v1891 = vpop.f32.mrf.mxu0
      %v1892 = vadd.f32 0.0, %v1891
      %1893 = vmatmul.f32.gmra.mxu0 %v1686
      %v1894 = vpop.f32.mrf.mxu0
      %v1895 = vadd.f32 0.0, %v1894
      %1896 = vmatmul.f32.gmra.mxu0 %v1689
      %v1897 = vpop.f32.mrf.mxu0
      %v1898 = vadd.f32 0.0, %v1897
      %1899 = vmatmul.f32.gmra.mxu0 %v1692
      %v1900 = vpop.f32.mrf.mxu0
      %v1901 = vadd.f32 0.0, %v1900
      %1902 = vmatmul.f32.gmra.mxu0 %v1695
      %v1903 = vpop.f32.mrf.mxu0
      %v1904 = vadd.f32 0.0, %v1903
      %1905 = vmatmul.f32.gmra.mxu0 %v1698
      %v1906 = vpop.f32.mrf.mxu0
      %v1907 = vadd.f32 0.0, %v1906
      %1908 = vmatmul.f32.gmra.mxu0 %v1701
      %v1909 = vpop.f32.mrf.mxu0
      %v1910 = vadd.f32 0.0, %v1909
      %1911 = vmatmul.f32.gmra.mxu0 %v1704
      %v1912 = vpop.f32.mrf.mxu0
      %v1913 = vadd.f32 0.0, %v1912
      %1914 = vmatmul.f32.gmra.mxu0 %v1707
      %v1915 = vpop.f32.mrf.mxu0
      %v1916 = vadd.f32 0.0, %v1915
      %1917 = vmatmul.f32.gmra.mxu0 %v1710
      %v1918 = vpop.f32.mrf.mxu0
      %v1919 = vadd.f32 0.0, %v1918
      %1920 = vmatmul.f32.gmra.mxu0 %v1713
      %v1921 = vpop.f32.mrf.mxu0
      %v1922 = vadd.f32 0.0, %v1921
      %1923 = vmatmul.f32.gmra.mxu0 %v1716
      %v1924 = vpop.f32.mrf.mxu0
      %v1925 = vadd.f32 0.0, %v1924
      %1926 = vmatmul.f32.gmra.mxu0 %v1719
      %v1927 = vpop.f32.mrf.mxu0
      %v1928 = vadd.f32 0.0, %v1927
      %1929 = vmatmul.f32.gmra.mxu0 %v1722
      %v1930 = vpop.f32.mrf.mxu0
      %v1931 = vadd.f32 0.0, %v1930
      %1932 = vmatmul.f32.gmra.mxu0 %v1725
      %v1933 = vpop.f32.mrf.mxu0
      %v1934 = vadd.f32 0.0, %v1933
      %1935 = vmatmul.f32.gmra.mxu0 %v1728
      %v1936 = vpop.f32.mrf.mxu0
      %v1937 = vadd.f32 0.0, %v1936
      %1938 = vmatmul.f32.gmra.mxu0 %v1731
      %v1939 = vpop.f32.mrf.mxu0
      %v1940 = vadd.f32 0.0, %v1939
      %1941 = vmatmul.f32.gmra.mxu0 %v1734
      %v1942 = vpop.f32.mrf.mxu0
      %v1943 = vadd.f32 0.0, %v1942
      %1944 = vmatmul.f32.gmra.mxu0 %v1737
      %v1945 = vpop.f32.mrf.mxu0
      %v1946 = vadd.f32 0.0, %v1945
      %1947 = vmatmul.f32.gmra.mxu0 %v1740
      %v1948 = vpop.f32.mrf.mxu0
      %v1949 = vadd.f32 0.0, %v1948
      %1950 = vdwg.mxu0
      %v1951 = vadd.f32 %v1286, %v1760
      %v1952 = vadd.f32 %v1289, %v1763
      %v1953 = vadd.f32 %v1292, %v1766
      %v1954 = vadd.f32 %v1295, %v1769
      %v1955 = vadd.f32 %v1298, %v1772
      %v1956 = vadd.f32 %v1301, %v1775
      %v1957 = vadd.f32 %v1304, %v1778
      %v1958 = vadd.f32 %v1307, %v1781
      %v1959 = vadd.f32 %v1310, %v1784
      %v1960 = vadd.f32 %v1313, %v1787
      %v1961 = vadd.f32 %v1316, %v1790
      %v1962 = vadd.f32 %v1319, %v1793
      %v1963 = vadd.f32 %v1322, %v1796
      %v1964 = vadd.f32 %v1325, %v1799
      %v1965 = vadd.f32 %v1328, %v1802
      %v1966 = vadd.f32 %v1331, %v1805
      %v1967 = vadd.f32 %v1334, %v1808
      %v1968 = vadd.f32 %v1337, %v1811
      %v1969 = vadd.f32 %v1340, %v1814
      %v1970 = vadd.f32 %v1343, %v1817
      %v1971 = vadd.f32 %v1346, %v1820
      %v1972 = vadd.f32 %v1349, %v1823
      %v1973 = vadd.f32 %v1352, %v1826
      %v1974 = vadd.f32 %v1355, %v1829
      %v1975 = vadd.f32 %v1358, %v1832
      %v1976 = vadd.f32 %v1361, %v1835
      %v1977 = vadd.f32 %v1364, %v1838
      %v1978 = vadd.f32 %v1367, %v1841
      %v1979 = vadd.f32 %v1370, %v1844
      %v1980 = vadd.f32 %v1373, %v1847
      %v1981 = vadd.f32 %v1376, %v1850
      %v1982 = vadd.f32 %v1379, %v1853
      %v1983 = vadd.f32 %v1382, %v1856
      %v1984 = vadd.f32 %v1385, %v1859
      %v1985 = vadd.f32 %v1388, %v1862
      %v1986 = vadd.f32 %v1391, %v1865
      %v1987 = vadd.f32 %v1394, %v1868
      %v1988 = vadd.f32 %v1397, %v1871
      %v1989 = vadd.f32 %v1400, %v1874
      %v1990 = vadd.f32 %v1403, %v1877
      %v1991 = vadd.f32 %v1406, %v1880
      %v1992 = vadd.f32 %v1409, %v1883
      %v1993 = vadd.f32 %v1412, %v1886
      %v1994 = vadd.f32 %v1415, %v1889
      %v1995 = vadd.f32 %v1418, %v1892
      %v1996 = vadd.f32 %v1421, %v1895
      %v1997 = vadd.f32 %v1424, %v1898
      %v1998 = vadd.f32 %v1427, %v1901
      %v1999 = vadd.f32 %v1430, %v1904
      %v2000 = vadd.f32 %v1433, %v1907
      %v2001 = vadd.f32 %v1436, %v1910
      %v2002 = vadd.f32 %v1439, %v1913
      %v2003 = vadd.f32 %v1442, %v1916
      %v2004 = vadd.f32 %v1445, %v1919
      %v2005 = vadd.f32 %v1448, %v1922
      %v2006 = vadd.f32 %v1451, %v1925
      %v2007 = vadd.f32 %v1454, %v1928
      %v2008 = vadd.f32 %v1457, %v1931
      %v2009 = vadd.f32 %v1460, %v1934
      %v2010 = vadd.f32 %v1463, %v1937
      %v2011 = vadd.f32 %v1466, %v1940
      %v2012 = vadd.f32 %v1469, %v1943
      %v2013 = vadd.f32 %v1472, %v1946
      %v2014 = vadd.f32 %v1475, %v1949
      %v2015 = vld [vmem:[%s465] sm:$0xff]
      %v2016 = vld [vmem:[%s465 + $0x8] sm:$0xff]
      %v2017 = vld [vmem:[%s465 + $0x18] sm:$0xff]
      %v2018 = vld [vmem:[%s465 + $0x20] sm:$0xff]
      %v2019 = vld [vmem:[%s465 + $0x30] sm:$0xff]
      %v2020 = vld [vmem:[%s465 + $0x38] sm:$0xff]
      %v2021 = vld [vmem:[%s465 + $0x48] sm:$0xff]
      %v2022 = vld [vmem:[%s465 + $0x50] sm:$0xff]
      %v2023 = vld [vmem:[%s465 + $0x60] sm:$0xff]
      %v2024 = vld [vmem:[%s465 + $0x68] sm:$0xff]
      %v2025 = vld [vmem:[%s465 + $0x78] sm:$0xff]
      %v2026 = vld [vmem:[%s465 + $0x80] sm:$0xff]
      %v2027 = vld [vmem:[%s465 + $0x90] sm:$0xff]
      %v2028 = vld [vmem:[%s465 + $0x98] sm:$0xff]
      %v2029 = vld [vmem:[%s465 + $0xa8] sm:$0xff]
      %v2030 = vld [vmem:[%s465 + $0xb0] sm:$0xff]
      %v2031 = vld [vmem:[%s465 + $0xc0] sm:$0xff]
      %v2032 = vld [vmem:[%s465 + $0xc8] sm:$0xff]
      %v2033 = vld [vmem:[%s465 + $0xd8] sm:$0xff]
      %v2034 = vld [vmem:[%s465 + $0xe0] sm:$0xff]
      %v2035 = vld [vmem:[%s465 + $0xf0] sm:$0xff]
      %v2036 = vld [vmem:[%s465 + $0xf8] sm:$0xff]
      %v2037 = vld [vmem:[%s465 + $0x108] sm:$0xff]
      %v2038 = vld [vmem:[%s465 + $0x110] sm:$0xff]
      %v2039 = vld [vmem:[%s465 + $0x120] sm:$0xff]
      %v2040 = vld [vmem:[%s465 + $0x128] sm:$0xff]
      %v2041 = vld [vmem:[%s465 + $0x138] sm:$0xff]
      %v2042 = vld [vmem:[%s465 + $0x140] sm:$0xff]
      %v2043 = vld [vmem:[%s465 + $0x150] sm:$0xff]
      %v2044 = vld [vmem:[%s465 + $0x158] sm:$0xff]
      %v2045 = vld [vmem:[%s465 + $0x168] sm:$0xff]
      %v2046 = vld [vmem:[%s465 + $0x170] sm:$0xff]
      %v2047 = vld [vmem:[%s465 + $0x1b0] sm:$0xff]
      %v2048 = vld [vmem:[%s465 + $0x1b8] sm:$0xff]
      %v2049 = vld [vmem:[%s465 + $0x1c8] sm:$0xff]
      %v2050 = vld [vmem:[%s465 + $0x1d0] sm:$0xff]
      %v2051 = vld [vmem:[%s465 + $0x1e0] sm:$0xff]
      %v2052 = vld [vmem:[%s465 + $0x1e8] sm:$0xff]
      %v2053 = vld [vmem:[%s465 + $0x1f8] sm:$0xff]
      %v2054 = vld [vmem:[%s465 + $0x200] sm:$0xff]
      %v2055 = vld [vmem:[%s465 + $0x210] sm:$0xff]
      %v2056 = vld [vmem:[%s465 + $0x218] sm:$0xff]
      %v2057 = vld [vmem:[%s465 + $0x228] sm:$0xff]
      %v2058 = vld [vmem:[%s465 + $0x230] sm:$0xff]
      %v2059 = vld [vmem:[%s465 + $0x240] sm:$0xff]
      %v2060 = vld [vmem:[%s465 + $0x248] sm:$0xff]
      %v2061 = vld [vmem:[%s465 + $0x258] sm:$0xff]
      %v2062 = vld [vmem:[%s465 + $0x260] sm:$0xff]
      %v2063 = vld [vmem:[%s465 + $0x270] sm:$0xff]
      %v2064 = vld [vmem:[%s465 + $0x278] sm:$0xff]
      %v2065 = vld [vmem:[%s465 + $0x288] sm:$0xff]
      %v2066 = vld [vmem:[%s465 + $0x290] sm:$0xff]
      %v2067 = vld [vmem:[%s465 + $0x2a0] sm:$0xff]
      %v2068 = vld [vmem:[%s465 + $0x2a8] sm:$0xff]
      %v2069 = vld [vmem:[%s465 + $0x2b8] sm:$0xff]
      %v2070 = vld [vmem:[%s465 + $0x2c0] sm:$0xff]
      %v2071 = vld [vmem:[%s465 + $0x2d0] sm:$0xff]
      %v2072 = vld [vmem:[%s465 + $0x2d8] sm:$0xff]
      %v2073 = vld [vmem:[%s465 + $0x2e8] sm:$0xff]
      %v2074 = vld [vmem:[%s465 + $0x2f0] sm:$0xff]
      %v2075 = vld [vmem:[%s465 + $0x300] sm:$0xff]
      %v2076 = vld [vmem:[%s465 + $0x308] sm:$0xff]
      %v2077 = vld [vmem:[%s465 + $0x318] sm:$0xff]
      %v2078 = vld [vmem:[%s465 + $0x320] sm:$0xff]
      %s2079 = scalar_lea.vmem %s1, 192
      %v2080 = vld [vmem:[%s2079] sm:$0xff]
      %v2081 = vld [vmem:[%s2079 + $0x8] sm:$0xff]
      %v2082 = vld [vmem:[%s2079 + $0x10] sm:$0xff]
      %v2083 = vld [vmem:[%s2079 + $0x18] sm:$0xff]
      %v2084 = vld [vmem:[%s2079 + $0x20] sm:$0xff]
      %v2085 = vld [vmem:[%s2079 + $0x28] sm:$0xff]
      %v2086 = vld [vmem:[%s2079 + $0x30] sm:$0xff]
      %v2087 = vld [vmem:[%s2079 + $0x38] sm:$0xff]
      %v2089 = vsel %vm264, %v2015, 0
      %v2092 = vsel %vm264, %v2016, 0
      %v2095 = vsel %vm264, %v2017, 0
      %v2098 = vsel %vm264, %v2018, 0
      %v2101 = vsel %vm264, %v2019, 0
      %v2104 = vsel %vm264, %v2020, 0
      %v2107 = vsel %vm264, %v2021, 0
      %v2110 = vsel %vm264, %v2022, 0
      %v2113 = vsel %vm264, %v2023, 0
      %v2116 = vsel %vm264, %v2024, 0
      %v2119 = vsel %vm264, %v2025, 0
      %v2122 = vsel %vm264, %v2026, 0
      %v2125 = vsel %vm264, %v2027, 0
      %v2128 = vsel %vm264, %v2028, 0
      %v2131 = vsel %vm264, %v2029, 0
      %v2134 = vsel %vm264, %v2030, 0
      %v2137 = vsel %vm264, %v2031, 0
      %v2140 = vsel %vm264, %v2032, 0
      %v2143 = vsel %vm264, %v2033, 0
      %v2146 = vsel %vm264, %v2034, 0
      %v2149 = vsel %vm264, %v2035, 0
      %v2152 = vsel %vm264, %v2036, 0
      %v2155 = vsel %vm264, %v2037, 0
      %v2158 = vsel %vm264, %v2038, 0
      %v2161 = vsel %vm264, %v2039, 0
      %v2164 = vsel %vm264, %v2040, 0
      %v2167 = vsel %vm264, %v2041, 0
      %v2170 = vsel %vm264, %v2042, 0
      %v2173 = vsel %vm264, %v2043, 0
      %v2176 = vsel %vm264, %v2044, 0
      %v2179 = vsel %vm264, %v2045, 0
      %v2182 = vsel %vm264, %v2046, 0
      %v2185 = vsel %vm264, %v2047, 0
      %v2188 = vsel %vm264, %v2048, 0
      %v2191 = vsel %vm264, %v2049, 0
      %v2194 = vsel %vm264, %v2050, 0
      %v2197 = vsel %vm264, %v2051, 0
      %v2200 = vsel %vm264, %v2052, 0
      %v2203 = vsel %vm264, %v2053, 0
      %v2206 = vsel %vm264, %v2054, 0
      %v2209 = vsel %vm264, %v2055, 0
      %v2212 = vsel %vm264, %v2056, 0
      %v2215 = vsel %vm264, %v2057, 0
      %v2218 = vsel %vm264, %v2058, 0
      %v2221 = vsel %vm264, %v2059, 0
      %v2224 = vsel %vm264, %v2060, 0
      %v2227 = vsel %vm264, %v2061, 0
      %v2230 = vsel %vm264, %v2062, 0
      %v2233 = vsel %vm264, %v2063, 0
      %v2236 = vsel %vm264, %v2064, 0
      %v2239 = vsel %vm264, %v2065, 0
      %v2242 = vsel %vm264, %v2066, 0
      %v2245 = vsel %vm264, %v2067, 0
      %v2248 = vsel %vm264, %v2068, 0
      %v2251 = vsel %vm264, %v2069, 0
      %v2254 = vsel %vm264, %v2070, 0
      %v2257 = vsel %vm264, %v2071, 0
      %v2260 = vsel %vm264, %v2072, 0
      %v2263 = vsel %vm264, %v2073, 0
      %v2266 = vsel %vm264, %v2074, 0
      %v2269 = vsel %vm264, %v2075, 0
      %v2272 = vsel %vm264, %v2076, 0
      %v2275 = vsel %vm264, %v2077, 0
      %v2278 = vsel %vm264, %v2078, 0
      %2280 = vmatpush.msra.mxu0 0.0
      %2281 = vmatpush.msra.mxu0 0.0
      %2282 = vmatpush.msra.mxu0 0.0
      %2283 = vmatpush.msra.mxu0 0.0
      %2284 = vmatpush.msra.mxu0 0.0
      %2285 = vmatpush.msra.mxu0 0.0
      %2286 = vmatpush.msra.mxu0 0.0
      %2287 = vmatpush.msra.mxu0 0.0
      %2288 = vmatpush.msra.mxu0 %v2087
      %2289 = vmatpush.msra.mxu0 %v2086
      %2290 = vmatpush.msra.mxu0 %v2085
      %2291 = vmatpush.msra.mxu0 %v2084
      %2292 = vmatpush.msra.mxu0 %v2083
      %2293 = vmatpush.msra.mxu0 %v2082
      %2294 = vmatpush.msra.mxu0 %v2081
      %2295 = vmatpush.msra.mxu0 %v2080
      %2296 = vmatmul.f32.gmra.mxu0 %v2089
      %v2297 = vpop.f32.mrf.mxu0
      %v2298 = vadd.f32 0.0, %v2297
      %2299 = vmatmul.f32.gmra.mxu0 %v2092
      %v2300 = vpop.f32.mrf.mxu0
      %v2301 = vadd.f32 0.0, %v2300
      %2302 = vmatmul.f32.gmra.mxu0 %v2095
      %v2303 = vpop.f32.mrf.mxu0
      %v2304 = vadd.f32 0.0, %v2303
      %2305 = vmatmul.f32.gmra.mxu0 %v2098
      %v2306 = vpop.f32.mrf.mxu0
      %v2307 = vadd.f32 0.0, %v2306
      %2308 = vmatmul.f32.gmra.mxu0 %v2101
      %v2309 = vpop.f32.mrf.mxu0
      %v2310 = vadd.f32 0.0, %v2309
      %2311 = vmatmul.f32.gmra.mxu0 %v2104
      %v2312 = vpop.f32.mrf.mxu0
      %v2313 = vadd.f32 0.0, %v2312
      %2314 = vmatmul.f32.gmra.mxu0 %v2107
      %v2315 = vpop.f32.mrf.mxu0
      %v2316 = vadd.f32 0.0, %v2315
      %2317 = vmatmul.f32.gmra.mxu0 %v2110
      %v2318 = vpop.f32.mrf.mxu0
      %v2319 = vadd.f32 0.0, %v2318
      %2320 = vmatmul.f32.gmra.mxu0 %v2113
      %v2321 = vpop.f32.mrf.mxu0
      %v2322 = vadd.f32 0.0, %v2321
      %2323 = vmatmul.f32.gmra.mxu0 %v2116
      %v2324 = vpop.f32.mrf.mxu0
      %v2325 = vadd.f32 0.0, %v2324
      %2326 = vmatmul.f32.gmra.mxu0 %v2119
      %v2327 = vpop.f32.mrf.mxu0
      %v2328 = vadd.f32 0.0, %v2327
      %2329 = vmatmul.f32.gmra.mxu0 %v2122
      %v2330 = vpop.f32.mrf.mxu0
      %v2331 = vadd.f32 0.0, %v2330
      %2332 = vmatmul.f32.gmra.mxu0 %v2125
      %v2333 = vpop.f32.mrf.mxu0
      %v2334 = vadd.f32 0.0, %v2333
      %2335 = vmatmul.f32.gmra.mxu0 %v2128
      %v2336 = vpop.f32.mrf.mxu0
      %v2337 = vadd.f32 0.0, %v2336
      %2338 = vmatmul.f32.gmra.mxu0 %v2131
      %v2339 = vpop.f32.mrf.mxu0
      %v2340 = vadd.f32 0.0, %v2339
      %2341 = vmatmul.f32.gmra.mxu0 %v2134
      %v2342 = vpop.f32.mrf.mxu0
      %v2343 = vadd.f32 0.0, %v2342
      %2344 = vmatmul.f32.gmra.mxu0 %v2137
      %v2345 = vpop.f32.mrf.mxu0
      %v2346 = vadd.f32 0.0, %v2345
      %2347 = vmatmul.f32.gmra.mxu0 %v2140
      %v2348 = vpop.f32.mrf.mxu0
      %v2349 = vadd.f32 0.0, %v2348
      %2350 = vmatmul.f32.gmra.mxu0 %v2143
      %v2351 = vpop.f32.mrf.mxu0
      %v2352 = vadd.f32 0.0, %v2351
      %2353 = vmatmul.f32.gmra.mxu0 %v2146
      %v2354 = vpop.f32.mrf.mxu0
      %v2355 = vadd.f32 0.0, %v2354
      %2356 = vmatmul.f32.gmra.mxu0 %v2149
      %v2357 = vpop.f32.mrf.mxu0
      %v2358 = vadd.f32 0.0, %v2357
      %2359 = vmatmul.f32.gmra.mxu0 %v2152
      %v2360 = vpop.f32.mrf.mxu0
      %v2361 = vadd.f32 0.0, %v2360
      %2362 = vmatmul.f32.gmra.mxu0 %v2155
      %v2363 = vpop.f32.mrf.mxu0
      %v2364 = vadd.f32 0.0, %v2363
      %2365 = vmatmul.f32.gmra.mxu0 %v2158
      %v2366 = vpop.f32.mrf.mxu0
      %v2367 = vadd.f32 0.0, %v2366
      %2368 = vmatmul.f32.gmra.mxu0 %v2161
      %v2369 = vpop.f32.mrf.mxu0
      %v2370 = vadd.f32 0.0, %v2369
      %2371 = vmatmul.f32.gmra.mxu0 %v2164
      %v2372 = vpop.f32.mrf.mxu0
      %v2373 = vadd.f32 0.0, %v2372
      %2374 = vmatmul.f32.gmra.mxu0 %v2167
      %v2375 = vpop.f32.mrf.mxu0
      %v2376 = vadd.f32 0.0, %v2375
      %2377 = vmatmul.f32.gmra.mxu0 %v2170
      %v2378 = vpop.f32.mrf.mxu0
      %v2379 = vadd.f32 0.0, %v2378
      %2380 = vmatmul.f32.gmra.mxu0 %v2173
      %v2381 = vpop.f32.mrf.mxu0
      %v2382 = vadd.f32 0.0, %v2381
      %2383 = vmatmul.f32.gmra.mxu0 %v2176
      %v2384 = vpop.f32.mrf.mxu0
      %v2385 = vadd.f32 0.0, %v2384
      %2386 = vmatmul.f32.gmra.mxu0 %v2179
      %v2387 = vpop.f32.mrf.mxu0
      %v2388 = vadd.f32 0.0, %v2387
      %2389 = vmatmul.f32.gmra.mxu0 %v2182
      %v2390 = vpop.f32.mrf.mxu0
      %v2391 = vadd.f32 0.0, %v2390
      %2392 = vmatmul.f32.gmra.mxu0 %v2185
      %v2393 = vpop.f32.mrf.mxu0
      %v2394 = vadd.f32 0.0, %v2393
      %2395 = vmatmul.f32.gmra.mxu0 %v2188
      %v2396 = vpop.f32.mrf.mxu0
      %v2397 = vadd.f32 0.0, %v2396
      %2398 = vmatmul.f32.gmra.mxu0 %v2191
      %v2399 = vpop.f32.mrf.mxu0
      %v2400 = vadd.f32 0.0, %v2399
      %2401 = vmatmul.f32.gmra.mxu0 %v2194
      %v2402 = vpop.f32.mrf.mxu0
      %v2403 = vadd.f32 0.0, %v2402
      %2404 = vmatmul.f32.gmra.mxu0 %v2197
      %v2405 = vpop.f32.mrf.mxu0
      %v2406 = vadd.f32 0.0, %v2405
      %2407 = vmatmul.f32.gmra.mxu0 %v2200
      %v2408 = vpop.f32.mrf.mxu0
      %v2409 = vadd.f32 0.0, %v2408
      %2410 = vmatmul.f32.gmra.mxu0 %v2203
      %v2411 = vpop.f32.mrf.mxu0
      %v2412 = vadd.f32 0.0, %v2411
      %2413 = vmatmul.f32.gmra.mxu0 %v2206
      %v2414 = vpop.f32.mrf.mxu0
      %v2415 = vadd.f32 0.0, %v2414
      %2416 = vmatmul.f32.gmra.mxu0 %v2209
      %v2417 = vpop.f32.mrf.mxu0
      %v2418 = vadd.f32 0.0, %v2417
      %2419 = vmatmul.f32.gmra.mxu0 %v2212
      %v2420 = vpop.f32.mrf.mxu0
      %v2421 = vadd.f32 0.0, %v2420
      %2422 = vmatmul.f32.gmra.mxu0 %v2215
      %v2423 = vpop.f32.mrf.mxu0
      %v2424 = vadd.f32 0.0, %v2423
      %2425 = vmatmul.f32.gmra.mxu0 %v2218
      %v2426 = vpop.f32.mrf.mxu0
      %v2427 = vadd.f32 0.0, %v2426
      %2428 = vmatmul.f32.gmra.mxu0 %v2221
      %v2429 = vpop.f32.mrf.mxu0
      %v2430 = vadd.f32 0.0, %v2429
      %2431 = vmatmul.f32.gmra.mxu0 %v2224
      %v2432 = vpop.f32.mrf.mxu0
      %v2433 = vadd.f32 0.0, %v2432
      %2434 = vmatmul.f32.gmra.mxu0 %v2227
      %v2435 = vpop.f32.mrf.mxu0
      %v2436 = vadd.f32 0.0, %v2435
      %2437 = vmatmul.f32.gmra.mxu0 %v2230
      %v2438 = vpop.f32.mrf.mxu0
      %v2439 = vadd.f32 0.0, %v2438
      %2440 = vmatmul.f32.gmra.mxu0 %v2233
      %v2441 = vpop.f32.mrf.mxu0
      %v2442 = vadd.f32 0.0, %v2441
      %2443 = vmatmul.f32.gmra.mxu0 %v2236
      %v2444 = vpop.f32.mrf.mxu0
      %v2445 = vadd.f32 0.0, %v2444
      %2446 = vmatmul.f32.gmra.mxu0 %v2239
      %v2447 = vpop.f32.mrf.mxu0
      %v2448 = vadd.f32 0.0, %v2447
      %2449 = vmatmul.f32.gmra.mxu0 %v2242
      %v2450 = vpop.f32.mrf.mxu0
      %v2451 = vadd.f32 0.0, %v2450
      %2452 = vmatmul.f32.gmra.mxu0 %v2245
      %v2453 = vpop.f32.mrf.mxu0
      %v2454 = vadd.f32 0.0, %v2453
      %2455 = vmatmul.f32.gmra.mxu0 %v2248
      %v2456 = vpop.f32.mrf.mxu0
      %v2457 = vadd.f32 0.0, %v2456
      %2458 = vmatmul.f32.gmra.mxu0 %v2251
      %v2459 = vpop.f32.mrf.mxu0
      %v2460 = vadd.f32 0.0, %v2459
      %2461 = vmatmul.f32.gmra.mxu0 %v2254
      %v2462 = vpop.f32.mrf.mxu0
      %v2463 = vadd.f32 0.0, %v2462
      %2464 = vmatmul.f32.gmra.mxu0 %v2257
      %v2465 = vpop.f32.mrf.mxu0
      %v2466 = vadd.f32 0.0, %v2465
      %2467 = vmatmul.f32.gmra.mxu0 %v2260
      %v2468 = vpop.f32.mrf.mxu0
      %v2469 = vadd.f32 0.0, %v2468
      %2470 = vmatmul.f32.gmra.mxu0 %v2263
      %v2471 = vpop.f32.mrf.mxu0
      %v2472 = vadd.f32 0.0, %v2471
      %2473 = vmatmul.f32.gmra.mxu0 %v2266
      %v2474 = vpop.f32.mrf.mxu0
      %v2475 = vadd.f32 0.0, %v2474
      %2476 = vmatmul.f32.gmra.mxu0 %v2269
      %v2477 = vpop.f32.mrf.mxu0
      %v2478 = vadd.f32 0.0, %v2477
      %2479 = vmatmul.f32.gmra.mxu0 %v2272
      %v2480 = vpop.f32.mrf.mxu0
      %v2481 = vadd.f32 0.0, %v2480
      %2482 = vmatmul.f32.gmra.mxu0 %v2275
      %v2483 = vpop.f32.mrf.mxu0
      %v2484 = vadd.f32 0.0, %v2483
      %2485 = vmatmul.f32.gmra.mxu0 %v2278
      %v2486 = vpop.f32.mrf.mxu0
      %v2487 = vadd.f32 0.0, %v2486
      %2488 = vdwg.mxu0
      %v2489 = vadd.f32 %v1951, %v2298
      %v2490 = vadd.f32 %v1952, %v2301
      %v2491 = vadd.f32 %v1953, %v2304
      %v2492 = vadd.f32 %v1954, %v2307
      %v2493 = vadd.f32 %v1955, %v2310
      %v2494 = vadd.f32 %v1956, %v2313
      %v2495 = vadd.f32 %v1957, %v2316
      %v2496 = vadd.f32 %v1958, %v2319
      %v2497 = vadd.f32 %v1959, %v2322
      %v2498 = vadd.f32 %v1960, %v2325
      %v2499 = vadd.f32 %v1961, %v2328
      %v2500 = vadd.f32 %v1962, %v2331
      %v2501 = vadd.f32 %v1963, %v2334
      %v2502 = vadd.f32 %v1964, %v2337
      %v2503 = vadd.f32 %v1965, %v2340
      %v2504 = vadd.f32 %v1966, %v2343
      %v2505 = vadd.f32 %v1967, %v2346
      %v2506 = vadd.f32 %v1968, %v2349
      %v2507 = vadd.f32 %v1969, %v2352
      %v2508 = vadd.f32 %v1970, %v2355
      %v2509 = vadd.f32 %v1971, %v2358
      %v2510 = vadd.f32 %v1972, %v2361
      %v2511 = vadd.f32 %v1973, %v2364
      %v2512 = vadd.f32 %v1974, %v2367
      %v2513 = vadd.f32 %v1975, %v2370
      %v2514 = vadd.f32 %v1976, %v2373
      %v2515 = vadd.f32 %v1977, %v2376
      %v2516 = vadd.f32 %v1978, %v2379
      %v2517 = vadd.f32 %v1979, %v2382
      %v2518 = vadd.f32 %v1980, %v2385
      %v2519 = vadd.f32 %v1981, %v2388
      %v2520 = vadd.f32 %v1982, %v2391
      %v2521 = vadd.f32 %v1983, %v2394
      %v2522 = vadd.f32 %v1984, %v2397
      %v2523 = vadd.f32 %v1985, %v2400
      %v2524 = vadd.f32 %v1986, %v2403
      %v2525 = vadd.f32 %v1987, %v2406
      %v2526 = vadd.f32 %v1988, %v2409
      %v2527 = vadd.f32 %v1989, %v2412
      %v2528 = vadd.f32 %v1990, %v2415
      %v2529 = vadd.f32 %v1991, %v2418
      %v2530 = vadd.f32 %v1992, %v2421
      %v2531 = vadd.f32 %v1993, %v2424
      %v2532 = vadd.f32 %v1994, %v2427
      %v2533 = vadd.f32 %v1995, %v2430
      %v2534 = vadd.f32 %v1996, %v2433
      %v2535 = vadd.f32 %v1997, %v2436
      %v2536 = vadd.f32 %v1998, %v2439
      %v2537 = vadd.f32 %v1999, %v2442
      %v2538 = vadd.f32 %v2000, %v2445
      %v2539 = vadd.f32 %v2001, %v2448
      %v2540 = vadd.f32 %v2002, %v2451
      %v2541 = vadd.f32 %v2003, %v2454
      %v2542 = vadd.f32 %v2004, %v2457
      %v2543 = vadd.f32 %v2005, %v2460
      %v2544 = vadd.f32 %v2006, %v2463
      %v2545 = vadd.f32 %v2007, %v2466
      %v2546 = vadd.f32 %v2008, %v2469
      %v2547 = vadd.f32 %v2009, %v2472
      %v2548 = vadd.f32 %v2010, %v2475
      %v2549 = vadd.f32 %v2011, %v2478
      %v2550 = vadd.f32 %v2012, %v2481
      %v2551 = vadd.f32 %v2013, %v2484
      %v2552 = vadd.f32 %v2014, %v2487
      %v2553 = vld [vmem:[%s465 + $0x1] sm:$0xff]
      %v2554 = vld [vmem:[%s465 + $0x9] sm:$0xff]
      %v2555 = vld [vmem:[%s465 + $0x19] sm:$0xff]
      %v2556 = vld [vmem:[%s465 + $0x21] sm:$0xff]
      %v2557 = vld [vmem:[%s465 + $0x31] sm:$0xff]
      %v2558 = vld [vmem:[%s465 + $0x39] sm:$0xff]
      %v2559 = vld [vmem:[%s465 + $0x49] sm:$0xff]
      %v2560 = vld [vmem:[%s465 + $0x51] sm:$0xff]
      %v2561 = vld [vmem:[%s465 + $0x61] sm:$0xff]
      %v2562 = vld [vmem:[%s465 + $0x69] sm:$0xff]
      %v2563 = vld [vmem:[%s465 + $0x79] sm:$0xff]
      %v2564 = vld [vmem:[%s465 + $0x81] sm:$0xff]
      %v2565 = vld [vmem:[%s465 + $0x91] sm:$0xff]
      %v2566 = vld [vmem:[%s465 + $0x99] sm:$0xff]
      %v2567 = vld [vmem:[%s465 + $0xa9] sm:$0xff]
      %v2568 = vld [vmem:[%s465 + $0xb1] sm:$0xff]
      %v2569 = vld [vmem:[%s465 + $0xc1] sm:$0xff]
      %v2570 = vld [vmem:[%s465 + $0xc9] sm:$0xff]
      %v2571 = vld [vmem:[%s465 + $0xd9] sm:$0xff]
      %v2572 = vld [vmem:[%s465 + $0xe1] sm:$0xff]
      %v2573 = vld [vmem:[%s465 + $0xf1] sm:$0xff]
      %v2574 = vld [vmem:[%s465 + $0xf9] sm:$0xff]
      %v2575 = vld [vmem:[%s465 + $0x109] sm:$0xff]
      %v2576 = vld [vmem:[%s465 + $0x111] sm:$0xff]
      %v2577 = vld [vmem:[%s465 + $0x121] sm:$0xff]
      %v2578 = vld [vmem:[%s465 + $0x129] sm:$0xff]
      %v2579 = vld [vmem:[%s465 + $0x139] sm:$0xff]
      %v2580 = vld [vmem:[%s465 + $0x141] sm:$0xff]
      %v2581 = vld [vmem:[%s465 + $0x151] sm:$0xff]
      %v2582 = vld [vmem:[%s465 + $0x159] sm:$0xff]
      %v2583 = vld [vmem:[%s465 + $0x169] sm:$0xff]
      %v2584 = vld [vmem:[%s465 + $0x171] sm:$0xff]
      %v2585 = vld [vmem:[%s465 + $0x1b1] sm:$0xff]
      %v2586 = vld [vmem:[%s465 + $0x1b9] sm:$0xff]
      %v2587 = vld [vmem:[%s465 + $0x1c9] sm:$0xff]
      %v2588 = vld [vmem:[%s465 + $0x1d1] sm:$0xff]
      %v2589 = vld [vmem:[%s465 + $0x1e1] sm:$0xff]
      %v2590 = vld [vmem:[%s465 + $0x1e9] sm:$0xff]
      %v2591 = vld [vmem:[%s465 + $0x1f9] sm:$0xff]
      %v2592 = vld [vmem:[%s465 + $0x201] sm:$0xff]
      %v2593 = vld [vmem:[%s465 + $0x211] sm:$0xff]
      %v2594 = vld [vmem:[%s465 + $0x219] sm:$0xff]
      %v2595 = vld [vmem:[%s465 + $0x229] sm:$0xff]
      %v2596 = vld [vmem:[%s465 + $0x231] sm:$0xff]
      %v2597 = vld [vmem:[%s465 + $0x241] sm:$0xff]
      %v2598 = vld [vmem:[%s465 + $0x249] sm:$0xff]
      %v2599 = vld [vmem:[%s465 + $0x259] sm:$0xff]
      %v2600 = vld [vmem:[%s465 + $0x261] sm:$0xff]
      %v2601 = vld [vmem:[%s465 + $0x271] sm:$0xff]
      %v2602 = vld [vmem:[%s465 + $0x279] sm:$0xff]
      %v2603 = vld [vmem:[%s465 + $0x289] sm:$0xff]
      %v2604 = vld [vmem:[%s465 + $0x291] sm:$0xff]
      %v2605 = vld [vmem:[%s465 + $0x2a1] sm:$0xff]
      %v2606 = vld [vmem:[%s465 + $0x2a9] sm:$0xff]
      %v2607 = vld [vmem:[%s465 + $0x2b9] sm:$0xff]
      %v2608 = vld [vmem:[%s465 + $0x2c1] sm:$0xff]
      %v2609 = vld [vmem:[%s465 + $0x2d1] sm:$0xff]
      %v2610 = vld [vmem:[%s465 + $0x2d9] sm:$0xff]
      %v2611 = vld [vmem:[%s465 + $0x2e9] sm:$0xff]
      %v2612 = vld [vmem:[%s465 + $0x2f1] sm:$0xff]
      %v2613 = vld [vmem:[%s465 + $0x301] sm:$0xff]
      %v2614 = vld [vmem:[%s465 + $0x309] sm:$0xff]
      %v2615 = vld [vmem:[%s465 + $0x319] sm:$0xff]
      %v2616 = vld [vmem:[%s465 + $0x321] sm:$0xff]
      %s2617 = scalar_lea.vmem %s1, 256
      %v2618 = vld [vmem:[%s2617] sm:$0xff]
      %v2619 = vld [vmem:[%s2617 + $0x8] sm:$0xff]
      %v2620 = vld [vmem:[%s2617 + $0x10] sm:$0xff]
      %v2621 = vld [vmem:[%s2617 + $0x18] sm:$0xff]
      %v2622 = vld [vmem:[%s2617 + $0x20] sm:$0xff]
      %v2623 = vld [vmem:[%s2617 + $0x28] sm:$0xff]
      %v2624 = vld [vmem:[%s2617 + $0x30] sm:$0xff]
      %v2625 = vld [vmem:[%s2617 + $0x38] sm:$0xff]
      %v2627 = vsel %vm264, %v2553, 0
      %v2630 = vsel %vm264, %v2554, 0
      %v2633 = vsel %vm264, %v2555, 0
      %v2636 = vsel %vm264, %v2556, 0
      %v2639 = vsel %vm264, %v2557, 0
      %v2642 = vsel %vm264, %v2558, 0
      %v2645 = vsel %vm264, %v2559, 0
      %v2648 = vsel %vm264, %v2560, 0
      %v2651 = vsel %vm264, %v2561, 0
      %v2654 = vsel %vm264, %v2562, 0
      %v2657 = vsel %vm264, %v2563, 0
      %v2660 = vsel %vm264, %v2564, 0
      %v2663 = vsel %vm264, %v2565, 0
      %v2666 = vsel %vm264, %v2566, 0
      %v2669 = vsel %vm264, %v2567, 0
      %v2672 = vsel %vm264, %v2568, 0
      %v2675 = vsel %vm264, %v2569, 0
      %v2678 = vsel %vm264, %v2570, 0
      %v2681 = vsel %vm264, %v2571, 0
      %v2684 = vsel %vm264, %v2572, 0
      %v2687 = vsel %vm264, %v2573, 0
      %v2690 = vsel %vm264, %v2574, 0
      %v2693 = vsel %vm264, %v2575, 0
      %v2696 = vsel %vm264, %v2576, 0
      %v2699 = vsel %vm264, %v2577, 0
      %v2702 = vsel %vm264, %v2578, 0
      %v2705 = vsel %vm264, %v2579, 0
      %v2708 = vsel %vm264, %v2580, 0
      %v2711 = vsel %vm264, %v2581, 0
      %v2714 = vsel %vm264, %v2582, 0
      %v2717 = vsel %vm264, %v2583, 0
      %v2720 = vsel %vm264, %v2584, 0
      %v2723 = vsel %vm264, %v2585, 0
      %v2726 = vsel %vm264, %v2586, 0
      %v2729 = vsel %vm264, %v2587, 0
      %v2732 = vsel %vm264, %v2588, 0
      %v2735 = vsel %vm264, %v2589, 0
      %v2738 = vsel %vm264, %v2590, 0
      %v2741 = vsel %vm264, %v2591, 0
      %v2744 = vsel %vm264, %v2592, 0
      %v2747 = vsel %vm264, %v2593, 0
      %v2750 = vsel %vm264, %v2594, 0
      %v2753 = vsel %vm264, %v2595, 0
      %v2756 = vsel %vm264, %v2596, 0
      %v2759 = vsel %vm264, %v2597, 0
      %v2762 = vsel %vm264, %v2598, 0
      %v2765 = vsel %vm264, %v2599, 0
      %v2768 = vsel %vm264, %v2600, 0
      %v2771 = vsel %vm264, %v2601, 0
      %v2774 = vsel %vm264, %v2602, 0
      %v2777 = vsel %vm264, %v2603, 0
      %v2780 = vsel %vm264, %v2604, 0
      %v2783 = vsel %vm264, %v2605, 0
      %v2786 = vsel %vm264, %v2606, 0
      %v2789 = vsel %vm264, %v2607, 0
      %v2792 = vsel %vm264, %v2608, 0
      %v2795 = vsel %vm264, %v2609, 0
      %v2798 = vsel %vm264, %v2610, 0
      %v2801 = vsel %vm264, %v2611, 0
      %v2804 = vsel %vm264, %v2612, 0
      %v2807 = vsel %vm264, %v2613, 0
      %v2810 = vsel %vm264, %v2614, 0
      %v2813 = vsel %vm264, %v2615, 0
      %v2816 = vsel %vm264, %v2616, 0
      %2818 = vmatpush.msra.mxu0 0.0
      %2819 = vmatpush.msra.mxu0 0.0
      %2820 = vmatpush.msra.mxu0 0.0
      %2821 = vmatpush.msra.mxu0 0.0
      %2822 = vmatpush.msra.mxu0 0.0
      %2823 = vmatpush.msra.mxu0 0.0
      %2824 = vmatpush.msra.mxu0 0.0
      %2825 = vmatpush.msra.mxu0 0.0
      %2826 = vmatpush.msra.mxu0 %v2625
      %2827 = vmatpush.msra.mxu0 %v2624
      %2828 = vmatpush.msra.mxu0 %v2623
      %2829 = vmatpush.msra.mxu0 %v2622
      %2830 = vmatpush.msra.mxu0 %v2621
      %2831 = vmatpush.msra.mxu0 %v2620
      %2832 = vmatpush.msra.mxu0 %v2619
      %2833 = vmatpush.msra.mxu0 %v2618
      %2834 = vmatmul.f32.gmra.mxu0 %v2627
      %v2835 = vpop.f32.mrf.mxu0
      %v2836 = vadd.f32 0.0, %v2835
      %2837 = vmatmul.f32.gmra.mxu0 %v2630
      %v2838 = vpop.f32.mrf.mxu0
      %v2839 = vadd.f32 0.0, %v2838
      %2840 = vmatmul.f32.gmra.mxu0 %v2633
      %v2841 = vpop.f32.mrf.mxu0
      %v2842 = vadd.f32 0.0, %v2841
      %2843 = vmatmul.f32.gmra.mxu0 %v2636
      %v2844 = vpop.f32.mrf.mxu0
      %v2845 = vadd.f32 0.0, %v2844
      %2846 = vmatmul.f32.gmra.mxu0 %v2639
      %v2847 = vpop.f32.mrf.mxu0
      %v2848 = vadd.f32 0.0, %v2847
      %2849 = vmatmul.f32.gmra.mxu0 %v2642
      %v2850 = vpop.f32.mrf.mxu0
      %v2851 = vadd.f32 0.0, %v2850
      %2852 = vmatmul.f32.gmra.mxu0 %v2645
      %v2853 = vpop.f32.mrf.mxu0
      %v2854 = vadd.f32 0.0, %v2853
      %2855 = vmatmul.f32.gmra.mxu0 %v2648
      %v2856 = vpop.f32.mrf.mxu0
      %v2857 = vadd.f32 0.0, %v2856
      %2858 = vmatmul.f32.gmra.mxu0 %v2651
      %v2859 = vpop.f32.mrf.mxu0
      %v2860 = vadd.f32 0.0, %v2859
      %2861 = vmatmul.f32.gmra.mxu0 %v2654
      %v2862 = vpop.f32.mrf.mxu0
      %v2863 = vadd.f32 0.0, %v2862
      %2864 = vmatmul.f32.gmra.mxu0 %v2657
      %v2865 = vpop.f32.mrf.mxu0
      %v2866 = vadd.f32 0.0, %v2865
      %2867 = vmatmul.f32.gmra.mxu0 %v2660
      %v2868 = vpop.f32.mrf.mxu0
      %v2869 = vadd.f32 0.0, %v2868
      %2870 = vmatmul.f32.gmra.mxu0 %v2663
      %v2871 = vpop.f32.mrf.mxu0
      %v2872 = vadd.f32 0.0, %v2871
      %2873 = vmatmul.f32.gmra.mxu0 %v2666
      %v2874 = vpop.f32.mrf.mxu0
      %v2875 = vadd.f32 0.0, %v2874
      %2876 = vmatmul.f32.gmra.mxu0 %v2669
      %v2877 = vpop.f32.mrf.mxu0
      %v2878 = vadd.f32 0.0, %v2877
      %2879 = vmatmul.f32.gmra.mxu0 %v2672
      %v2880 = vpop.f32.mrf.mxu0
      %v2881 = vadd.f32 0.0, %v2880
      %2882 = vmatmul.f32.gmra.mxu0 %v2675
      %v2883 = vpop.f32.mrf.mxu0
      %v2884 = vadd.f32 0.0, %v2883
      %2885 = vmatmul.f32.gmra.mxu0 %v2678
      %v2886 = vpop.f32.mrf.mxu0
      %v2887 = vadd.f32 0.0, %v2886
      %2888 = vmatmul.f32.gmra.mxu0 %v2681
      %v2889 = vpop.f32.mrf.mxu0
      %v2890 = vadd.f32 0.0, %v2889
      %2891 = vmatmul.f32.gmra.mxu0 %v2684
      %v2892 = vpop.f32.mrf.mxu0
      %v2893 = vadd.f32 0.0, %v2892
      %2894 = vmatmul.f32.gmra.mxu0 %v2687
      %v2895 = vpop.f32.mrf.mxu0
      %v2896 = vadd.f32 0.0, %v2895
      %2897 = vmatmul.f32.gmra.mxu0 %v2690
      %v2898 = vpop.f32.mrf.mxu0
      %v2899 = vadd.f32 0.0, %v2898
      %2900 = vmatmul.f32.gmra.mxu0 %v2693
      %v2901 = vpop.f32.mrf.mxu0
      %v2902 = vadd.f32 0.0, %v2901
      %2903 = vmatmul.f32.gmra.mxu0 %v2696
      %v2904 = vpop.f32.mrf.mxu0
      %v2905 = vadd.f32 0.0, %v2904
      %2906 = vmatmul.f32.gmra.mxu0 %v2699
      %v2907 = vpop.f32.mrf.mxu0
      %v2908 = vadd.f32 0.0, %v2907
      %2909 = vmatmul.f32.gmra.mxu0 %v2702
      %v2910 = vpop.f32.mrf.mxu0
      %v2911 = vadd.f32 0.0, %v2910
      %2912 = vmatmul.f32.gmra.mxu0 %v2705
      %v2913 = vpop.f32.mrf.mxu0
      %v2914 = vadd.f32 0.0, %v2913
      %2915 = vmatmul.f32.gmra.mxu0 %v2708
      %v2916 = vpop.f32.mrf.mxu0
      %v2917 = vadd.f32 0.0, %v2916
      %2918 = vmatmul.f32.gmra.mxu0 %v2711
      %v2919 = vpop.f32.mrf.mxu0
      %v2920 = vadd.f32 0.0, %v2919
      %2921 = vmatmul.f32.gmra.mxu0 %v2714
      %v2922 = vpop.f32.mrf.mxu0
      %v2923 = vadd.f32 0.0, %v2922
      %2924 = vmatmul.f32.gmra.mxu0 %v2717
      %v2925 = vpop.f32.mrf.mxu0
      %v2926 = vadd.f32 0.0, %v2925
      %2927 = vmatmul.f32.gmra.mxu0 %v2720
      %v2928 = vpop.f32.mrf.mxu0
      %v2929 = vadd.f32 0.0, %v2928
      %2930 = vmatmul.f32.gmra.mxu0 %v2723
      %v2931 = vpop.f32.mrf.mxu0
      %v2932 = vadd.f32 0.0, %v2931
      %2933 = vmatmul.f32.gmra.mxu0 %v2726
      %v2934 = vpop.f32.mrf.mxu0
      %v2935 = vadd.f32 0.0, %v2934
      %2936 = vmatmul.f32.gmra.mxu0 %v2729
      %v2937 = vpop.f32.mrf.mxu0
      %v2938 = vadd.f32 0.0, %v2937
      %2939 = vmatmul.f32.gmra.mxu0 %v2732
      %v2940 = vpop.f32.mrf.mxu0
      %v2941 = vadd.f32 0.0, %v2940
      %2942 = vmatmul.f32.gmra.mxu0 %v2735
      %v2943 = vpop.f32.mrf.mxu0
      %v2944 = vadd.f32 0.0, %v2943
      %2945 = vmatmul.f32.gmra.mxu0 %v2738
      %v2946 = vpop.f32.mrf.mxu0
      %v2947 = vadd.f32 0.0, %v2946
      %2948 = vmatmul.f32.gmra.mxu0 %v2741
      %v2949 = vpop.f32.mrf.mxu0
      %v2950 = vadd.f32 0.0, %v2949
      %2951 = vmatmul.f32.gmra.mxu0 %v2744
      %v2952 = vpop.f32.mrf.mxu0
      %v2953 = vadd.f32 0.0, %v2952
      %2954 = vmatmul.f32.gmra.mxu0 %v2747
      %v2955 = vpop.f32.mrf.mxu0
      %v2956 = vadd.f32 0.0, %v2955
      %2957 = vmatmul.f32.gmra.mxu0 %v2750
      %v2958 = vpop.f32.mrf.mxu0
      %v2959 = vadd.f32 0.0, %v2958
      %2960 = vmatmul.f32.gmra.mxu0 %v2753
      %v2961 = vpop.f32.mrf.mxu0
      %v2962 = vadd.f32 0.0, %v2961
      %2963 = vmatmul.f32.gmra.mxu0 %v2756
      %v2964 = vpop.f32.mrf.mxu0
      %v2965 = vadd.f32 0.0, %v2964
      %2966 = vmatmul.f32.gmra.mxu0 %v2759
      %v2967 = vpop.f32.mrf.mxu0
      %v2968 = vadd.f32 0.0, %v2967
      %2969 = vmatmul.f32.gmra.mxu0 %v2762
      %v2970 = vpop.f32.mrf.mxu0
      %v2971 = vadd.f32 0.0, %v2970
      %2972 = vmatmul.f32.gmra.mxu0 %v2765
      %v2973 = vpop.f32.mrf.mxu0
      %v2974 = vadd.f32 0.0, %v2973
      %2975 = vmatmul.f32.gmra.mxu0 %v2768
      %v2976 = vpop.f32.mrf.mxu0
      %v2977 = vadd.f32 0.0, %v2976
      %2978 = vmatmul.f32.gmra.mxu0 %v2771
      %v2979 = vpop.f32.mrf.mxu0
      %v2980 = vadd.f32 0.0, %v2979
      %2981 = vmatmul.f32.gmra.mxu0 %v2774
      %v2982 = vpop.f32.mrf.mxu0
      %v2983 = vadd.f32 0.0, %v2982
      %2984 = vmatmul.f32.gmra.mxu0 %v2777
      %v2985 = vpop.f32.mrf.mxu0
      %v2986 = vadd.f32 0.0, %v2985
      %2987 = vmatmul.f32.gmra.mxu0 %v2780
      %v2988 = vpop.f32.mrf.mxu0
      %v2989 = vadd.f32 0.0, %v2988
      %2990 = vmatmul.f32.gmra.mxu0 %v2783
      %v2991 = vpop.f32.mrf.mxu0
      %v2992 = vadd.f32 0.0, %v2991
      %2993 = vmatmul.f32.gmra.mxu0 %v2786
      %v2994 = vpop.f32.mrf.mxu0
      %v2995 = vadd.f32 0.0, %v2994
      %2996 = vmatmul.f32.gmra.mxu0 %v2789
      %v2997 = vpop.f32.mrf.mxu0
      %v2998 = vadd.f32 0.0, %v2997
      %2999 = vmatmul.f32.gmra.mxu0 %v2792
      %v3000 = vpop.f32.mrf.mxu0
      %v3001 = vadd.f32 0.0, %v3000
      %3002 = vmatmul.f32.gmra.mxu0 %v2795
      %v3003 = vpop.f32.mrf.mxu0
      %v3004 = vadd.f32 0.0, %v3003
      %3005 = vmatmul.f32.gmra.mxu0 %v2798
      %v3006 = vpop.f32.mrf.mxu0
      %v3007 = vadd.f32 0.0, %v3006
      %3008 = vmatmul.f32.gmra.mxu0 %v2801
      %v3009 = vpop.f32.mrf.mxu0
      %v3010 = vadd.f32 0.0, %v3009
      %3011 = vmatmul.f32.gmra.mxu0 %v2804
      %v3012 = vpop.f32.mrf.mxu0
      %v3013 = vadd.f32 0.0, %v3012
      %3014 = vmatmul.f32.gmra.mxu0 %v2807
      %v3015 = vpop.f32.mrf.mxu0
      %v3016 = vadd.f32 0.0, %v3015
      %3017 = vmatmul.f32.gmra.mxu0 %v2810
      %v3018 = vpop.f32.mrf.mxu0
      %v3019 = vadd.f32 0.0, %v3018
      %3020 = vmatmul.f32.gmra.mxu0 %v2813
      %v3021 = vpop.f32.mrf.mxu0
      %v3022 = vadd.f32 0.0, %v3021
      %3023 = vmatmul.f32.gmra.mxu0 %v2816
      %v3024 = vpop.f32.mrf.mxu0
      %v3025 = vadd.f32 0.0, %v3024
      %3026 = vdwg.mxu0
      %v3027 = vadd.f32 %v2489, %v2836
      %v3028 = vadd.f32 %v2490, %v2839
      %v3029 = vadd.f32 %v2491, %v2842
      %v3030 = vadd.f32 %v2492, %v2845
      %v3031 = vadd.f32 %v2493, %v2848
      %v3032 = vadd.f32 %v2494, %v2851
      %v3033 = vadd.f32 %v2495, %v2854
      %v3034 = vadd.f32 %v2496, %v2857
      %v3035 = vadd.f32 %v2497, %v2860
      %v3036 = vadd.f32 %v2498, %v2863
      %v3037 = vadd.f32 %v2499, %v2866
      %v3038 = vadd.f32 %v2500, %v2869
      %v3039 = vadd.f32 %v2501, %v2872
      %v3040 = vadd.f32 %v2502, %v2875
      %v3041 = vadd.f32 %v2503, %v2878
      %v3042 = vadd.f32 %v2504, %v2881
      %v3043 = vadd.f32 %v2505, %v2884
      %v3044 = vadd.f32 %v2506, %v2887
      %v3045 = vadd.f32 %v2507, %v2890
      %v3046 = vadd.f32 %v2508, %v2893
      %v3047 = vadd.f32 %v2509, %v2896
      %v3048 = vadd.f32 %v2510, %v2899
      %v3049 = vadd.f32 %v2511, %v2902
      %v3050 = vadd.f32 %v2512, %v2905
      %v3051 = vadd.f32 %v2513, %v2908
      %v3052 = vadd.f32 %v2514, %v2911
      %v3053 = vadd.f32 %v2515, %v2914
      %v3054 = vadd.f32 %v2516, %v2917
      %v3055 = vadd.f32 %v2517, %v2920
      %v3056 = vadd.f32 %v2518, %v2923
      %v3057 = vadd.f32 %v2519, %v2926
      %v3058 = vadd.f32 %v2520, %v2929
      %v3059 = vadd.f32 %v2521, %v2932
      %v3060 = vadd.f32 %v2522, %v2935
      %v3061 = vadd.f32 %v2523, %v2938
      %v3062 = vadd.f32 %v2524, %v2941
      %v3063 = vadd.f32 %v2525, %v2944
      %v3064 = vadd.f32 %v2526, %v2947
      %v3065 = vadd.f32 %v2527, %v2950
      %v3066 = vadd.f32 %v2528, %v2953
      %v3067 = vadd.f32 %v2529, %v2956
      %v3068 = vadd.f32 %v2530, %v2959
      %v3069 = vadd.f32 %v2531, %v2962
      %v3070 = vadd.f32 %v2532, %v2965
      %v3071 = vadd.f32 %v2533, %v2968
      %v3072 = vadd.f32 %v2534, %v2971
      %v3073 = vadd.f32 %v2535, %v2974
      %v3074 = vadd.f32 %v2536, %v2977
      %v3075 = vadd.f32 %v2537, %v2980
      %v3076 = vadd.f32 %v2538, %v2983
      %v3077 = vadd.f32 %v2539, %v2986
      %v3078 = vadd.f32 %v2540, %v2989
      %v3079 = vadd.f32 %v2541, %v2992
      %v3080 = vadd.f32 %v2542, %v2995
      %v3081 = vadd.f32 %v2543, %v2998
      %v3082 = vadd.f32 %v2544, %v3001
      %v3083 = vadd.f32 %v2545, %v3004
      %v3084 = vadd.f32 %v2546, %v3007
      %v3085 = vadd.f32 %v2547, %v3010
      %v3086 = vadd.f32 %v2548, %v3013
      %v3087 = vadd.f32 %v2549, %v3016
      %v3088 = vadd.f32 %v2550, %v3019
      %v3089 = vadd.f32 %v2551, %v3022
      %v3090 = vadd.f32 %v2552, %v3025
      %v3091 = vld [vmem:[%s465 + $0x2] sm:$0xff]
      %v3092 = vld [vmem:[%s465 + $0xa] sm:$0xff]
      %v3093 = vld [vmem:[%s465 + $0x1a] sm:$0xff]
      %v3094 = vld [vmem:[%s465 + $0x22] sm:$0xff]
      %v3095 = vld [vmem:[%s465 + $0x32] sm:$0xff]
      %v3096 = vld [vmem:[%s465 + $0x3a] sm:$0xff]
      %v3097 = vld [vmem:[%s465 + $0x4a] sm:$0xff]
      %v3098 = vld [vmem:[%s465 + $0x52] sm:$0xff]
      %v3099 = vld [vmem:[%s465 + $0x62] sm:$0xff]
      %v3100 = vld [vmem:[%s465 + $0x6a] sm:$0xff]
      %v3101 = vld [vmem:[%s465 + $0x7a] sm:$0xff]
      %v3102 = vld [vmem:[%s465 + $0x82] sm:$0xff]
      %v3103 = vld [vmem:[%s465 + $0x92] sm:$0xff]
      %v3104 = vld [vmem:[%s465 + $0x9a] sm:$0xff]
      %v3105 = vld [vmem:[%s465 + $0xaa] sm:$0xff]
      %v3106 = vld [vmem:[%s465 + $0xb2] sm:$0xff]
      %v3107 = vld [vmem:[%s465 + $0xc2] sm:$0xff]
      %v3108 = vld [vmem:[%s465 + $0xca] sm:$0xff]
      %v3109 = vld [vmem:[%s465 + $0xda] sm:$0xff]
      %v3110 = vld [vmem:[%s465 + $0xe2] sm:$0xff]
      %v3111 = vld [vmem:[%s465 + $0xf2] sm:$0xff]
      %v3112 = vld [vmem:[%s465 + $0xfa] sm:$0xff]
      %v3113 = vld [vmem:[%s465 + $0x10a] sm:$0xff]
      %v3114 = vld [vmem:[%s465 + $0x112] sm:$0xff]
      %v3115 = vld [vmem:[%s465 + $0x122] sm:$0xff]
      %v3116 = vld [vmem:[%s465 + $0x12a] sm:$0xff]
      %v3117 = vld [vmem:[%s465 + $0x13a] sm:$0xff]
      %v3118 = vld [vmem:[%s465 + $0x142] sm:$0xff]
      %v3119 = vld [vmem:[%s465 + $0x152] sm:$0xff]
      %v3120 = vld [vmem:[%s465 + $0x15a] sm:$0xff]
      %v3121 = vld [vmem:[%s465 + $0x16a] sm:$0xff]
      %v3122 = vld [vmem:[%s465 + $0x172] sm:$0xff]
      %v3123 = vld [vmem:[%s465 + $0x1b2] sm:$0xff]
      %v3124 = vld [vmem:[%s465 + $0x1ba] sm:$0xff]
      %v3125 = vld [vmem:[%s465 + $0x1ca] sm:$0xff]
      %v3126 = vld [vmem:[%s465 + $0x1d2] sm:$0xff]
      %v3127 = vld [vmem:[%s465 + $0x1e2] sm:$0xff]
      %v3128 = vld [vmem:[%s465 + $0x1ea] sm:$0xff]
      %v3129 = vld [vmem:[%s465 + $0x1fa] sm:$0xff]
      %v3130 = vld [vmem:[%s465 + $0x202] sm:$0xff]
      %v3131 = vld [vmem:[%s465 + $0x212] sm:$0xff]
      %v3132 = vld [vmem:[%s465 + $0x21a] sm:$0xff]
      %v3133 = vld [vmem:[%s465 + $0x22a] sm:$0xff]
      %v3134 = vld [vmem:[%s465 + $0x232] sm:$0xff]
      %v3135 = vld [vmem:[%s465 + $0x242] sm:$0xff]
      %v3136 = vld [vmem:[%s465 + $0x24a] sm:$0xff]
      %v3137 = vld [vmem:[%s465 + $0x25a] sm:$0xff]
      %v3138 = vld [vmem:[%s465 + $0x262] sm:$0xff]
      %v3139 = vld [vmem:[%s465 + $0x272] sm:$0xff]
      %v3140 = vld [vmem:[%s465 + $0x27a] sm:$0xff]
      %v3141 = vld [vmem:[%s465 + $0x28a] sm:$0xff]
      %v3142 = vld [vmem:[%s465 + $0x292] sm:$0xff]
      %v3143 = vld [vmem:[%s465 + $0x2a2] sm:$0xff]
      %v3144 = vld [vmem:[%s465 + $0x2aa] sm:$0xff]
      %v3145 = vld [vmem:[%s465 + $0x2ba] sm:$0xff]
      %v3146 = vld [vmem:[%s465 + $0x2c2] sm:$0xff]
      %v3147 = vld [vmem:[%s465 + $0x2d2] sm:$0xff]
      %v3148 = vld [vmem:[%s465 + $0x2da] sm:$0xff]
      %v3149 = vld [vmem:[%s465 + $0x2ea] sm:$0xff]
      %v3150 = vld [vmem:[%s465 + $0x2f2] sm:$0xff]
      %v3151 = vld [vmem:[%s465 + $0x302] sm:$0xff]
      %v3152 = vld [vmem:[%s465 + $0x30a] sm:$0xff]
      %v3153 = vld [vmem:[%s465 + $0x31a] sm:$0xff]
      %v3154 = vld [vmem:[%s465 + $0x322] sm:$0xff]
      %s3155 = scalar_lea.vmem %s1, 320
      %v3156 = vld [vmem:[%s3155] sm:$0xff]
      %v3157 = vld [vmem:[%s3155 + $0x8] sm:$0xff]
      %v3158 = vld [vmem:[%s3155 + $0x10] sm:$0xff]
      %v3159 = vld [vmem:[%s3155 + $0x18] sm:$0xff]
      %v3160 = vld [vmem:[%s3155 + $0x20] sm:$0xff]
      %v3161 = vld [vmem:[%s3155 + $0x28] sm:$0xff]
      %v3162 = vld [vmem:[%s3155 + $0x30] sm:$0xff]
      %v3163 = vld [vmem:[%s3155 + $0x38] sm:$0xff]
      %v3165 = vsel %vm264, %v3091, 0
      %v3168 = vsel %vm264, %v3092, 0
      %v3171 = vsel %vm264, %v3093, 0
      %v3174 = vsel %vm264, %v3094, 0
      %v3177 = vsel %vm264, %v3095, 0
      %v3180 = vsel %vm264, %v3096, 0
      %v3183 = vsel %vm264, %v3097, 0
      %v3186 = vsel %vm264, %v3098, 0
      %v3189 = vsel %vm264, %v3099, 0
      %v3192 = vsel %vm264, %v3100, 0
      %v3195 = vsel %vm264, %v3101, 0
      %v3198 = vsel %vm264, %v3102, 0
      %v3201 = vsel %vm264, %v3103, 0
      %v3204 = vsel %vm264, %v3104, 0
      %v3207 = vsel %vm264, %v3105, 0
      %v3210 = vsel %vm264, %v3106, 0
      %v3213 = vsel %vm264, %v3107, 0
      %v3216 = vsel %vm264, %v3108, 0
      %v3219 = vsel %vm264, %v3109, 0
      %v3222 = vsel %vm264, %v3110, 0
      %v3225 = vsel %vm264, %v3111, 0
      %v3228 = vsel %vm264, %v3112, 0
      %v3231 = vsel %vm264, %v3113, 0
      %v3234 = vsel %vm264, %v3114, 0
      %v3237 = vsel %vm264, %v3115, 0
      %v3240 = vsel %vm264, %v3116, 0
      %v3243 = vsel %vm264, %v3117, 0
      %v3246 = vsel %vm264, %v3118, 0
      %v3249 = vsel %vm264, %v3119, 0
      %v3252 = vsel %vm264, %v3120, 0
      %v3255 = vsel %vm264, %v3121, 0
      %v3258 = vsel %vm264, %v3122, 0
      %v3261 = vsel %vm264, %v3123, 0
      %v3264 = vsel %vm264, %v3124, 0
      %v3267 = vsel %vm264, %v3125, 0
      %v3270 = vsel %vm264, %v3126, 0
      %v3273 = vsel %vm264, %v3127, 0
      %v3276 = vsel %vm264, %v3128, 0
      %v3279 = vsel %vm264, %v3129, 0
      %v3282 = vsel %vm264, %v3130, 0
      %v3285 = vsel %vm264, %v3131, 0
      %v3288 = vsel %vm264, %v3132, 0
      %v3291 = vsel %vm264, %v3133, 0
      %v3294 = vsel %vm264, %v3134, 0
      %v3297 = vsel %vm264, %v3135, 0
      %v3300 = vsel %vm264, %v3136, 0
      %v3303 = vsel %vm264, %v3137, 0
      %v3306 = vsel %vm264, %v3138, 0
      %v3309 = vsel %vm264, %v3139, 0
      %v3312 = vsel %vm264, %v3140, 0
      %v3315 = vsel %vm264, %v3141, 0
      %v3318 = vsel %vm264, %v3142, 0
      %v3321 = vsel %vm264, %v3143, 0
      %v3324 = vsel %vm264, %v3144, 0
      %v3327 = vsel %vm264, %v3145, 0
      %v3330 = vsel %vm264, %v3146, 0
      %v3333 = vsel %vm264, %v3147, 0
      %v3336 = vsel %vm264, %v3148, 0
      %v3339 = vsel %vm264, %v3149, 0
      %v3342 = vsel %vm264, %v3150, 0
      %v3345 = vsel %vm264, %v3151, 0
      %v3348 = vsel %vm264, %v3152, 0
      %v3351 = vsel %vm264, %v3153, 0
      %v3354 = vsel %vm264, %v3154, 0
      %3356 = vmatpush.msra.mxu0 0.0
      %3357 = vmatpush.msra.mxu0 0.0
      %3358 = vmatpush.msra.mxu0 0.0
      %3359 = vmatpush.msra.mxu0 0.0
      %3360 = vmatpush.msra.mxu0 0.0
      %3361 = vmatpush.msra.mxu0 0.0
      %3362 = vmatpush.msra.mxu0 0.0
      %3363 = vmatpush.msra.mxu0 0.0
      %3364 = vmatpush.msra.mxu0 %v3163
      %3365 = vmatpush.msra.mxu0 %v3162
      %3366 = vmatpush.msra.mxu0 %v3161
      %3367 = vmatpush.msra.mxu0 %v3160
      %3368 = vmatpush.msra.mxu0 %v3159
      %3369 = vmatpush.msra.mxu0 %v3158
      %3370 = vmatpush.msra.mxu0 %v3157
      %3371 = vmatpush.msra.mxu0 %v3156
      %3372 = vmatmul.f32.gmra.mxu0 %v3165
      %v3373 = vpop.f32.mrf.mxu0
      %v3374 = vadd.f32 0.0, %v3373
      %3375 = vmatmul.f32.gmra.mxu0 %v3168
      %v3376 = vpop.f32.mrf.mxu0
      %v3377 = vadd.f32 0.0, %v3376
      %3378 = vmatmul.f32.gmra.mxu0 %v3171
      %v3379 = vpop.f32.mrf.mxu0
      %v3380 = vadd.f32 0.0, %v3379
      %3381 = vmatmul.f32.gmra.mxu0 %v3174
      %v3382 = vpop.f32.mrf.mxu0
      %v3383 = vadd.f32 0.0, %v3382
      %3384 = vmatmul.f32.gmra.mxu0 %v3177
      %v3385 = vpop.f32.mrf.mxu0
      %v3386 = vadd.f32 0.0, %v3385
      %3387 = vmatmul.f32.gmra.mxu0 %v3180
      %v3388 = vpop.f32.mrf.mxu0
      %v3389 = vadd.f32 0.0, %v3388
      %3390 = vmatmul.f32.gmra.mxu0 %v3183
      %v3391 = vpop.f32.mrf.mxu0
      %v3392 = vadd.f32 0.0, %v3391
      %3393 = vmatmul.f32.gmra.mxu0 %v3186
      %v3394 = vpop.f32.mrf.mxu0
      %v3395 = vadd.f32 0.0, %v3394
      %3396 = vmatmul.f32.gmra.mxu0 %v3189
      %v3397 = vpop.f32.mrf.mxu0
      %v3398 = vadd.f32 0.0, %v3397
      %3399 = vmatmul.f32.gmra.mxu0 %v3192
      %v3400 = vpop.f32.mrf.mxu0
      %v3401 = vadd.f32 0.0, %v3400
      %3402 = vmatmul.f32.gmra.mxu0 %v3195
      %v3403 = vpop.f32.mrf.mxu0
      %v3404 = vadd.f32 0.0, %v3403
      %3405 = vmatmul.f32.gmra.mxu0 %v3198
      %v3406 = vpop.f32.mrf.mxu0
      %v3407 = vadd.f32 0.0, %v3406
      %3408 = vmatmul.f32.gmra.mxu0 %v3201
      %v3409 = vpop.f32.mrf.mxu0
      %v3410 = vadd.f32 0.0, %v3409
      %3411 = vmatmul.f32.gmra.mxu0 %v3204
      %v3412 = vpop.f32.mrf.mxu0
      %v3413 = vadd.f32 0.0, %v3412
      %3414 = vmatmul.f32.gmra.mxu0 %v3207
      %v3415 = vpop.f32.mrf.mxu0
      %v3416 = vadd.f32 0.0, %v3415
      %3417 = vmatmul.f32.gmra.mxu0 %v3210
      %v3418 = vpop.f32.mrf.mxu0
      %v3419 = vadd.f32 0.0, %v3418
      %3420 = vmatmul.f32.gmra.mxu0 %v3213
      %v3421 = vpop.f32.mrf.mxu0
      %v3422 = vadd.f32 0.0, %v3421
      %3423 = vmatmul.f32.gmra.mxu0 %v3216
      %v3424 = vpop.f32.mrf.mxu0
      %v3425 = vadd.f32 0.0, %v3424
      %3426 = vmatmul.f32.gmra.mxu0 %v3219
      %v3427 = vpop.f32.mrf.mxu0
      %v3428 = vadd.f32 0.0, %v3427
      %3429 = vmatmul.f32.gmra.mxu0 %v3222
      %v3430 = vpop.f32.mrf.mxu0
      %v3431 = vadd.f32 0.0, %v3430
      %3432 = vmatmul.f32.gmra.mxu0 %v3225
      %v3433 = vpop.f32.mrf.mxu0
      %v3434 = vadd.f32 0.0, %v3433
      %3435 = vmatmul.f32.gmra.mxu0 %v3228
      %v3436 = vpop.f32.mrf.mxu0
      %v3437 = vadd.f32 0.0, %v3436
      %3438 = vmatmul.f32.gmra.mxu0 %v3231
      %v3439 = vpop.f32.mrf.mxu0
      %v3440 = vadd.f32 0.0, %v3439
      %3441 = vmatmul.f32.gmra.mxu0 %v3234
      %v3442 = vpop.f32.mrf.mxu0
      %v3443 = vadd.f32 0.0, %v3442
      %3444 = vmatmul.f32.gmra.mxu0 %v3237
      %v3445 = vpop.f32.mrf.mxu0
      %v3446 = vadd.f32 0.0, %v3445
      %3447 = vmatmul.f32.gmra.mxu0 %v3240
      %v3448 = vpop.f32.mrf.mxu0
      %v3449 = vadd.f32 0.0, %v3448
      %3450 = vmatmul.f32.gmra.mxu0 %v3243
      %v3451 = vpop.f32.mrf.mxu0
      %v3452 = vadd.f32 0.0, %v3451
      %3453 = vmatmul.f32.gmra.mxu0 %v3246
      %v3454 = vpop.f32.mrf.mxu0
      %v3455 = vadd.f32 0.0, %v3454
      %3456 = vmatmul.f32.gmra.mxu0 %v3249
      %v3457 = vpop.f32.mrf.mxu0
      %v3458 = vadd.f32 0.0, %v3457
      %3459 = vmatmul.f32.gmra.mxu0 %v3252
      %v3460 = vpop.f32.mrf.mxu0
      %v3461 = vadd.f32 0.0, %v3460
      %3462 = vmatmul.f32.gmra.mxu0 %v3255
      %v3463 = vpop.f32.mrf.mxu0
      %v3464 = vadd.f32 0.0, %v3463
      %3465 = vmatmul.f32.gmra.mxu0 %v3258
      %v3466 = vpop.f32.mrf.mxu0
      %v3467 = vadd.f32 0.0, %v3466
      %3468 = vmatmul.f32.gmra.mxu0 %v3261
      %v3469 = vpop.f32.mrf.mxu0
      %v3470 = vadd.f32 0.0, %v3469
      %3471 = vmatmul.f32.gmra.mxu0 %v3264
      %v3472 = vpop.f32.mrf.mxu0
      %v3473 = vadd.f32 0.0, %v3472
      %3474 = vmatmul.f32.gmra.mxu0 %v3267
      %v3475 = vpop.f32.mrf.mxu0
      %v3476 = vadd.f32 0.0, %v3475
      %3477 = vmatmul.f32.gmra.mxu0 %v3270
      %v3478 = vpop.f32.mrf.mxu0
      %v3479 = vadd.f32 0.0, %v3478
      %3480 = vmatmul.f32.gmra.mxu0 %v3273
      %v3481 = vpop.f32.mrf.mxu0
      %v3482 = vadd.f32 0.0, %v3481
      %3483 = vmatmul.f32.gmra.mxu0 %v3276
      %v3484 = vpop.f32.mrf.mxu0
      %v3485 = vadd.f32 0.0, %v3484
      %3486 = vmatmul.f32.gmra.mxu0 %v3279
      %v3487 = vpop.f32.mrf.mxu0
      %v3488 = vadd.f32 0.0, %v3487
      %3489 = vmatmul.f32.gmra.mxu0 %v3282
      %v3490 = vpop.f32.mrf.mxu0
      %v3491 = vadd.f32 0.0, %v3490
      %3492 = vmatmul.f32.gmra.mxu0 %v3285
      %v3493 = vpop.f32.mrf.mxu0
      %v3494 = vadd.f32 0.0, %v3493
      %3495 = vmatmul.f32.gmra.mxu0 %v3288
      %v3496 = vpop.f32.mrf.mxu0
      %v3497 = vadd.f32 0.0, %v3496
      %3498 = vmatmul.f32.gmra.mxu0 %v3291
      %v3499 = vpop.f32.mrf.mxu0
      %v3500 = vadd.f32 0.0, %v3499
      %3501 = vmatmul.f32.gmra.mxu0 %v3294
      %v3502 = vpop.f32.mrf.mxu0
      %v3503 = vadd.f32 0.0, %v3502
      %3504 = vmatmul.f32.gmra.mxu0 %v3297
      %v3505 = vpop.f32.mrf.mxu0
      %v3506 = vadd.f32 0.0, %v3505
      %3507 = vmatmul.f32.gmra.mxu0 %v3300
      %v3508 = vpop.f32.mrf.mxu0
      %v3509 = vadd.f32 0.0, %v3508
      %3510 = vmatmul.f32.gmra.mxu0 %v3303
      %v3511 = vpop.f32.mrf.mxu0
      %v3512 = vadd.f32 0.0, %v3511
      %3513 = vmatmul.f32.gmra.mxu0 %v3306
      %v3514 = vpop.f32.mrf.mxu0
      %v3515 = vadd.f32 0.0, %v3514
      %3516 = vmatmul.f32.gmra.mxu0 %v3309
      %v3517 = vpop.f32.mrf.mxu0
      %v3518 = vadd.f32 0.0, %v3517
      %3519 = vmatmul.f32.gmra.mxu0 %v3312
      %v3520 = vpop.f32.mrf.mxu0
      %v3521 = vadd.f32 0.0, %v3520
      %3522 = vmatmul.f32.gmra.mxu0 %v3315
      %v3523 = vpop.f32.mrf.mxu0
      %v3524 = vadd.f32 0.0, %v3523
      %3525 = vmatmul.f32.gmra.mxu0 %v3318
      %v3526 = vpop.f32.mrf.mxu0
      %v3527 = vadd.f32 0.0, %v3526
      %3528 = vmatmul.f32.gmra.mxu0 %v3321
      %v3529 = vpop.f32.mrf.mxu0
      %v3530 = vadd.f32 0.0, %v3529
      %3531 = vmatmul.f32.gmra.mxu0 %v3324
      %v3532 = vpop.f32.mrf.mxu0
      %v3533 = vadd.f32 0.0, %v3532
      %3534 = vmatmul.f32.gmra.mxu0 %v3327
      %v3535 = vpop.f32.mrf.mxu0
      %v3536 = vadd.f32 0.0, %v3535
      %3537 = vmatmul.f32.gmra.mxu0 %v3330
      %v3538 = vpop.f32.mrf.mxu0
      %v3539 = vadd.f32 0.0, %v3538
      %3540 = vmatmul.f32.gmra.mxu0 %v3333
      %v3541 = vpop.f32.mrf.mxu0
      %v3542 = vadd.f32 0.0, %v3541
      %3543 = vmatmul.f32.gmra.mxu0 %v3336
      %v3544 = vpop.f32.mrf.mxu0
      %v3545 = vadd.f32 0.0, %v3544
      %3546 = vmatmul.f32.gmra.mxu0 %v3339
      %v3547 = vpop.f32.mrf.mxu0
      %v3548 = vadd.f32 0.0, %v3547
      %3549 = vmatmul.f32.gmra.mxu0 %v3342
      %v3550 = vpop.f32.mrf.mxu0
      %v3551 = vadd.f32 0.0, %v3550
      %3552 = vmatmul.f32.gmra.mxu0 %v3345
      %v3553 = vpop.f32.mrf.mxu0
      %v3554 = vadd.f32 0.0, %v3553
      %3555 = vmatmul.f32.gmra.mxu0 %v3348
      %v3556 = vpop.f32.mrf.mxu0
      %v3557 = vadd.f32 0.0, %v3556
      %3558 = vmatmul.f32.gmra.mxu0 %v3351
      %v3559 = vpop.f32.mrf.mxu0
      %v3560 = vadd.f32 0.0, %v3559
      %3561 = vmatmul.f32.gmra.mxu0 %v3354
      %v3562 = vpop.f32.mrf.mxu0
      %v3563 = vadd.f32 0.0, %v3562
      %3564 = vdwg.mxu0
      %v3565 = vadd.f32 %v3027, %v3374
      %v3566 = vadd.f32 %v3028, %v3377
      %v3567 = vadd.f32 %v3029, %v3380
      %v3568 = vadd.f32 %v3030, %v3383
      %v3569 = vadd.f32 %v3031, %v3386
      %v3570 = vadd.f32 %v3032, %v3389
      %v3571 = vadd.f32 %v3033, %v3392
      %v3572 = vadd.f32 %v3034, %v3395
      %v3573 = vadd.f32 %v3035, %v3398
      %v3574 = vadd.f32 %v3036, %v3401
      %v3575 = vadd.f32 %v3037, %v3404
      %v3576 = vadd.f32 %v3038, %v3407
      %v3577 = vadd.f32 %v3039, %v3410
      %v3578 = vadd.f32 %v3040, %v3413
      %v3579 = vadd.f32 %v3041, %v3416
      %v3580 = vadd.f32 %v3042, %v3419
      %v3581 = vadd.f32 %v3043, %v3422
      %v3582 = vadd.f32 %v3044, %v3425
      %v3583 = vadd.f32 %v3045, %v3428
      %v3584 = vadd.f32 %v3046, %v3431
      %v3585 = vadd.f32 %v3047, %v3434
      %v3586 = vadd.f32 %v3048, %v3437
      %v3587 = vadd.f32 %v3049, %v3440
      %v3588 = vadd.f32 %v3050, %v3443
      %v3589 = vadd.f32 %v3051, %v3446
      %v3590 = vadd.f32 %v3052, %v3449
      %v3591 = vadd.f32 %v3053, %v3452
      %v3592 = vadd.f32 %v3054, %v3455
      %v3593 = vadd.f32 %v3055, %v3458
      %v3594 = vadd.f32 %v3056, %v3461
      %v3595 = vadd.f32 %v3057, %v3464
      %v3596 = vadd.f32 %v3058, %v3467
      %v3597 = vadd.f32 %v3059, %v3470
      %v3598 = vadd.f32 %v3060, %v3473
      %v3599 = vadd.f32 %v3061, %v3476
      %v3600 = vadd.f32 %v3062, %v3479
      %v3601 = vadd.f32 %v3063, %v3482
      %v3602 = vadd.f32 %v3064, %v3485
      %v3603 = vadd.f32 %v3065, %v3488
      %v3604 = vadd.f32 %v3066, %v3491
      %v3605 = vadd.f32 %v3067, %v3494
      %v3606 = vadd.f32 %v3068, %v3497
      %v3607 = vadd.f32 %v3069, %v3500
      %v3608 = vadd.f32 %v3070, %v3503
      %v3609 = vadd.f32 %v3071, %v3506
      %v3610 = vadd.f32 %v3072, %v3509
      %v3611 = vadd.f32 %v3073, %v3512
      %v3612 = vadd.f32 %v3074, %v3515
      %v3613 = vadd.f32 %v3075, %v3518
      %v3614 = vadd.f32 %v3076, %v3521
      %v3615 = vadd.f32 %v3077, %v3524
      %v3616 = vadd.f32 %v3078, %v3527
      %v3617 = vadd.f32 %v3079, %v3530
      %v3618 = vadd.f32 %v3080, %v3533
      %v3619 = vadd.f32 %v3081, %v3536
      %v3620 = vadd.f32 %v3082, %v3539
      %v3621 = vadd.f32 %v3083, %v3542
      %v3622 = vadd.f32 %v3084, %v3545
      %v3623 = vadd.f32 %v3085, %v3548
      %v3624 = vadd.f32 %v3086, %v3551
      %v3625 = vadd.f32 %v3087, %v3554
      %v3626 = vadd.f32 %v3088, %v3557
      %v3627 = vadd.f32 %v3089, %v3560
      %v3628 = vadd.f32 %v3090, %v3563
      %s3629 = scalar_lea.vmem [#allocation2], 48
      %v3630 = vld [vmem:[%s3629] sm:$0xff]
      %v3631 = vld [vmem:[%s3629 + $0x8] sm:$0xff]
      %v3632 = vld [vmem:[%s3629 + $0x18] sm:$0xff]
      %v3633 = vld [vmem:[%s3629 + $0x20] sm:$0xff]
      %v3634 = vld [vmem:[%s3629 + $0x30] sm:$0xff]
      %v3635 = vld [vmem:[%s3629 + $0x38] sm:$0xff]
      %v3636 = vld [vmem:[%s3629 + $0x48] sm:$0xff]
      %v3637 = vld [vmem:[%s3629 + $0x50] sm:$0xff]
      %v3638 = vld [vmem:[%s3629 + $0x60] sm:$0xff]
      %v3639 = vld [vmem:[%s3629 + $0x68] sm:$0xff]
      %v3640 = vld [vmem:[%s3629 + $0x78] sm:$0xff]
      %v3641 = vld [vmem:[%s3629 + $0x80] sm:$0xff]
      %v3642 = vld [vmem:[%s3629 + $0x90] sm:$0xff]
      %v3643 = vld [vmem:[%s3629 + $0x98] sm:$0xff]
      %v3644 = vld [vmem:[%s3629 + $0xa8] sm:$0xff]
      %v3645 = vld [vmem:[%s3629 + $0xb0] sm:$0xff]
      %v3646 = vld [vmem:[%s3629 + $0xc0] sm:$0xff]
      %v3647 = vld [vmem:[%s3629 + $0xc8] sm:$0xff]
      %v3648 = vld [vmem:[%s3629 + $0xd8] sm:$0xff]
      %v3649 = vld [vmem:[%s3629 + $0xe0] sm:$0xff]
      %v3650 = vld [vmem:[%s3629 + $0xf0] sm:$0xff]
      %v3651 = vld [vmem:[%s3629 + $0xf8] sm:$0xff]
      %v3652 = vld [vmem:[%s3629 + $0x108] sm:$0xff]
      %v3653 = vld [vmem:[%s3629 + $0x110] sm:$0xff]
      %v3654 = vld [vmem:[%s3629 + $0x120] sm:$0xff]
      %v3655 = vld [vmem:[%s3629 + $0x128] sm:$0xff]
      %v3656 = vld [vmem:[%s3629 + $0x138] sm:$0xff]
      %v3657 = vld [vmem:[%s3629 + $0x140] sm:$0xff]
      %v3658 = vld [vmem:[%s3629 + $0x150] sm:$0xff]
      %v3659 = vld [vmem:[%s3629 + $0x158] sm:$0xff]
      %v3660 = vld [vmem:[%s3629 + $0x168] sm:$0xff]
      %v3661 = vld [vmem:[%s3629 + $0x170] sm:$0xff]
      %v3662 = vld [vmem:[%s3629 + $0x1b0] sm:$0xff]
      %v3663 = vld [vmem:[%s3629 + $0x1b8] sm:$0xff]
      %v3664 = vld [vmem:[%s3629 + $0x1c8] sm:$0xff]
      %v3665 = vld [vmem:[%s3629 + $0x1d0] sm:$0xff]
      %v3666 = vld [vmem:[%s3629 + $0x1e0] sm:$0xff]
      %v3667 = vld [vmem:[%s3629 + $0x1e8] sm:$0xff]
      %v3668 = vld [vmem:[%s3629 + $0x1f8] sm:$0xff]
      %v3669 = vld [vmem:[%s3629 + $0x200] sm:$0xff]
      %v3670 = vld [vmem:[%s3629 + $0x210] sm:$0xff]
      %v3671 = vld [vmem:[%s3629 + $0x218] sm:$0xff]
      %v3672 = vld [vmem:[%s3629 + $0x228] sm:$0xff]
      %v3673 = vld [vmem:[%s3629 + $0x230] sm:$0xff]
      %v3674 = vld [vmem:[%s3629 + $0x240] sm:$0xff]
      %v3675 = vld [vmem:[%s3629 + $0x248] sm:$0xff]
      %v3676 = vld [vmem:[%s3629 + $0x258] sm:$0xff]
      %v3677 = vld [vmem:[%s3629 + $0x260] sm:$0xff]
      %v3678 = vld [vmem:[%s3629 + $0x270] sm:$0xff]
      %v3679 = vld [vmem:[%s3629 + $0x278] sm:$0xff]
      %v3680 = vld [vmem:[%s3629 + $0x288] sm:$0xff]
      %v3681 = vld [vmem:[%s3629 + $0x290] sm:$0xff]
      %v3682 = vld [vmem:[%s3629 + $0x2a0] sm:$0xff]
      %v3683 = vld [vmem:[%s3629 + $0x2a8] sm:$0xff]
      %v3684 = vld [vmem:[%s3629 + $0x2b8] sm:$0xff]
      %v3685 = vld [vmem:[%s3629 + $0x2c0] sm:$0xff]
      %v3686 = vld [vmem:[%s3629 + $0x2d0] sm:$0xff]
      %v3687 = vld [vmem:[%s3629 + $0x2d8] sm:$0xff]
      %v3688 = vld [vmem:[%s3629 + $0x2e8] sm:$0xff]
      %v3689 = vld [vmem:[%s3629 + $0x2f0] sm:$0xff]
      %v3690 = vld [vmem:[%s3629 + $0x300] sm:$0xff]
      %v3691 = vld [vmem:[%s3629 + $0x308] sm:$0xff]
      %v3692 = vld [vmem:[%s3629 + $0x318] sm:$0xff]
      %v3693 = vld [vmem:[%s3629 + $0x320] sm:$0xff]
      %s3694 = scalar_lea.vmem %s1, 384
      %v3695 = vld [vmem:[%s3694] sm:$0xff]
      %v3696 = vld [vmem:[%s3694 + $0x8] sm:$0xff]
      %v3697 = vld [vmem:[%s3694 + $0x10] sm:$0xff]
      %v3698 = vld [vmem:[%s3694 + $0x18] sm:$0xff]
      %v3699 = vld [vmem:[%s3694 + $0x20] sm:$0xff]
      %v3700 = vld [vmem:[%s3694 + $0x28] sm:$0xff]
      %v3701 = vld [vmem:[%s3694 + $0x30] sm:$0xff]
      %v3702 = vld [vmem:[%s3694 + $0x38] sm:$0xff]
      %v3704 = vsel %vm264, %v3630, 0
      %v3707 = vsel %vm264, %v3631, 0
      %v3710 = vsel %vm264, %v3632, 0
      %v3713 = vsel %vm264, %v3633, 0
      %v3716 = vsel %vm264, %v3634, 0
      %v3719 = vsel %vm264, %v3635, 0
      %v3722 = vsel %vm264, %v3636, 0
      %v3725 = vsel %vm264, %v3637, 0
      %v3728 = vsel %vm264, %v3638, 0
      %v3731 = vsel %vm264, %v3639, 0
      %v3734 = vsel %vm264, %v3640, 0
      %v3737 = vsel %vm264, %v3641, 0
      %v3740 = vsel %vm264, %v3642, 0
      %v3743 = vsel %vm264, %v3643, 0
      %v3746 = vsel %vm264, %v3644, 0
      %v3749 = vsel %vm264, %v3645, 0
      %v3752 = vsel %vm264, %v3646, 0
      %v3755 = vsel %vm264, %v3647, 0
      %v3758 = vsel %vm264, %v3648, 0
      %v3761 = vsel %vm264, %v3649, 0
      %v3764 = vsel %vm264, %v3650, 0
      %v3767 = vsel %vm264, %v3651, 0
      %v3770 = vsel %vm264, %v3652, 0
      %v3773 = vsel %vm264, %v3653, 0
      %v3776 = vsel %vm264, %v3654, 0
      %v3779 = vsel %vm264, %v3655, 0
      %v3782 = vsel %vm264, %v3656, 0
      %v3785 = vsel %vm264, %v3657, 0
      %v3788 = vsel %vm264, %v3658, 0
      %v3791 = vsel %vm264, %v3659, 0
      %v3794 = vsel %vm264, %v3660, 0
      %v3797 = vsel %vm264, %v3661, 0
      %v3800 = vsel %vm264, %v3662, 0
      %v3803 = vsel %vm264, %v3663, 0
      %v3806 = vsel %vm264, %v3664, 0
      %v3809 = vsel %vm264, %v3665, 0
      %v3812 = vsel %vm264, %v3666, 0
      %v3815 = vsel %vm264, %v3667, 0
      %v3818 = vsel %vm264, %v3668, 0
      %v3821 = vsel %vm264, %v3669, 0
      %v3824 = vsel %vm264, %v3670, 0
      %v3827 = vsel %vm264, %v3671, 0
      %v3830 = vsel %vm264, %v3672, 0
      %v3833 = vsel %vm264, %v3673, 0
      %v3836 = vsel %vm264, %v3674, 0
      %v3839 = vsel %vm264, %v3675, 0
      %v3842 = vsel %vm264, %v3676, 0
      %v3845 = vsel %vm264, %v3677, 0
      %v3848 = vsel %vm264, %v3678, 0
      %v3851 = vsel %vm264, %v3679, 0
      %v3854 = vsel %vm264, %v3680, 0
      %v3857 = vsel %vm264, %v3681, 0
      %v3860 = vsel %vm264, %v3682, 0
      %v3863 = vsel %vm264, %v3683, 0
      %v3866 = vsel %vm264, %v3684, 0
      %v3869 = vsel %vm264, %v3685, 0
      %v3872 = vsel %vm264, %v3686, 0
      %v3875 = vsel %vm264, %v3687, 0
      %v3878 = vsel %vm264, %v3688, 0
      %v3881 = vsel %vm264, %v3689, 0
      %v3884 = vsel %vm264, %v3690, 0
      %v3887 = vsel %vm264, %v3691, 0
      %v3890 = vsel %vm264, %v3692, 0
      %v3893 = vsel %vm264, %v3693, 0
      %3895 = vmatpush.msra.mxu0 0.0
      %3896 = vmatpush.msra.mxu0 0.0
      %3897 = vmatpush.msra.mxu0 0.0
      %3898 = vmatpush.msra.mxu0 0.0
      %3899 = vmatpush.msra.mxu0 0.0
      %3900 = vmatpush.msra.mxu0 0.0
      %3901 = vmatpush.msra.mxu0 0.0
      %3902 = vmatpush.msra.mxu0 0.0
      %3903 = vmatpush.msra.mxu0 %v3702
      %3904 = vmatpush.msra.mxu0 %v3701
      %3905 = vmatpush.msra.mxu0 %v3700
      %3906 = vmatpush.msra.mxu0 %v3699
      %3907 = vmatpush.msra.mxu0 %v3698
      %3908 = vmatpush.msra.mxu0 %v3697
      %3909 = vmatpush.msra.mxu0 %v3696
      %3910 = vmatpush.msra.mxu0 %v3695
      %3911 = vmatmul.f32.gmra.mxu0 %v3704
      %v3912 = vpop.f32.mrf.mxu0
      %v3913 = vadd.f32 0.0, %v3912
      %3914 = vmatmul.f32.gmra.mxu0 %v3707
      %v3915 = vpop.f32.mrf.mxu0
      %v3916 = vadd.f32 0.0, %v3915
      %3917 = vmatmul.f32.gmra.mxu0 %v3710
      %v3918 = vpop.f32.mrf.mxu0
      %v3919 = vadd.f32 0.0, %v3918
      %3920 = vmatmul.f32.gmra.mxu0 %v3713
      %v3921 = vpop.f32.mrf.mxu0
      %v3922 = vadd.f32 0.0, %v3921
      %3923 = vmatmul.f32.gmra.mxu0 %v3716
      %v3924 = vpop.f32.mrf.mxu0
      %v3925 = vadd.f32 0.0, %v3924
      %3926 = vmatmul.f32.gmra.mxu0 %v3719
      %v3927 = vpop.f32.mrf.mxu0
      %v3928 = vadd.f32 0.0, %v3927
      %3929 = vmatmul.f32.gmra.mxu0 %v3722
      %v3930 = vpop.f32.mrf.mxu0
      %v3931 = vadd.f32 0.0, %v3930
      %3932 = vmatmul.f32.gmra.mxu0 %v3725
      %v3933 = vpop.f32.mrf.mxu0
      %v3934 = vadd.f32 0.0, %v3933
      %3935 = vmatmul.f32.gmra.mxu0 %v3728
      %v3936 = vpop.f32.mrf.mxu0
      %v3937 = vadd.f32 0.0, %v3936
      %3938 = vmatmul.f32.gmra.mxu0 %v3731
      %v3939 = vpop.f32.mrf.mxu0
      %v3940 = vadd.f32 0.0, %v3939
      %3941 = vmatmul.f32.gmra.mxu0 %v3734
      %v3942 = vpop.f32.mrf.mxu0
      %v3943 = vadd.f32 0.0, %v3942
      %3944 = vmatmul.f32.gmra.mxu0 %v3737
      %v3945 = vpop.f32.mrf.mxu0
      %v3946 = vadd.f32 0.0, %v3945
      %3947 = vmatmul.f32.gmra.mxu0 %v3740
      %v3948 = vpop.f32.mrf.mxu0
      %v3949 = vadd.f32 0.0, %v3948
      %3950 = vmatmul.f32.gmra.mxu0 %v3743
      %v3951 = vpop.f32.mrf.mxu0
      %v3952 = vadd.f32 0.0, %v3951
      %3953 = vmatmul.f32.gmra.mxu0 %v3746
      %v3954 = vpop.f32.mrf.mxu0
      %v3955 = vadd.f32 0.0, %v3954
      %3956 = vmatmul.f32.gmra.mxu0 %v3749
      %v3957 = vpop.f32.mrf.mxu0
      %v3958 = vadd.f32 0.0, %v3957
      %3959 = vmatmul.f32.gmra.mxu0 %v3752
      %v3960 = vpop.f32.mrf.mxu0
      %v3961 = vadd.f32 0.0, %v3960
      %3962 = vmatmul.f32.gmra.mxu0 %v3755
      %v3963 = vpop.f32.mrf.mxu0
      %v3964 = vadd.f32 0.0, %v3963
      %3965 = vmatmul.f32.gmra.mxu0 %v3758
      %v3966 = vpop.f32.mrf.mxu0
      %v3967 = vadd.f32 0.0, %v3966
      %3968 = vmatmul.f32.gmra.mxu0 %v3761
      %v3969 = vpop.f32.mrf.mxu0
      %v3970 = vadd.f32 0.0, %v3969
      %3971 = vmatmul.f32.gmra.mxu0 %v3764
      %v3972 = vpop.f32.mrf.mxu0
      %v3973 = vadd.f32 0.0, %v3972
      %3974 = vmatmul.f32.gmra.mxu0 %v3767
      %v3975 = vpop.f32.mrf.mxu0
      %v3976 = vadd.f32 0.0, %v3975
      %3977 = vmatmul.f32.gmra.mxu0 %v3770
      %v3978 = vpop.f32.mrf.mxu0
      %v3979 = vadd.f32 0.0, %v3978
      %3980 = vmatmul.f32.gmra.mxu0 %v3773
      %v3981 = vpop.f32.mrf.mxu0
      %v3982 = vadd.f32 0.0, %v3981
      %3983 = vmatmul.f32.gmra.mxu0 %v3776
      %v3984 = vpop.f32.mrf.mxu0
      %v3985 = vadd.f32 0.0, %v3984
      %3986 = vmatmul.f32.gmra.mxu0 %v3779
      %v3987 = vpop.f32.mrf.mxu0
      %v3988 = vadd.f32 0.0, %v3987
      %3989 = vmatmul.f32.gmra.mxu0 %v3782
      %v3990 = vpop.f32.mrf.mxu0
      %v3991 = vadd.f32 0.0, %v3990
      %3992 = vmatmul.f32.gmra.mxu0 %v3785
      %v3993 = vpop.f32.mrf.mxu0
      %v3994 = vadd.f32 0.0, %v3993
      %3995 = vmatmul.f32.gmra.mxu0 %v3788
      %v3996 = vpop.f32.mrf.mxu0
      %v3997 = vadd.f32 0.0, %v3996
      %3998 = vmatmul.f32.gmra.mxu0 %v3791
      %v3999 = vpop.f32.mrf.mxu0
      %v4000 = vadd.f32 0.0, %v3999
      %4001 = vmatmul.f32.gmra.mxu0 %v3794
      %v4002 = vpop.f32.mrf.mxu0
      %v4003 = vadd.f32 0.0, %v4002
      %4004 = vmatmul.f32.gmra.mxu0 %v3797
      %v4005 = vpop.f32.mrf.mxu0
      %v4006 = vadd.f32 0.0, %v4005
      %4007 = vmatmul.f32.gmra.mxu0 %v3800
      %v4008 = vpop.f32.mrf.mxu0
      %v4009 = vadd.f32 0.0, %v4008
      %4010 = vmatmul.f32.gmra.mxu0 %v3803
      %v4011 = vpop.f32.mrf.mxu0
      %v4012 = vadd.f32 0.0, %v4011
      %4013 = vmatmul.f32.gmra.mxu0 %v3806
      %v4014 = vpop.f32.mrf.mxu0
      %v4015 = vadd.f32 0.0, %v4014
      %4016 = vmatmul.f32.gmra.mxu0 %v3809
      %v4017 = vpop.f32.mrf.mxu0
      %v4018 = vadd.f32 0.0, %v4017
      %4019 = vmatmul.f32.gmra.mxu0 %v3812
      %v4020 = vpop.f32.mrf.mxu0
      %v4021 = vadd.f32 0.0, %v4020
      %4022 = vmatmul.f32.gmra.mxu0 %v3815
      %v4023 = vpop.f32.mrf.mxu0
      %v4024 = vadd.f32 0.0, %v4023
      %4025 = vmatmul.f32.gmra.mxu0 %v3818
      %v4026 = vpop.f32.mrf.mxu0
      %v4027 = vadd.f32 0.0, %v4026
      %4028 = vmatmul.f32.gmra.mxu0 %v3821
      %v4029 = vpop.f32.mrf.mxu0
      %v4030 = vadd.f32 0.0, %v4029
      %4031 = vmatmul.f32.gmra.mxu0 %v3824
      %v4032 = vpop.f32.mrf.mxu0
      %v4033 = vadd.f32 0.0, %v4032
      %4034 = vmatmul.f32.gmra.mxu0 %v3827
      %v4035 = vpop.f32.mrf.mxu0
      %v4036 = vadd.f32 0.0, %v4035
      %4037 = vmatmul.f32.gmra.mxu0 %v3830
      %v4038 = vpop.f32.mrf.mxu0
      %v4039 = vadd.f32 0.0, %v4038
      %4040 = vmatmul.f32.gmra.mxu0 %v3833
      %v4041 = vpop.f32.mrf.mxu0
      %v4042 = vadd.f32 0.0, %v4041
      %4043 = vmatmul.f32.gmra.mxu0 %v3836
      %v4044 = vpop.f32.mrf.mxu0
      %v4045 = vadd.f32 0.0, %v4044
      %4046 = vmatmul.f32.gmra.mxu0 %v3839
      %v4047 = vpop.f32.mrf.mxu0
      %v4048 = vadd.f32 0.0, %v4047
      %4049 = vmatmul.f32.gmra.mxu0 %v3842
      %v4050 = vpop.f32.mrf.mxu0
      %v4051 = vadd.f32 0.0, %v4050
      %4052 = vmatmul.f32.gmra.mxu0 %v3845
      %v4053 = vpop.f32.mrf.mxu0
      %v4054 = vadd.f32 0.0, %v4053
      %4055 = vmatmul.f32.gmra.mxu0 %v3848
      %v4056 = vpop.f32.mrf.mxu0
      %v4057 = vadd.f32 0.0, %v4056
      %4058 = vmatmul.f32.gmra.mxu0 %v3851
      %v4059 = vpop.f32.mrf.mxu0
      %v4060 = vadd.f32 0.0, %v4059
      %4061 = vmatmul.f32.gmra.mxu0 %v3854
      %v4062 = vpop.f32.mrf.mxu0
      %v4063 = vadd.f32 0.0, %v4062
      %4064 = vmatmul.f32.gmra.mxu0 %v3857
      %v4065 = vpop.f32.mrf.mxu0
      %v4066 = vadd.f32 0.0, %v4065
      %4067 = vmatmul.f32.gmra.mxu0 %v3860
      %v4068 = vpop.f32.mrf.mxu0
      %v4069 = vadd.f32 0.0, %v4068
      %4070 = vmatmul.f32.gmra.mxu0 %v3863
      %v4071 = vpop.f32.mrf.mxu0
      %v4072 = vadd.f32 0.0, %v4071
      %4073 = vmatmul.f32.gmra.mxu0 %v3866
      %v4074 = vpop.f32.mrf.mxu0
      %v4075 = vadd.f32 0.0, %v4074
      %4076 = vmatmul.f32.gmra.mxu0 %v3869
      %v4077 = vpop.f32.mrf.mxu0
      %v4078 = vadd.f32 0.0, %v4077
      %4079 = vmatmul.f32.gmra.mxu0 %v3872
      %v4080 = vpop.f32.mrf.mxu0
      %v4081 = vadd.f32 0.0, %v4080
      %4082 = vmatmul.f32.gmra.mxu0 %v3875
      %v4083 = vpop.f32.mrf.mxu0
      %v4084 = vadd.f32 0.0, %v4083
      %4085 = vmatmul.f32.gmra.mxu0 %v3878
      %v4086 = vpop.f32.mrf.mxu0
      %v4087 = vadd.f32 0.0, %v4086
      %4088 = vmatmul.f32.gmra.mxu0 %v3881
      %v4089 = vpop.f32.mrf.mxu0
      %v4090 = vadd.f32 0.0, %v4089
      %4091 = vmatmul.f32.gmra.mxu0 %v3884
      %v4092 = vpop.f32.mrf.mxu0
      %v4093 = vadd.f32 0.0, %v4092
      %4094 = vmatmul.f32.gmra.mxu0 %v3887
      %v4095 = vpop.f32.mrf.mxu0
      %v4096 = vadd.f32 0.0, %v4095
      %4097 = vmatmul.f32.gmra.mxu0 %v3890
      %v4098 = vpop.f32.mrf.mxu0
      %v4099 = vadd.f32 0.0, %v4098
      %4100 = vmatmul.f32.gmra.mxu0 %v3893
      %v4101 = vpop.f32.mrf.mxu0
      %v4102 = vadd.f32 0.0, %v4101
      %4103 = vdwg.mxu0
      %v4104 = vadd.f32 %v3565, %v3913
      %v4105 = vadd.f32 %v3566, %v3916
      %v4106 = vadd.f32 %v3567, %v3919
      %v4107 = vadd.f32 %v3568, %v3922
      %v4108 = vadd.f32 %v3569, %v3925
      %v4109 = vadd.f32 %v3570, %v3928
      %v4110 = vadd.f32 %v3571, %v3931
      %v4111 = vadd.f32 %v3572, %v3934
      %v4112 = vadd.f32 %v3573, %v3937
      %v4113 = vadd.f32 %v3574, %v3940
      %v4114 = vadd.f32 %v3575, %v3943
      %v4115 = vadd.f32 %v3576, %v3946
      %v4116 = vadd.f32 %v3577, %v3949
      %v4117 = vadd.f32 %v3578, %v3952
      %v4118 = vadd.f32 %v3579, %v3955
      %v4119 = vadd.f32 %v3580, %v3958
      %v4120 = vadd.f32 %v3581, %v3961
      %v4121 = vadd.f32 %v3582, %v3964
      %v4122 = vadd.f32 %v3583, %v3967
      %v4123 = vadd.f32 %v3584, %v3970
      %v4124 = vadd.f32 %v3585, %v3973
      %v4125 = vadd.f32 %v3586, %v3976
      %v4126 = vadd.f32 %v3587, %v3979
      %v4127 = vadd.f32 %v3588, %v3982
      %v4128 = vadd.f32 %v3589, %v3985
      %v4129 = vadd.f32 %v3590, %v3988
      %v4130 = vadd.f32 %v3591, %v3991
      %v4131 = vadd.f32 %v3592, %v3994
      %v4132 = vadd.f32 %v3593, %v3997
      %v4133 = vadd.f32 %v3594, %v4000
      %v4134 = vadd.f32 %v3595, %v4003
      %v4135 = vadd.f32 %v3596, %v4006
      %v4136 = vadd.f32 %v3597, %v4009
      %v4137 = vadd.f32 %v3598, %v4012
      %v4138 = vadd.f32 %v3599, %v4015
      %v4139 = vadd.f32 %v3600, %v4018
      %v4140 = vadd.f32 %v3601, %v4021
      %v4141 = vadd.f32 %v3602, %v4024
      %v4142 = vadd.f32 %v3603, %v4027
      %v4143 = vadd.f32 %v3604, %v4030
      %v4144 = vadd.f32 %v3605, %v4033
      %v4145 = vadd.f32 %v3606, %v4036
      %v4146 = vadd.f32 %v3607, %v4039
      %v4147 = vadd.f32 %v3608, %v4042
      %v4148 = vadd.f32 %v3609, %v4045
      %v4149 = vadd.f32 %v3610, %v4048
      %v4150 = vadd.f32 %v3611, %v4051
      %v4151 = vadd.f32 %v3612, %v4054
      %v4152 = vadd.f32 %v3613, %v4057
      %v4153 = vadd.f32 %v3614, %v4060
      %v4154 = vadd.f32 %v3615, %v4063
      %v4155 = vadd.f32 %v3616, %v4066
      %v4156 = vadd.f32 %v3617, %v4069
      %v4157 = vadd.f32 %v3618, %v4072
      %v4158 = vadd.f32 %v3619, %v4075
      %v4159 = vadd.f32 %v3620, %v4078
      %v4160 = vadd.f32 %v3621, %v4081
      %v4161 = vadd.f32 %v3622, %v4084
      %v4162 = vadd.f32 %v3623, %v4087
      %v4163 = vadd.f32 %v3624, %v4090
      %v4164 = vadd.f32 %v3625, %v4093
      %v4165 = vadd.f32 %v3626, %v4096
      %v4166 = vadd.f32 %v3627, %v4099
      %v4167 = vadd.f32 %v3628, %v4102
      %v4168 = vld [vmem:[%s3629 + $0x1] sm:$0xff]
      %v4169 = vld [vmem:[%s3629 + $0x9] sm:$0xff]
      %v4170 = vld [vmem:[%s3629 + $0x19] sm:$0xff]
      %v4171 = vld [vmem:[%s3629 + $0x21] sm:$0xff]
      %v4172 = vld [vmem:[%s3629 + $0x31] sm:$0xff]
      %v4173 = vld [vmem:[%s3629 + $0x39] sm:$0xff]
      %v4174 = vld [vmem:[%s3629 + $0x49] sm:$0xff]
      %v4175 = vld [vmem:[%s3629 + $0x51] sm:$0xff]
      %v4176 = vld [vmem:[%s3629 + $0x61] sm:$0xff]
      %v4177 = vld [vmem:[%s3629 + $0x69] sm:$0xff]
      %v4178 = vld [vmem:[%s3629 + $0x79] sm:$0xff]
      %v4179 = vld [vmem:[%s3629 + $0x81] sm:$0xff]
      %v4180 = vld [vmem:[%s3629 + $0x91] sm:$0xff]
      %v4181 = vld [vmem:[%s3629 + $0x99] sm:$0xff]
      %v4182 = vld [vmem:[%s3629 + $0xa9] sm:$0xff]
      %v4183 = vld [vmem:[%s3629 + $0xb1] sm:$0xff]
      %v4184 = vld [vmem:[%s3629 + $0xc1] sm:$0xff]
      %v4185 = vld [vmem:[%s3629 + $0xc9] sm:$0xff]
      %v4186 = vld [vmem:[%s3629 + $0xd9] sm:$0xff]
      %v4187 = vld [vmem:[%s3629 + $0xe1] sm:$0xff]
      %v4188 = vld [vmem:[%s3629 + $0xf1] sm:$0xff]
      %v4189 = vld [vmem:[%s3629 + $0xf9] sm:$0xff]
      %v4190 = vld [vmem:[%s3629 + $0x109] sm:$0xff]
      %v4191 = vld [vmem:[%s3629 + $0x111] sm:$0xff]
      %v4192 = vld [vmem:[%s3629 + $0x121] sm:$0xff]
      %v4193 = vld [vmem:[%s3629 + $0x129] sm:$0xff]
      %v4194 = vld [vmem:[%s3629 + $0x139] sm:$0xff]
      %v4195 = vld [vmem:[%s3629 + $0x141] sm:$0xff]
      %v4196 = vld [vmem:[%s3629 + $0x151] sm:$0xff]
      %v4197 = vld [vmem:[%s3629 + $0x159] sm:$0xff]
      %v4198 = vld [vmem:[%s3629 + $0x169] sm:$0xff]
      %v4199 = vld [vmem:[%s3629 + $0x171] sm:$0xff]
      %v4200 = vld [vmem:[%s3629 + $0x1b1] sm:$0xff]
      %v4201 = vld [vmem:[%s3629 + $0x1b9] sm:$0xff]
      %v4202 = vld [vmem:[%s3629 + $0x1c9] sm:$0xff]
      %v4203 = vld [vmem:[%s3629 + $0x1d1] sm:$0xff]
      %v4204 = vld [vmem:[%s3629 + $0x1e1] sm:$0xff]
      %v4205 = vld [vmem:[%s3629 + $0x1e9] sm:$0xff]
      %v4206 = vld [vmem:[%s3629 + $0x1f9] sm:$0xff]
      %v4207 = vld [vmem:[%s3629 + $0x201] sm:$0xff]
      %v4208 = vld [vmem:[%s3629 + $0x211] sm:$0xff]
      %v4209 = vld [vmem:[%s3629 + $0x219] sm:$0xff]
      %v4210 = vld [vmem:[%s3629 + $0x229] sm:$0xff]
      %v4211 = vld [vmem:[%s3629 + $0x231] sm:$0xff]
      %v4212 = vld [vmem:[%s3629 + $0x241] sm:$0xff]
      %v4213 = vld [vmem:[%s3629 + $0x249] sm:$0xff]
      %v4214 = vld [vmem:[%s3629 + $0x259] sm:$0xff]
      %v4215 = vld [vmem:[%s3629 + $0x261] sm:$0xff]
      %v4216 = vld [vmem:[%s3629 + $0x271] sm:$0xff]
      %v4217 = vld [vmem:[%s3629 + $0x279] sm:$0xff]
      %v4218 = vld [vmem:[%s3629 + $0x289] sm:$0xff]
      %v4219 = vld [vmem:[%s3629 + $0x291] sm:$0xff]
      %v4220 = vld [vmem:[%s3629 + $0x2a1] sm:$0xff]
      %v4221 = vld [vmem:[%s3629 + $0x2a9] sm:$0xff]
      %v4222 = vld [vmem:[%s3629 + $0x2b9] sm:$0xff]
      %v4223 = vld [vmem:[%s3629 + $0x2c1] sm:$0xff]
      %v4224 = vld [vmem:[%s3629 + $0x2d1] sm:$0xff]
      %v4225 = vld [vmem:[%s3629 + $0x2d9] sm:$0xff]
      %v4226 = vld [vmem:[%s3629 + $0x2e9] sm:$0xff]
      %v4227 = vld [vmem:[%s3629 + $0x2f1] sm:$0xff]
      %v4228 = vld [vmem:[%s3629 + $0x301] sm:$0xff]
      %v4229 = vld [vmem:[%s3629 + $0x309] sm:$0xff]
      %v4230 = vld [vmem:[%s3629 + $0x319] sm:$0xff]
      %v4231 = vld [vmem:[%s3629 + $0x321] sm:$0xff]
      %s4232 = scalar_lea.vmem %s1, 448
      %v4233 = vld [vmem:[%s4232] sm:$0xff]
      %v4234 = vld [vmem:[%s4232 + $0x8] sm:$0xff]
      %v4235 = vld [vmem:[%s4232 + $0x10] sm:$0xff]
      %v4236 = vld [vmem:[%s4232 + $0x18] sm:$0xff]
      %v4237 = vld [vmem:[%s4232 + $0x20] sm:$0xff]
      %v4238 = vld [vmem:[%s4232 + $0x28] sm:$0xff]
      %v4239 = vld [vmem:[%s4232 + $0x30] sm:$0xff]
      %v4240 = vld [vmem:[%s4232 + $0x38] sm:$0xff]
      %v4242 = vsel %vm264, %v4168, 0
      %v4245 = vsel %vm264, %v4169, 0
      %v4248 = vsel %vm264, %v4170, 0
      %v4251 = vsel %vm264, %v4171, 0
      %v4254 = vsel %vm264, %v4172, 0
      %v4257 = vsel %vm264, %v4173, 0
      %v4260 = vsel %vm264, %v4174, 0
      %v4263 = vsel %vm264, %v4175, 0
      %v4266 = vsel %vm264, %v4176, 0
      %v4269 = vsel %vm264, %v4177, 0
      %v4272 = vsel %vm264, %v4178, 0
      %v4275 = vsel %vm264, %v4179, 0
      %v4278 = vsel %vm264, %v4180, 0
      %v4281 = vsel %vm264, %v4181, 0
      %v4284 = vsel %vm264, %v4182, 0
      %v4287 = vsel %vm264, %v4183, 0
      %v4290 = vsel %vm264, %v4184, 0
      %v4293 = vsel %vm264, %v4185, 0
      %v4296 = vsel %vm264, %v4186, 0
      %v4299 = vsel %vm264, %v4187, 0
      %v4302 = vsel %vm264, %v4188, 0
      %v4305 = vsel %vm264, %v4189, 0
      %v4308 = vsel %vm264, %v4190, 0
      %v4311 = vsel %vm264, %v4191, 0
      %v4314 = vsel %vm264, %v4192, 0
      %v4317 = vsel %vm264, %v4193, 0
      %v4320 = vsel %vm264, %v4194, 0
      %v4323 = vsel %vm264, %v4195, 0
      %v4326 = vsel %vm264, %v4196, 0
      %v4329 = vsel %vm264, %v4197, 0
      %v4332 = vsel %vm264, %v4198, 0
      %v4335 = vsel %vm264, %v4199, 0
      %v4338 = vsel %vm264, %v4200, 0
      %v4341 = vsel %vm264, %v4201, 0
      %v4344 = vsel %vm264, %v4202, 0
      %v4347 = vsel %vm264, %v4203, 0
      %v4350 = vsel %vm264, %v4204, 0
      %v4353 = vsel %vm264, %v4205, 0
      %v4356 = vsel %vm264, %v4206, 0
      %v4359 = vsel %vm264, %v4207, 0
      %v4362 = vsel %vm264, %v4208, 0
      %v4365 = vsel %vm264, %v4209, 0
      %v4368 = vsel %vm264, %v4210, 0
      %v4371 = vsel %vm264, %v4211, 0
      %v4374 = vsel %vm264, %v4212, 0
      %v4377 = vsel %vm264, %v4213, 0
      %v4380 = vsel %vm264, %v4214, 0
      %v4383 = vsel %vm264, %v4215, 0
      %v4386 = vsel %vm264, %v4216, 0
      %v4389 = vsel %vm264, %v4217, 0
      %v4392 = vsel %vm264, %v4218, 0
      %v4395 = vsel %vm264, %v4219, 0
      %v4398 = vsel %vm264, %v4220, 0
      %v4401 = vsel %vm264, %v4221, 0
      %v4404 = vsel %vm264, %v4222, 0
      %v4407 = vsel %vm264, %v4223, 0
      %v4410 = vsel %vm264, %v4224, 0
      %v4413 = vsel %vm264, %v4225, 0
      %v4416 = vsel %vm264, %v4226, 0
      %v4419 = vsel %vm264, %v4227, 0
      %v4422 = vsel %vm264, %v4228, 0
      %v4425 = vsel %vm264, %v4229, 0
      %v4428 = vsel %vm264, %v4230, 0
      %v4431 = vsel %vm264, %v4231, 0
      %4433 = vmatpush.msra.mxu0 0.0
      %4434 = vmatpush.msra.mxu0 0.0
      %4435 = vmatpush.msra.mxu0 0.0
      %4436 = vmatpush.msra.mxu0 0.0
      %4437 = vmatpush.msra.mxu0 0.0
      %4438 = vmatpush.msra.mxu0 0.0
      %4439 = vmatpush.msra.mxu0 0.0
      %4440 = vmatpush.msra.mxu0 0.0
      %4441 = vmatpush.msra.mxu0 %v4240
      %4442 = vmatpush.msra.mxu0 %v4239
      %4443 = vmatpush.msra.mxu0 %v4238
      %4444 = vmatpush.msra.mxu0 %v4237
      %4445 = vmatpush.msra.mxu0 %v4236
      %4446 = vmatpush.msra.mxu0 %v4235
      %4447 = vmatpush.msra.mxu0 %v4234
      %4448 = vmatpush.msra.mxu0 %v4233
      %4449 = vmatmul.f32.gmra.mxu0 %v4242
      %v4450 = vpop.f32.mrf.mxu0
      %v4451 = vadd.f32 0.0, %v4450
      %4452 = vmatmul.f32.gmra.mxu0 %v4245
      %v4453 = vpop.f32.mrf.mxu0
      %v4454 = vadd.f32 0.0, %v4453
      %4455 = vmatmul.f32.gmra.mxu0 %v4248
      %v4456 = vpop.f32.mrf.mxu0
      %v4457 = vadd.f32 0.0, %v4456
      %4458 = vmatmul.f32.gmra.mxu0 %v4251
      %v4459 = vpop.f32.mrf.mxu0
      %v4460 = vadd.f32 0.0, %v4459
      %4461 = vmatmul.f32.gmra.mxu0 %v4254
      %v4462 = vpop.f32.mrf.mxu0
      %v4463 = vadd.f32 0.0, %v4462
      %4464 = vmatmul.f32.gmra.mxu0 %v4257
      %v4465 = vpop.f32.mrf.mxu0
      %v4466 = vadd.f32 0.0, %v4465
      %4467 = vmatmul.f32.gmra.mxu0 %v4260
      %v4468 = vpop.f32.mrf.mxu0
      %v4469 = vadd.f32 0.0, %v4468
      %4470 = vmatmul.f32.gmra.mxu0 %v4263
      %v4471 = vpop.f32.mrf.mxu0
      %v4472 = vadd.f32 0.0, %v4471
      %4473 = vmatmul.f32.gmra.mxu0 %v4266
      %v4474 = vpop.f32.mrf.mxu0
      %v4475 = vadd.f32 0.0, %v4474
      %4476 = vmatmul.f32.gmra.mxu0 %v4269
      %v4477 = vpop.f32.mrf.mxu0
      %v4478 = vadd.f32 0.0, %v4477
      %4479 = vmatmul.f32.gmra.mxu0 %v4272
      %v4480 = vpop.f32.mrf.mxu0
      %v4481 = vadd.f32 0.0, %v4480
      %4482 = vmatmul.f32.gmra.mxu0 %v4275
      %v4483 = vpop.f32.mrf.mxu0
      %v4484 = vadd.f32 0.0, %v4483
      %4485 = vmatmul.f32.gmra.mxu0 %v4278
      %v4486 = vpop.f32.mrf.mxu0
      %v4487 = vadd.f32 0.0, %v4486
      %4488 = vmatmul.f32.gmra.mxu0 %v4281
      %v4489 = vpop.f32.mrf.mxu0
      %v4490 = vadd.f32 0.0, %v4489
      %4491 = vmatmul.f32.gmra.mxu0 %v4284
      %v4492 = vpop.f32.mrf.mxu0
      %v4493 = vadd.f32 0.0, %v4492
      %4494 = vmatmul.f32.gmra.mxu0 %v4287
      %v4495 = vpop.f32.mrf.mxu0
      %v4496 = vadd.f32 0.0, %v4495
      %4497 = vmatmul.f32.gmra.mxu0 %v4290
      %v4498 = vpop.f32.mrf.mxu0
      %v4499 = vadd.f32 0.0, %v4498
      %4500 = vmatmul.f32.gmra.mxu0 %v4293
      %v4501 = vpop.f32.mrf.mxu0
      %v4502 = vadd.f32 0.0, %v4501
      %4503 = vmatmul.f32.gmra.mxu0 %v4296
      %v4504 = vpop.f32.mrf.mxu0
      %v4505 = vadd.f32 0.0, %v4504
      %4506 = vmatmul.f32.gmra.mxu0 %v4299
      %v4507 = vpop.f32.mrf.mxu0
      %v4508 = vadd.f32 0.0, %v4507
      %4509 = vmatmul.f32.gmra.mxu0 %v4302
      %v4510 = vpop.f32.mrf.mxu0
      %v4511 = vadd.f32 0.0, %v4510
      %4512 = vmatmul.f32.gmra.mxu0 %v4305
      %v4513 = vpop.f32.mrf.mxu0
      %v4514 = vadd.f32 0.0, %v4513
      %4515 = vmatmul.f32.gmra.mxu0 %v4308
      %v4516 = vpop.f32.mrf.mxu0
      %v4517 = vadd.f32 0.0, %v4516
      %4518 = vmatmul.f32.gmra.mxu0 %v4311
      %v4519 = vpop.f32.mrf.mxu0
      %v4520 = vadd.f32 0.0, %v4519
      %4521 = vmatmul.f32.gmra.mxu0 %v4314
      %v4522 = vpop.f32.mrf.mxu0
      %v4523 = vadd.f32 0.0, %v4522
      %4524 = vmatmul.f32.gmra.mxu0 %v4317
      %v4525 = vpop.f32.mrf.mxu0
      %v4526 = vadd.f32 0.0, %v4525
      %4527 = vmatmul.f32.gmra.mxu0 %v4320
      %v4528 = vpop.f32.mrf.mxu0
      %v4529 = vadd.f32 0.0, %v4528
      %4530 = vmatmul.f32.gmra.mxu0 %v4323
      %v4531 = vpop.f32.mrf.mxu0
      %v4532 = vadd.f32 0.0, %v4531
      %4533 = vmatmul.f32.gmra.mxu0 %v4326
      %v4534 = vpop.f32.mrf.mxu0
      %v4535 = vadd.f32 0.0, %v4534
      %4536 = vmatmul.f32.gmra.mxu0 %v4329
      %v4537 = vpop.f32.mrf.mxu0
      %v4538 = vadd.f32 0.0, %v4537
      %4539 = vmatmul.f32.gmra.mxu0 %v4332
      %v4540 = vpop.f32.mrf.mxu0
      %v4541 = vadd.f32 0.0, %v4540
      %4542 = vmatmul.f32.gmra.mxu0 %v4335
      %v4543 = vpop.f32.mrf.mxu0
      %v4544 = vadd.f32 0.0, %v4543
      %4545 = vmatmul.f32.gmra.mxu0 %v4338
      %v4546 = vpop.f32.mrf.mxu0
      %v4547 = vadd.f32 0.0, %v4546
      %4548 = vmatmul.f32.gmra.mxu0 %v4341
      %v4549 = vpop.f32.mrf.mxu0
      %v4550 = vadd.f32 0.0, %v4549
      %4551 = vmatmul.f32.gmra.mxu0 %v4344
      %v4552 = vpop.f32.mrf.mxu0
      %v4553 = vadd.f32 0.0, %v4552
      %4554 = vmatmul.f32.gmra.mxu0 %v4347
      %v4555 = vpop.f32.mrf.mxu0
      %v4556 = vadd.f32 0.0, %v4555
      %4557 = vmatmul.f32.gmra.mxu0 %v4350
      %v4558 = vpop.f32.mrf.mxu0
      %v4559 = vadd.f32 0.0, %v4558
      %4560 = vmatmul.f32.gmra.mxu0 %v4353
      %v4561 = vpop.f32.mrf.mxu0
      %v4562 = vadd.f32 0.0, %v4561
      %4563 = vmatmul.f32.gmra.mxu0 %v4356
      %v4564 = vpop.f32.mrf.mxu0
      %v4565 = vadd.f32 0.0, %v4564
      %4566 = vmatmul.f32.gmra.mxu0 %v4359
      %v4567 = vpop.f32.mrf.mxu0
      %v4568 = vadd.f32 0.0, %v4567
      %4569 = vmatmul.f32.gmra.mxu0 %v4362
      %v4570 = vpop.f32.mrf.mxu0
      %v4571 = vadd.f32 0.0, %v4570
      %4572 = vmatmul.f32.gmra.mxu0 %v4365
      %v4573 = vpop.f32.mrf.mxu0
      %v4574 = vadd.f32 0.0, %v4573
      %4575 = vmatmul.f32.gmra.mxu0 %v4368
      %v4576 = vpop.f32.mrf.mxu0
      %v4577 = vadd.f32 0.0, %v4576
      %4578 = vmatmul.f32.gmra.mxu0 %v4371
      %v4579 = vpop.f32.mrf.mxu0
      %v4580 = vadd.f32 0.0, %v4579
      %4581 = vmatmul.f32.gmra.mxu0 %v4374
      %v4582 = vpop.f32.mrf.mxu0
      %v4583 = vadd.f32 0.0, %v4582
      %4584 = vmatmul.f32.gmra.mxu0 %v4377
      %v4585 = vpop.f32.mrf.mxu0
      %v4586 = vadd.f32 0.0, %v4585
      %4587 = vmatmul.f32.gmra.mxu0 %v4380
      %v4588 = vpop.f32.mrf.mxu0
      %v4589 = vadd.f32 0.0, %v4588
      %4590 = vmatmul.f32.gmra.mxu0 %v4383
      %v4591 = vpop.f32.mrf.mxu0
      %v4592 = vadd.f32 0.0, %v4591
      %4593 = vmatmul.f32.gmra.mxu0 %v4386
      %v4594 = vpop.f32.mrf.mxu0
      %v4595 = vadd.f32 0.0, %v4594
      %4596 = vmatmul.f32.gmra.mxu0 %v4389
      %v4597 = vpop.f32.mrf.mxu0
      %v4598 = vadd.f32 0.0, %v4597
      %4599 = vmatmul.f32.gmra.mxu0 %v4392
      %v4600 = vpop.f32.mrf.mxu0
      %v4601 = vadd.f32 0.0, %v4600
      %4602 = vmatmul.f32.gmra.mxu0 %v4395
      %v4603 = vpop.f32.mrf.mxu0
      %v4604 = vadd.f32 0.0, %v4603
      %4605 = vmatmul.f32.gmra.mxu0 %v4398
      %v4606 = vpop.f32.mrf.mxu0
      %v4607 = vadd.f32 0.0, %v4606
      %4608 = vmatmul.f32.gmra.mxu0 %v4401
      %v4609 = vpop.f32.mrf.mxu0
      %v4610 = vadd.f32 0.0, %v4609
      %4611 = vmatmul.f32.gmra.mxu0 %v4404
      %v4612 = vpop.f32.mrf.mxu0
      %v4613 = vadd.f32 0.0, %v4612
      %4614 = vmatmul.f32.gmra.mxu0 %v4407
      %v4615 = vpop.f32.mrf.mxu0
      %v4616 = vadd.f32 0.0, %v4615
      %4617 = vmatmul.f32.gmra.mxu0 %v4410
      %v4618 = vpop.f32.mrf.mxu0
      %v4619 = vadd.f32 0.0, %v4618
      %4620 = vmatmul.f32.gmra.mxu0 %v4413
      %v4621 = vpop.f32.mrf.mxu0
      %v4622 = vadd.f32 0.0, %v4621
      %4623 = vmatmul.f32.gmra.mxu0 %v4416
      %v4624 = vpop.f32.mrf.mxu0
      %v4625 = vadd.f32 0.0, %v4624
      %4626 = vmatmul.f32.gmra.mxu0 %v4419
      %v4627 = vpop.f32.mrf.mxu0
      %v4628 = vadd.f32 0.0, %v4627
      %4629 = vmatmul.f32.gmra.mxu0 %v4422
      %v4630 = vpop.f32.mrf.mxu0
      %v4631 = vadd.f32 0.0, %v4630
      %4632 = vmatmul.f32.gmra.mxu0 %v4425
      %v4633 = vpop.f32.mrf.mxu0
      %v4634 = vadd.f32 0.0, %v4633
      %4635 = vmatmul.f32.gmra.mxu0 %v4428
      %v4636 = vpop.f32.mrf.mxu0
      %v4637 = vadd.f32 0.0, %v4636
      %4638 = vmatmul.f32.gmra.mxu0 %v4431
      %v4639 = vpop.f32.mrf.mxu0
      %v4640 = vadd.f32 0.0, %v4639
      %4641 = vdwg.mxu0
      %v4642 = vadd.f32 %v4104, %v4451
      %v4643 = vadd.f32 %v4105, %v4454
      %v4644 = vadd.f32 %v4106, %v4457
      %v4645 = vadd.f32 %v4107, %v4460
      %v4646 = vadd.f32 %v4108, %v4463
      %v4647 = vadd.f32 %v4109, %v4466
      %v4648 = vadd.f32 %v4110, %v4469
      %v4649 = vadd.f32 %v4111, %v4472
      %v4650 = vadd.f32 %v4112, %v4475
      %v4651 = vadd.f32 %v4113, %v4478
      %v4652 = vadd.f32 %v4114, %v4481
      %v4653 = vadd.f32 %v4115, %v4484
      %v4654 = vadd.f32 %v4116, %v4487
      %v4655 = vadd.f32 %v4117, %v4490
      %v4656 = vadd.f32 %v4118, %v4493
      %v4657 = vadd.f32 %v4119, %v4496
      %v4658 = vadd.f32 %v4120, %v4499
      %v4659 = vadd.f32 %v4121, %v4502
      %v4660 = vadd.f32 %v4122, %v4505
      %v4661 = vadd.f32 %v4123, %v4508
      %v4662 = vadd.f32 %v4124, %v4511
      %v4663 = vadd.f32 %v4125, %v4514
      %v4664 = vadd.f32 %v4126, %v4517
      %v4665 = vadd.f32 %v4127, %v4520
      %v4666 = vadd.f32 %v4128, %v4523
      %v4667 = vadd.f32 %v4129, %v4526
      %v4668 = vadd.f32 %v4130, %v4529
      %v4669 = vadd.f32 %v4131, %v4532
      %v4670 = vadd.f32 %v4132, %v4535
      %v4671 = vadd.f32 %v4133, %v4538
      %v4672 = vadd.f32 %v4134, %v4541
      %v4673 = vadd.f32 %v4135, %v4544
      %v4674 = vadd.f32 %v4136, %v4547
      %v4675 = vadd.f32 %v4137, %v4550
      %v4676 = vadd.f32 %v4138, %v4553
      %v4677 = vadd.f32 %v4139, %v4556
      %v4678 = vadd.f32 %v4140, %v4559
      %v4679 = vadd.f32 %v4141, %v4562
      %v4680 = vadd.f32 %v4142, %v4565
      %v4681 = vadd.f32 %v4143, %v4568
      %v4682 = vadd.f32 %v4144, %v4571
      %v4683 = vadd.f32 %v4145, %v4574
      %v4684 = vadd.f32 %v4146, %v4577
      %v4685 = vadd.f32 %v4147, %v4580
      %v4686 = vadd.f32 %v4148, %v4583
      %v4687 = vadd.f32 %v4149, %v4586
      %v4688 = vadd.f32 %v4150, %v4589
      %v4689 = vadd.f32 %v4151, %v4592
      %v4690 = vadd.f32 %v4152, %v4595
      %v4691 = vadd.f32 %v4153, %v4598
      %v4692 = vadd.f32 %v4154, %v4601
      %v4693 = vadd.f32 %v4155, %v4604
      %v4694 = vadd.f32 %v4156, %v4607
      %v4695 = vadd.f32 %v4157, %v4610
      %v4696 = vadd.f32 %v4158, %v4613
      %v4697 = vadd.f32 %v4159, %v4616
      %v4698 = vadd.f32 %v4160, %v4619
      %v4699 = vadd.f32 %v4161, %v4622
      %v4700 = vadd.f32 %v4162, %v4625
      %v4701 = vadd.f32 %v4163, %v4628
      %v4702 = vadd.f32 %v4164, %v4631
      %v4703 = vadd.f32 %v4165, %v4634
      %v4704 = vadd.f32 %v4166, %v4637
      %v4705 = vadd.f32 %v4167, %v4640
      %v4706 = vld [vmem:[%s3629 + $0x2] sm:$0xff]
      %v4707 = vld [vmem:[%s3629 + $0xa] sm:$0xff]
      %v4708 = vld [vmem:[%s3629 + $0x1a] sm:$0xff]
      %v4709 = vld [vmem:[%s3629 + $0x22] sm:$0xff]
      %v4710 = vld [vmem:[%s3629 + $0x32] sm:$0xff]
      %v4711 = vld [vmem:[%s3629 + $0x3a] sm:$0xff]
      %v4712 = vld [vmem:[%s3629 + $0x4a] sm:$0xff]
      %v4713 = vld [vmem:[%s3629 + $0x52] sm:$0xff]
      %v4714 = vld [vmem:[%s3629 + $0x62] sm:$0xff]
      %v4715 = vld [vmem:[%s3629 + $0x6a] sm:$0xff]
      %v4716 = vld [vmem:[%s3629 + $0x7a] sm:$0xff]
      %v4717 = vld [vmem:[%s3629 + $0x82] sm:$0xff]
      %v4718 = vld [vmem:[%s3629 + $0x92] sm:$0xff]
      %v4719 = vld [vmem:[%s3629 + $0x9a] sm:$0xff]
      %v4720 = vld [vmem:[%s3629 + $0xaa] sm:$0xff]
      %v4721 = vld [vmem:[%s3629 + $0xb2] sm:$0xff]
      %v4722 = vld [vmem:[%s3629 + $0xc2] sm:$0xff]
      %v4723 = vld [vmem:[%s3629 + $0xca] sm:$0xff]
      %v4724 = vld [vmem:[%s3629 + $0xda] sm:$0xff]
      %v4725 = vld [vmem:[%s3629 + $0xe2] sm:$0xff]
      %v4726 = vld [vmem:[%s3629 + $0xf2] sm:$0xff]
      %v4727 = vld [vmem:[%s3629 + $0xfa] sm:$0xff]
      %v4728 = vld [vmem:[%s3629 + $0x10a] sm:$0xff]
      %v4729 = vld [vmem:[%s3629 + $0x112] sm:$0xff]
      %v4730 = vld [vmem:[%s3629 + $0x122] sm:$0xff]
      %v4731 = vld [vmem:[%s3629 + $0x12a] sm:$0xff]
      %v4732 = vld [vmem:[%s3629 + $0x13a] sm:$0xff]
      %v4733 = vld [vmem:[%s3629 + $0x142] sm:$0xff]
      %v4734 = vld [vmem:[%s3629 + $0x152] sm:$0xff]
      %v4735 = vld [vmem:[%s3629 + $0x15a] sm:$0xff]
      %v4736 = vld [vmem:[%s3629 + $0x16a] sm:$0xff]
      %v4737 = vld [vmem:[%s3629 + $0x172] sm:$0xff]
      %v4738 = vld [vmem:[%s3629 + $0x1b2] sm:$0xff]
      %v4739 = vld [vmem:[%s3629 + $0x1ba] sm:$0xff]
      %v4740 = vld [vmem:[%s3629 + $0x1ca] sm:$0xff]
      %v4741 = vld [vmem:[%s3629 + $0x1d2] sm:$0xff]
      %v4742 = vld [vmem:[%s3629 + $0x1e2] sm:$0xff]
      %v4743 = vld [vmem:[%s3629 + $0x1ea] sm:$0xff]
      %v4744 = vld [vmem:[%s3629 + $0x1fa] sm:$0xff]
      %v4745 = vld [vmem:[%s3629 + $0x202] sm:$0xff]
      %v4746 = vld [vmem:[%s3629 + $0x212] sm:$0xff]
      %v4747 = vld [vmem:[%s3629 + $0x21a] sm:$0xff]
      %v4748 = vld [vmem:[%s3629 + $0x22a] sm:$0xff]
      %v4749 = vld [vmem:[%s3629 + $0x232] sm:$0xff]
      %v4750 = vld [vmem:[%s3629 + $0x242] sm:$0xff]
      %v4751 = vld [vmem:[%s3629 + $0x24a] sm:$0xff]
      %v4752 = vld [vmem:[%s3629 + $0x25a] sm:$0xff]
      %v4753 = vld [vmem:[%s3629 + $0x262] sm:$0xff]
      %v4754 = vld [vmem:[%s3629 + $0x272] sm:$0xff]
      %v4755 = vld [vmem:[%s3629 + $0x27a] sm:$0xff]
      %v4756 = vld [vmem:[%s3629 + $0x28a] sm:$0xff]
      %v4757 = vld [vmem:[%s3629 + $0x292] sm:$0xff]
      %v4758 = vld [vmem:[%s3629 + $0x2a2] sm:$0xff]
      %v4759 = vld [vmem:[%s3629 + $0x2aa] sm:$0xff]
      %v4760 = vld [vmem:[%s3629 + $0x2ba] sm:$0xff]
      %v4761 = vld [vmem:[%s3629 + $0x2c2] sm:$0xff]
      %v4762 = vld [vmem:[%s3629 + $0x2d2] sm:$0xff]
      %v4763 = vld [vmem:[%s3629 + $0x2da] sm:$0xff]
      %v4764 = vld [vmem:[%s3629 + $0x2ea] sm:$0xff]
      %v4765 = vld [vmem:[%s3629 + $0x2f2] sm:$0xff]
      %v4766 = vld [vmem:[%s3629 + $0x302] sm:$0xff]
      %v4767 = vld [vmem:[%s3629 + $0x30a] sm:$0xff]
      %v4768 = vld [vmem:[%s3629 + $0x31a] sm:$0xff]
      %v4769 = vld [vmem:[%s3629 + $0x322] sm:$0xff]
      %s4770 = scalar_lea.vmem %s1, 512
      %v4771 = vld [vmem:[%s4770] sm:$0xff]
      %v4772 = vld [vmem:[%s4770 + $0x8] sm:$0xff]
      %v4773 = vld [vmem:[%s4770 + $0x10] sm:$0xff]
      %v4774 = vld [vmem:[%s4770 + $0x18] sm:$0xff]
      %v4775 = vld [vmem:[%s4770 + $0x20] sm:$0xff]
      %v4776 = vld [vmem:[%s4770 + $0x28] sm:$0xff]
      %v4777 = vld [vmem:[%s4770 + $0x30] sm:$0xff]
      %v4778 = vld [vmem:[%s4770 + $0x38] sm:$0xff]
      %v4780 = vsel %vm264, %v4706, 0
      %v4783 = vsel %vm264, %v4707, 0
      %v4786 = vsel %vm264, %v4708, 0
      %v4789 = vsel %vm264, %v4709, 0
      %v4792 = vsel %vm264, %v4710, 0
      %v4795 = vsel %vm264, %v4711, 0
      %v4798 = vsel %vm264, %v4712, 0
      %v4801 = vsel %vm264, %v4713, 0
      %v4804 = vsel %vm264, %v4714, 0
      %v4807 = vsel %vm264, %v4715, 0
      %v4810 = vsel %vm264, %v4716, 0
      %v4813 = vsel %vm264, %v4717, 0
      %v4816 = vsel %vm264, %v4718, 0
      %v4819 = vsel %vm264, %v4719, 0
      %v4822 = vsel %vm264, %v4720, 0
      %v4825 = vsel %vm264, %v4721, 0
      %v4828 = vsel %vm264, %v4722, 0
      %v4831 = vsel %vm264, %v4723, 0
      %v4834 = vsel %vm264, %v4724, 0
      %v4837 = vsel %vm264, %v4725, 0
      %v4840 = vsel %vm264, %v4726, 0
      %v4843 = vsel %vm264, %v4727, 0
      %v4846 = vsel %vm264, %v4728, 0
      %v4849 = vsel %vm264, %v4729, 0
      %v4852 = vsel %vm264, %v4730, 0
      %v4855 = vsel %vm264, %v4731, 0
      %v4858 = vsel %vm264, %v4732, 0
      %v4861 = vsel %vm264, %v4733, 0
      %v4864 = vsel %vm264, %v4734, 0
      %v4867 = vsel %vm264, %v4735, 0
      %v4870 = vsel %vm264, %v4736, 0
      %v4873 = vsel %vm264, %v4737, 0
      %v4876 = vsel %vm264, %v4738, 0
      %v4879 = vsel %vm264, %v4739, 0
      %v4882 = vsel %vm264, %v4740, 0
      %v4885 = vsel %vm264, %v4741, 0
      %v4888 = vsel %vm264, %v4742, 0
      %v4891 = vsel %vm264, %v4743, 0
      %v4894 = vsel %vm264, %v4744, 0
      %v4897 = vsel %vm264, %v4745, 0
      %v4900 = vsel %vm264, %v4746, 0
      %v4903 = vsel %vm264, %v4747, 0
      %v4906 = vsel %vm264, %v4748, 0
      %v4909 = vsel %vm264, %v4749, 0
      %v4912 = vsel %vm264, %v4750, 0
      %v4915 = vsel %vm264, %v4751, 0
      %v4918 = vsel %vm264, %v4752, 0
      %v4921 = vsel %vm264, %v4753, 0
      %v4924 = vsel %vm264, %v4754, 0
      %v4927 = vsel %vm264, %v4755, 0
      %v4930 = vsel %vm264, %v4756, 0
      %v4933 = vsel %vm264, %v4757, 0
      %v4936 = vsel %vm264, %v4758, 0
      %v4939 = vsel %vm264, %v4759, 0
      %v4942 = vsel %vm264, %v4760, 0
      %v4945 = vsel %vm264, %v4761, 0
      %v4948 = vsel %vm264, %v4762, 0
      %v4951 = vsel %vm264, %v4763, 0
      %v4954 = vsel %vm264, %v4764, 0
      %v4957 = vsel %vm264, %v4765, 0
      %v4960 = vsel %vm264, %v4766, 0
      %v4963 = vsel %vm264, %v4767, 0
      %v4966 = vsel %vm264, %v4768, 0
      %v4969 = vsel %vm264, %v4769, 0
      %4971 = vmatpush.msra.mxu0 0.0
      %4972 = vmatpush.msra.mxu0 0.0
      %4973 = vmatpush.msra.mxu0 0.0
      %4974 = vmatpush.msra.mxu0 0.0
      %4975 = vmatpush.msra.mxu0 0.0
      %4976 = vmatpush.msra.mxu0 0.0
      %4977 = vmatpush.msra.mxu0 0.0
      %4978 = vmatpush.msra.mxu0 0.0
      %4979 = vmatpush.msra.mxu0 %v4778
      %4980 = vmatpush.msra.mxu0 %v4777
      %4981 = vmatpush.msra.mxu0 %v4776
      %4982 = vmatpush.msra.mxu0 %v4775
      %4983 = vmatpush.msra.mxu0 %v4774
      %4984 = vmatpush.msra.mxu0 %v4773
      %4985 = vmatpush.msra.mxu0 %v4772
      %4986 = vmatpush.msra.mxu0 %v4771
      %4987 = vmatmul.f32.gmra.mxu0 %v4780
      %v4988 = vpop.f32.mrf.mxu0
      %v4989 = vadd.f32 0.0, %v4988
      %4990 = vmatmul.f32.gmra.mxu0 %v4783
      %v4991 = vpop.f32.mrf.mxu0
      %v4992 = vadd.f32 0.0, %v4991
      %4993 = vmatmul.f32.gmra.mxu0 %v4786
      %v4994 = vpop.f32.mrf.mxu0
      %v4995 = vadd.f32 0.0, %v4994
      %4996 = vmatmul.f32.gmra.mxu0 %v4789
      %v4997 = vpop.f32.mrf.mxu0
      %v4998 = vadd.f32 0.0, %v4997
      %4999 = vmatmul.f32.gmra.mxu0 %v4792
      %v5000 = vpop.f32.mrf.mxu0
      %v5001 = vadd.f32 0.0, %v5000
      %5002 = vmatmul.f32.gmra.mxu0 %v4795
      %v5003 = vpop.f32.mrf.mxu0
      %v5004 = vadd.f32 0.0, %v5003
      %5005 = vmatmul.f32.gmra.mxu0 %v4798
      %v5006 = vpop.f32.mrf.mxu0
      %v5007 = vadd.f32 0.0, %v5006
      %5008 = vmatmul.f32.gmra.mxu0 %v4801
      %v5009 = vpop.f32.mrf.mxu0
      %v5010 = vadd.f32 0.0, %v5009
      %5011 = vmatmul.f32.gmra.mxu0 %v4804
      %v5012 = vpop.f32.mrf.mxu0
      %v5013 = vadd.f32 0.0, %v5012
      %5014 = vmatmul.f32.gmra.mxu0 %v4807
      %v5015 = vpop.f32.mrf.mxu0
      %v5016 = vadd.f32 0.0, %v5015
      %5017 = vmatmul.f32.gmra.mxu0 %v4810
      %v5018 = vpop.f32.mrf.mxu0
      %v5019 = vadd.f32 0.0, %v5018
      %5020 = vmatmul.f32.gmra.mxu0 %v4813
      %v5021 = vpop.f32.mrf.mxu0
      %v5022 = vadd.f32 0.0, %v5021
      %5023 = vmatmul.f32.gmra.mxu0 %v4816
      %v5024 = vpop.f32.mrf.mxu0
      %v5025 = vadd.f32 0.0, %v5024
      %5026 = vmatmul.f32.gmra.mxu0 %v4819
      %v5027 = vpop.f32.mrf.mxu0
      %v5028 = vadd.f32 0.0, %v5027
      %5029 = vmatmul.f32.gmra.mxu0 %v4822
      %v5030 = vpop.f32.mrf.mxu0
      %v5031 = vadd.f32 0.0, %v5030
      %5032 = vmatmul.f32.gmra.mxu0 %v4825
      %v5033 = vpop.f32.mrf.mxu0
      %v5034 = vadd.f32 0.0, %v5033
      %5035 = vmatmul.f32.gmra.mxu0 %v4828
      %v5036 = vpop.f32.mrf.mxu0
      %v5037 = vadd.f32 0.0, %v5036
      %5038 = vmatmul.f32.gmra.mxu0 %v4831
      %v5039 = vpop.f32.mrf.mxu0
      %v5040 = vadd.f32 0.0, %v5039
      %5041 = vmatmul.f32.gmra.mxu0 %v4834
      %v5042 = vpop.f32.mrf.mxu0
      %v5043 = vadd.f32 0.0, %v5042
      %5044 = vmatmul.f32.gmra.mxu0 %v4837
      %v5045 = vpop.f32.mrf.mxu0
      %v5046 = vadd.f32 0.0, %v5045
      %5047 = vmatmul.f32.gmra.mxu0 %v4840
      %v5048 = vpop.f32.mrf.mxu0
      %v5049 = vadd.f32 0.0, %v5048
      %5050 = vmatmul.f32.gmra.mxu0 %v4843
      %v5051 = vpop.f32.mrf.mxu0
      %v5052 = vadd.f32 0.0, %v5051
      %5053 = vmatmul.f32.gmra.mxu0 %v4846
      %v5054 = vpop.f32.mrf.mxu0
      %v5055 = vadd.f32 0.0, %v5054
      %5056 = vmatmul.f32.gmra.mxu0 %v4849
      %v5057 = vpop.f32.mrf.mxu0
      %v5058 = vadd.f32 0.0, %v5057
      %5059 = vmatmul.f32.gmra.mxu0 %v4852
      %v5060 = vpop.f32.mrf.mxu0
      %v5061 = vadd.f32 0.0, %v5060
      %5062 = vmatmul.f32.gmra.mxu0 %v4855
      %v5063 = vpop.f32.mrf.mxu0
      %v5064 = vadd.f32 0.0, %v5063
      %5065 = vmatmul.f32.gmra.mxu0 %v4858
      %v5066 = vpop.f32.mrf.mxu0
      %v5067 = vadd.f32 0.0, %v5066
      %5068 = vmatmul.f32.gmra.mxu0 %v4861
      %v5069 = vpop.f32.mrf.mxu0
      %v5070 = vadd.f32 0.0, %v5069
      %5071 = vmatmul.f32.gmra.mxu0 %v4864
      %v5072 = vpop.f32.mrf.mxu0
      %v5073 = vadd.f32 0.0, %v5072
      %5074 = vmatmul.f32.gmra.mxu0 %v4867
      %v5075 = vpop.f32.mrf.mxu0
      %v5076 = vadd.f32 0.0, %v5075
      %5077 = vmatmul.f32.gmra.mxu0 %v4870
      %v5078 = vpop.f32.mrf.mxu0
      %v5079 = vadd.f32 0.0, %v5078
      %5080 = vmatmul.f32.gmra.mxu0 %v4873
      %v5081 = vpop.f32.mrf.mxu0
      %v5082 = vadd.f32 0.0, %v5081
      %5083 = vmatmul.f32.gmra.mxu0 %v4876
      %v5084 = vpop.f32.mrf.mxu0
      %v5085 = vadd.f32 0.0, %v5084
      %5086 = vmatmul.f32.gmra.mxu0 %v4879
      %v5087 = vpop.f32.mrf.mxu0
      %v5088 = vadd.f32 0.0, %v5087
      %5089 = vmatmul.f32.gmra.mxu0 %v4882
      %v5090 = vpop.f32.mrf.mxu0
      %v5091 = vadd.f32 0.0, %v5090
      %5092 = vmatmul.f32.gmra.mxu0 %v4885
      %v5093 = vpop.f32.mrf.mxu0
      %v5094 = vadd.f32 0.0, %v5093
      %5095 = vmatmul.f32.gmra.mxu0 %v4888
      %v5096 = vpop.f32.mrf.mxu0
      %v5097 = vadd.f32 0.0, %v5096
      %5098 = vmatmul.f32.gmra.mxu0 %v4891
      %v5099 = vpop.f32.mrf.mxu0
      %v5100 = vadd.f32 0.0, %v5099
      %5101 = vmatmul.f32.gmra.mxu0 %v4894
      %v5102 = vpop.f32.mrf.mxu0
      %v5103 = vadd.f32 0.0, %v5102
      %5104 = vmatmul.f32.gmra.mxu0 %v4897
      %v5105 = vpop.f32.mrf.mxu0
      %v5106 = vadd.f32 0.0, %v5105
      %5107 = vmatmul.f32.gmra.mxu0 %v4900
      %v5108 = vpop.f32.mrf.mxu0
      %v5109 = vadd.f32 0.0, %v5108
      %5110 = vmatmul.f32.gmra.mxu0 %v4903
      %v5111 = vpop.f32.mrf.mxu0
      %v5112 = vadd.f32 0.0, %v5111
      %5113 = vmatmul.f32.gmra.mxu0 %v4906
      %v5114 = vpop.f32.mrf.mxu0
      %v5115 = vadd.f32 0.0, %v5114
      %5116 = vmatmul.f32.gmra.mxu0 %v4909
      %v5117 = vpop.f32.mrf.mxu0
      %v5118 = vadd.f32 0.0, %v5117
      %5119 = vmatmul.f32.gmra.mxu0 %v4912
      %v5120 = vpop.f32.mrf.mxu0
      %v5121 = vadd.f32 0.0, %v5120
      %5122 = vmatmul.f32.gmra.mxu0 %v4915
      %v5123 = vpop.f32.mrf.mxu0
      %v5124 = vadd.f32 0.0, %v5123
      %5125 = vmatmul.f32.gmra.mxu0 %v4918
      %v5126 = vpop.f32.mrf.mxu0
      %v5127 = vadd.f32 0.0, %v5126
      %5128 = vmatmul.f32.gmra.mxu0 %v4921
      %v5129 = vpop.f32.mrf.mxu0
      %v5130 = vadd.f32 0.0, %v5129
      %5131 = vmatmul.f32.gmra.mxu0 %v4924
      %v5132 = vpop.f32.mrf.mxu0
      %v5133 = vadd.f32 0.0, %v5132
      %5134 = vmatmul.f32.gmra.mxu0 %v4927
      %v5135 = vpop.f32.mrf.mxu0
      %v5136 = vadd.f32 0.0, %v5135
      %5137 = vmatmul.f32.gmra.mxu0 %v4930
      %v5138 = vpop.f32.mrf.mxu0
      %v5139 = vadd.f32 0.0, %v5138
      %5140 = vmatmul.f32.gmra.mxu0 %v4933
      %v5141 = vpop.f32.mrf.mxu0
      %v5142 = vadd.f32 0.0, %v5141
      %5143 = vmatmul.f32.gmra.mxu0 %v4936
      %v5144 = vpop.f32.mrf.mxu0
      %v5145 = vadd.f32 0.0, %v5144
      %5146 = vmatmul.f32.gmra.mxu0 %v4939
      %v5147 = vpop.f32.mrf.mxu0
      %v5148 = vadd.f32 0.0, %v5147
      %5149 = vmatmul.f32.gmra.mxu0 %v4942
      %v5150 = vpop.f32.mrf.mxu0
      %v5151 = vadd.f32 0.0, %v5150
      %5152 = vmatmul.f32.gmra.mxu0 %v4945
      %v5153 = vpop.f32.mrf.mxu0
      %v5154 = vadd.f32 0.0, %v5153
      %5155 = vmatmul.f32.gmra.mxu0 %v4948
      %v5156 = vpop.f32.mrf.mxu0
      %v5157 = vadd.f32 0.0, %v5156
      %5158 = vmatmul.f32.gmra.mxu0 %v4951
      %v5159 = vpop.f32.mrf.mxu0
      %v5160 = vadd.f32 0.0, %v5159
      %5161 = vmatmul.f32.gmra.mxu0 %v4954
      %v5162 = vpop.f32.mrf.mxu0
      %v5163 = vadd.f32 0.0, %v5162
      %5164 = vmatmul.f32.gmra.mxu0 %v4957
      %v5165 = vpop.f32.mrf.mxu0
      %v5166 = vadd.f32 0.0, %v5165
      %5167 = vmatmul.f32.gmra.mxu0 %v4960
      %v5168 = vpop.f32.mrf.mxu0
      %v5169 = vadd.f32 0.0, %v5168
      %5170 = vmatmul.f32.gmra.mxu0 %v4963
      %v5171 = vpop.f32.mrf.mxu0
      %v5172 = vadd.f32 0.0, %v5171
      %5173 = vmatmul.f32.gmra.mxu0 %v4966
      %v5174 = vpop.f32.mrf.mxu0
      %v5175 = vadd.f32 0.0, %v5174
      %5176 = vmatmul.f32.gmra.mxu0 %v4969
      %v5177 = vpop.f32.mrf.mxu0
      %v5178 = vadd.f32 0.0, %v5177
      %5179 = vdwg.mxu0
      %v5180 = vadd.f32 %v4642, %v4989
      %v5181 = vadd.f32 %v4643, %v4992
      %v5182 = vadd.f32 %v4644, %v4995
      %v5183 = vadd.f32 %v4645, %v4998
      %v5184 = vadd.f32 %v4646, %v5001
      %v5185 = vadd.f32 %v4647, %v5004
      %v5186 = vadd.f32 %v4648, %v5007
      %v5187 = vadd.f32 %v4649, %v5010
      %v5188 = vadd.f32 %v4650, %v5013
      %v5189 = vadd.f32 %v4651, %v5016
      %v5190 = vadd.f32 %v4652, %v5019
      %v5191 = vadd.f32 %v4653, %v5022
      %v5192 = vadd.f32 %v4654, %v5025
      %v5193 = vadd.f32 %v4655, %v5028
      %v5194 = vadd.f32 %v4656, %v5031
      %v5195 = vadd.f32 %v4657, %v5034
      %v5196 = vadd.f32 %v4658, %v5037
      %v5197 = vadd.f32 %v4659, %v5040
      %v5198 = vadd.f32 %v4660, %v5043
      %v5199 = vadd.f32 %v4661, %v5046
      %v5200 = vadd.f32 %v4662, %v5049
      %v5201 = vadd.f32 %v4663, %v5052
      %v5202 = vadd.f32 %v4664, %v5055
      %v5203 = vadd.f32 %v4665, %v5058
      %v5204 = vadd.f32 %v4666, %v5061
      %v5205 = vadd.f32 %v4667, %v5064
      %v5206 = vadd.f32 %v4668, %v5067
      %v5207 = vadd.f32 %v4669, %v5070
      %v5208 = vadd.f32 %v4670, %v5073
      %v5209 = vadd.f32 %v4671, %v5076
      %v5210 = vadd.f32 %v4672, %v5079
      %v5211 = vadd.f32 %v4673, %v5082
      %v5212 = vadd.f32 %v4674, %v5085
      %v5213 = vadd.f32 %v4675, %v5088
      %v5214 = vadd.f32 %v4676, %v5091
      %v5215 = vadd.f32 %v4677, %v5094
      %v5216 = vadd.f32 %v4678, %v5097
      %v5217 = vadd.f32 %v4679, %v5100
      %v5218 = vadd.f32 %v4680, %v5103
      %v5219 = vadd.f32 %v4681, %v5106
      %v5220 = vadd.f32 %v4682, %v5109
      %v5221 = vadd.f32 %v4683, %v5112
      %v5222 = vadd.f32 %v4684, %v5115
      %v5223 = vadd.f32 %v4685, %v5118
      %v5224 = vadd.f32 %v4686, %v5121
      %v5225 = vadd.f32 %v4687, %v5124
      %v5226 = vadd.f32 %v4688, %v5127
      %v5227 = vadd.f32 %v4689, %v5130
      %v5228 = vadd.f32 %v4690, %v5133
      %v5229 = vadd.f32 %v4691, %v5136
      %v5230 = vadd.f32 %v4692, %v5139
      %v5231 = vadd.f32 %v4693, %v5142
      %v5232 = vadd.f32 %v4694, %v5145
      %v5233 = vadd.f32 %v4695, %v5148
      %v5234 = vadd.f32 %v4696, %v5151
      %v5235 = vadd.f32 %v4697, %v5154
      %v5236 = vadd.f32 %v4698, %v5157
      %v5237 = vadd.f32 %v4699, %v5160
      %v5238 = vadd.f32 %v4700, %v5163
      %v5239 = vadd.f32 %v4701, %v5166
      %v5240 = vadd.f32 %v4702, %v5169
      %v5241 = vadd.f32 %v4703, %v5172
      %v5242 = vadd.f32 %v4704, %v5175
      %v5243 = vadd.f32 %v4705, %v5178
      %5244 = vst [vmem:[%s243] sm:$0xff] %v5180
      %5245 = vst [vmem:[%s243 + $0x8] sm:$0xff] %v5181
      %5246 = vst [vmem:[%s243 + $0x10] sm:$0xff] %v5182
      %5247 = vst [vmem:[%s243 + $0x18] sm:$0xff] %v5183
      %5248 = vst [vmem:[%s243 + $0x20] sm:$0xff] %v5184
      %5249 = vst [vmem:[%s243 + $0x28] sm:$0xff] %v5185
      %5250 = vst [vmem:[%s243 + $0x30] sm:$0xff] %v5186
      %5251 = vst [vmem:[%s243 + $0x38] sm:$0xff] %v5187
      %5252 = vst [vmem:[%s243 + $0x40] sm:$0xff] %v5188
      %5253 = vst [vmem:[%s243 + $0x48] sm:$0xff] %v5189
      %5254 = vst [vmem:[%s243 + $0x50] sm:$0xff] %v5190
      %5255 = vst [vmem:[%s243 + $0x58] sm:$0xff] %v5191
      %5256 = vst [vmem:[%s243 + $0x60] sm:$0xff] %v5192
      %5257 = vst [vmem:[%s243 + $0x68] sm:$0xff] %v5193
      %5258 = vst [vmem:[%s243 + $0x70] sm:$0xff] %v5194
      %5259 = vst [vmem:[%s243 + $0x78] sm:$0xff] %v5195
      %5260 = vst [vmem:[%s243 + $0x80] sm:$0xff] %v5196
      %5261 = vst [vmem:[%s243 + $0x88] sm:$0xff] %v5197
      %5262 = vst [vmem:[%s243 + $0x90] sm:$0xff] %v5198
      %5263 = vst [vmem:[%s243 + $0x98] sm:$0xff] %v5199
      %5264 = vst [vmem:[%s243 + $0xa0] sm:$0xff] %v5200
      %5265 = vst [vmem:[%s243 + $0xa8] sm:$0xff] %v5201
      %5266 = vst [vmem:[%s243 + $0xb0] sm:$0xff] %v5202
      %5267 = vst [vmem:[%s243 + $0xb8] sm:$0xff] %v5203
      %5268 = vst [vmem:[%s243 + $0xc0] sm:$0xff] %v5204
      %5269 = vst [vmem:[%s243 + $0xc8] sm:$0xff] %v5205
      %5270 = vst [vmem:[%s243 + $0xd0] sm:$0xff] %v5206
      %5271 = vst [vmem:[%s243 + $0xd8] sm:$0xff] %v5207
      %5272 = vst [vmem:[%s243 + $0xe0] sm:$0xff] %v5208
      %5273 = vst [vmem:[%s243 + $0xe8] sm:$0xff] %v5209
      %5274 = vst [vmem:[%s243 + $0xf0] sm:$0xff] %v5210
      %5275 = vst [vmem:[%s243 + $0xf8] sm:$0xff] %v5211
      %5276 = vst [vmem:[%s243 + $0x100] sm:$0xff] %v5212
      %5277 = vst [vmem:[%s243 + $0x108] sm:$0xff] %v5213
      %5278 = vst [vmem:[%s243 + $0x110] sm:$0xff] %v5214
      %5279 = vst [vmem:[%s243 + $0x118] sm:$0xff] %v5215
      %5280 = vst [vmem:[%s243 + $0x120] sm:$0xff] %v5216
      %5281 = vst [vmem:[%s243 + $0x128] sm:$0xff] %v5217
      %5282 = vst [vmem:[%s243 + $0x130] sm:$0xff] %v5218
      %5283 = vst [vmem:[%s243 + $0x138] sm:$0xff] %v5219
      %5284 = vst [vmem:[%s243 + $0x140] sm:$0xff] %v5220
      %5285 = vst [vmem:[%s243 + $0x148] sm:$0xff] %v5221
      %5286 = vst [vmem:[%s243 + $0x150] sm:$0xff] %v5222
      %5287 = vst [vmem:[%s243 + $0x158] sm:$0xff] %v5223
      %5288 = vst [vmem:[%s243 + $0x160] sm:$0xff] %v5224
      %5289 = vst [vmem:[%s243 + $0x168] sm:$0xff] %v5225
      %5290 = vst [vmem:[%s243 + $0x170] sm:$0xff] %v5226
      %5291 = vst [vmem:[%s243 + $0x178] sm:$0xff] %v5227
      %5292 = vst [vmem:[%s243 + $0x180] sm:$0xff] %v5228
      %5293 = vst [vmem:[%s243 + $0x188] sm:$0xff] %v5229
      %5294 = vst [vmem:[%s243 + $0x190] sm:$0xff] %v5230
      %5295 = vst [vmem:[%s243 + $0x198] sm:$0xff] %v5231
      %5296 = vst [vmem:[%s243 + $0x1a0] sm:$0xff] %v5232
      %5297 = vst [vmem:[%s243 + $0x1a8] sm:$0xff] %v5233
      %5298 = vst [vmem:[%s243 + $0x1b0] sm:$0xff] %v5234
      %5299 = vst [vmem:[%s243 + $0x1b8] sm:$0xff] %v5235
      %5300 = vst [vmem:[%s243 + $0x1c0] sm:$0xff] %v5236
      %5301 = vst [vmem:[%s243 + $0x1c8] sm:$0xff] %v5237
      %5302 = vst [vmem:[%s243 + $0x1d0] sm:$0xff] %v5238
      %5303 = vst [vmem:[%s243 + $0x1d8] sm:$0xff] %v5239
      %5304 = vst [vmem:[%s243 + $0x1e0] sm:$0xff] %v5240
      %5305 = vst [vmem:[%s243 + $0x1e8] sm:$0xff] %v5241
      %5306 = vst [vmem:[%s243 + $0x1f0] sm:$0xff] %v5242
      %5307 = vst [vmem:[%s243 + $0x1f8] sm:$0xff] %v5243
      %s5308 = smul.u32 2, %s17
      %p5309 = scmp.lt.s32.totalorder %s5308, 7
      %s5310 = scalar_select %p5309, %s5308, 7
      %s5311 = scalar_lea.vmem %s4, %s5310
      %s5312 = smul.u32 2, %s17
      %p5313 = scmp.lt.s32.totalorder %s5312, 7
      %s5314 = scalar_select %p5313, %s5312, 7
      %s5315 = smul.addr %s5314, 32
      %s5316 = smul.addr %s5315, 8
      %s5317 = scalar_lea.vmem %s5, %s5316
      // Predicated region
      $region37: #{spatial_conv.1} parent=35 // pred_check
        %p5318 = pneg %p124
      $region38: #{spatial_conv.1} parent=35 // pred_check_branch
        %5320 = sbr.rel (%p5318) target = $region40
      $region39: #{spatial_conv.1} parent=35 // pred_region
        %s5321 = smul.u32 2, %s17
      $region40: #{spatial_conv.1} parent=35 // pred_fallthru
        _
      // Predicated region
      $region41: #{spatial_conv.1} parent=35 // pred_check
        %p5322 = pneg %p150
      $region42: #{spatial_conv.1} parent=35 // pred_check_branch
        %5324 = sbr.rel (%p5322) target = $region44
      $region43: #{spatial_conv.1} parent=35 // pred_region
        %s5325 = smul.u32 2, %s17
      $region44: #{spatial_conv.1} parent=35 // pred_fallthru
        _
    $region36: #{spatial_conv.1} parent=5 // pred_fallthru
      _
    %p5326 = scmp.le.s32.totalorder 2, %s12
    // Predicated region
    $region45: #{spatial_conv.1} parent=5 // pred_check
      %p5327 = pneg %p5326
    $region46: #{spatial_conv.1} parent=5 // pred_check_branch
      %5329 = sbr.rel (%p5327) target = $region48
    $region47: #{spatial_conv.1} parent=5 // pred_region
      %s5330 = ssub.s32 %s12, 2
      // Predicated region
      $region49: #{spatial_conv.1} parent=47 // pred_check
        %p5331 = pneg %p130
      $region50: #{spatial_conv.1} parent=47 // pred_check_branch
        %5333 = sbr.rel (%p5331) target = $region52
      $region51: #{spatial_conv.1} parent=47 // pred_region
        %s5334 = smul.u32 2, %s18
        %p5335 = scmp.lt.s32.totalorder %s5334, 7
        %s5336 = scalar_select %p5335, %s5334, 7
        %s5337 = scalar_lea.vmem %s4, %s5336
      $region52: #{spatial_conv.1} parent=47 // pred_fallthru
        _
      // Predicated region
      $region53: #{spatial_conv.1} parent=47 // pred_check
        %p5338 = pneg %p156
      $region54: #{spatial_conv.1} parent=47 // pred_check_branch
        %5340 = sbr.rel (%p5338) target = $region56
      $region55: #{spatial_conv.1} parent=47 // pred_region
        %s5341 = smul.u32 2, %s18
        %p5342 = scmp.lt.s32.totalorder %s5341, 7
        %s5343 = scalar_select %p5342, %s5341, 7
        %s5344 = smul.addr %s5343, 32
        %s5345 = smul.addr %s5344, 8
        %s5346 = scalar_lea.vmem %s5, %s5345
      $region56: #{spatial_conv.1} parent=47 // pred_fallthru
        _
    $region48: #{spatial_conv.1} parent=5 // pred_fallthru
      _
  $region6: #{spatial_conv.1} parent=0 // loop_footer
    %s16 = sadd.s32 1, %s12
  $region7: #{spatial_conv.1} parent=0 // loop_footer_branch
    %11 = sbr.rel target = $region3
  $region8: #{spatial_conv.1} parent=0 // loop_exit
    _

</llo_original>
